<compile_context>
chip_gen: v7x
topology: tpu7x:2x2x1
jax: 0.10.0
libtpu: 0.0.40
codegen_flags: <defaults>
</compile_context>

<pallas_src>
import jax
import jax.numpy as jnp
import numpy as np
from jax.experimental import pallas as pl
from jax.experimental.pallas import tpu as pltpu

# ----------------------------- config (constructor args) -------------------
B, L, V, H, D_IN, O = 8, 8, 16, 32, 16, 16
SENDER_ENTROPY_COEFF = 0.1
RECEIVER_ENTROPY_COEFF = 0.01
LENGTH_COST = 0.1
EFFECTIVE_MAX_LEN = 4          # set to None to reproduce the zeros-len-loss path
SENDER_ENTROPY_COMMON_RATIO = 1.0
# MeanBaseline predicts 0.0 on the first forward call (no updates yet).
BASELINE_LOSS = 0.0
BASELINE_LEN = 0.0
# TODO(synk): baselines are stateful across training steps; only the first-call
# (zero-prediction) behaviour is modelled here.

BF16 = jnp.bfloat16
F32 = jnp.float32

# ----------------------------- packed weight layout -------------------------
# One (208, 128) bf16 array, all row offsets 16-aligned (bf16 sublane tiling):
#   rows   0: 32, cols  0: 16   s_Wv    -+  matmul A: h_s @ [s_Wv | s_Uhh]
#   rows   0: 32, cols 16: 48   s_Uhh   -+
#   rows  32: 48, cols  0: 32   s_emb   -+  matmul B: onehot @ [s_emb | r_emb]
#   rows  32: 48, cols 32: 64   r_emb   -+
#   rows  48: 80, cols  0: 32   s_Whh   -+  matmul C: [e_s|e_r|h_r] @ blockdiag
#   rows  80:112, cols 32: 64   r_Whh    |
#   rows 112:144, cols 32: 64   r_Uhh   -+
#   rows 144:160, cols  0: 32   s_Win       (sender h0)
#   rows 160:192, cols  0: 16   r_Wout      (receiver head)
#   row  192    : cols 0:32 s_bin | 32:48 s_bv | 48:80 s_bh | 80:112 r_bh
#                 | 112:128 r_bout
PACK_ROWS = 208


def pack_params(p):
    f = lambda a: np.asarray(a, np.float32)
    w = np.zeros((PACK_ROWS, 128), np.float32)
    w[0:32, 0:16] = f(p["s_Wv"])
    w[0:32, 16:48] = f(p["s_Uhh"])
    w[32:48, 0:32] = f(p["s_emb"])
    w[32:48, 32:64] = f(p["r_emb"])
    w[48:80, 0:32] = f(p["s_Whh"])
    w[80:112, 32:64] = f(p["r_Whh"])
    w[112:144, 32:64] = f(p["r_Uhh"])
    w[144:160, 0:32] = f(p["s_Win"])
    w[160:192, 0:16] = f(p["r_Wout"])
    w[192, 0:32] = f(p["s_bin"])
    w[192, 32:48] = f(p["s_bv"])
    w[192, 48:80] = f(p["s_bh"])
    w[192, 80:112] = f(p["r_bh"])
    w[192, 112:128] = f(p["r_bout"])
    return jnp.asarray(w).astype(BF16)


# ----------------------------- Pallas kernel -------------------------------
def fused_reinforce_kernel(x_ref, lab_ref, w_ref, stats_ref, cat_ref):
    f32 = jnp.float32
    x = x_ref[...]                     # (B, D_IN)
    lab = lab_ref[...]                 # (B, O)
    bsz = x.shape[0]

    # Single packed weight array, resident in VMEM for the whole kernel;
    # static ref-view slices (one DMA for all 14 original arrays).
    w_a = w_ref[0:32, 0:48]            # [s_Wv | s_Uhh]     (H, V+H) bf16
    w_b = w_ref[32:48, 0:64]           # [s_emb | r_emb]    (V, 2H)  bf16
    w_c = w_ref[48:144, 0:64]          # block-diagonal     (3H, 2H) bf16
    w_in = w_ref[144:160, 0:32]        # s_Win              (D_IN, H)
    w_out = w_ref[160:192, 0:16]       # r_Wout             (H, O)
    s_bin = w_ref[192:193, 0:32].astype(f32)
    s_bv = w_ref[192:193, 32:48].astype(f32)
    b_c = w_ref[192:193, 48:112].astype(f32)     # [s_bh | r_bh]
    r_bout = w_ref[192:193, 112:128].astype(f32)

    def mm(a, b):
        # Native single-pass bf16 MXU matmul with f32 accumulation (no f32
        # 'highest' multi-pass emulation on the serial recurrence path).
        return jnp.dot(a.astype(BF16), b, preferred_element_type=f32)

    # Sender initial hidden; receiver starts at zero.
    h_s = jnp.tanh(mm(x, w_in) + s_bin)            # (B, H)
    h_r = jnp.zeros((bsz, H), f32)                 # receiver hidden
    h_last = jnp.zeros((bsz, H), f32)              # receiver hidden at lengths-1

    eosed = jnp.zeros((bsz, 1), f32)               # 1.0 once an EOS was emitted
    eff_ent = jnp.zeros((bsz, 1), f32)
    eff_lp = jnp.zeros((bsz, 1), f32)
    denom = jnp.zeros((bsz, 1), f32)
    lengths = jnp.zeros((bsz, 1), f32)             # sum of not_eosed == find_lengths
    ent_sum = jnp.zeros((bsz, 1), f32)             # unmasked sender entropy sum

    v_iota = jax.lax.broadcasted_iota(jnp.int32, (bsz, V), 1)

    ratio = 1.0
    # L is small and static -> fully unrolled, sender+receiver fused per step.
    for t in range(L):
        # --- fused matmul A: logits + Uhh contribution to the next h_s -------
        out_a = mm(h_s, w_a)                       # (B, V+H)
        logits = out_a[:, 0:V] + s_bv              # (B, V)
        uhh_c = out_a[:, V:V + H]                  # (B, H)

        # --- greedy (eval-mode) symbol + softmax stats -----------------------
        # chosen logit == max  =>  logprob = -log(sum exp(z))
        mx = jnp.max(logits, axis=1, keepdims=True)
        z = logits - mx
        ez = jnp.exp(z)
        sum_ez = jnp.sum(ez, axis=1, keepdims=True)
        log_sez = jnp.log(sum_ez)
        lp_t = -log_sez                                              # (B,1)
        ent_t = log_sez - jnp.sum(ez * z, axis=1, keepdims=True) / sum_ez
        is_max = logits == mx
        sym = jnp.min(jnp.where(is_max, v_iota, V), axis=1, keepdims=True)
        onehot = (v_iota == sym).astype(f32)                         # (B,V)

        # --- length-masked REINFORCE accumulators (the max_len loop) ---------
        not_eosed = 1.0 - eosed                    # == (t < lengths)
        eff_ent = eff_ent + ent_t * not_eosed * ratio
        eff_lp = eff_lp + lp_t * not_eosed
        denom = denom + ratio * not_eosed
        lengths = lengths + not_eosed
        ent_sum = ent_sum + ent_t

        # --- fused matmul B: both embeddings in one MXU push ----------------
        e_sr = mm(onehot, w_b)                     # (B, 2H) = [e_s | e_r]

        # --- fused matmul C: both recurrence pre-activations in one push ----
        cat_ref[:, 0:2 * H] = e_sr                 # [e_s | e_r]
        cat_ref[:, 2 * H:3 * H] = h_r              # | h_r
        pre = mm(cat_ref[...], w_c) + b_c          # (B, 2H)

        h_r = jnp.tanh(pre[:, H:2 * H])            # receiver step
        is_eos = (sym == 0).astype(f32)            # (B,1)
        # t == lengths-1  <=>  not eosed before AND (eos here OR t == L-1)
        last_mask = not_eosed if t == L - 1 else not_eosed * is_eos
        h_last = h_last + last_mask * (h_r - h_last)
        eosed = jnp.maximum(eosed, is_eos)

        # sender recurrence (skip the unused final update)
        if t < L - 1:
            h_s = jnp.tanh(pre[:, 0:H] + uhh_c)
        ratio *= SENDER_ENTROPY_COMMON_RATIO

    # (B,1) divide; approx EUP reciprocal was evaluated but rejected to keep
    # the 1e-3 tolerances on entropy stats safely within bounds.
    eff_ent = eff_ent / denom

    # Deterministic receiver head: logprob_r == entropy_r == 0.
    recv = mm(h_last, w_out) + r_bout              # (B, O)
    diff = recv - lab
    loss_per = jnp.sum(diff * diff, axis=1, keepdims=True) * (1.0 / O)   # (B,1)

    if EFFECTIVE_MAX_LEN is None:
        len_loss = jnp.zeros_like(lengths)
    else:
        len_loss = LENGTH_COST * jnp.maximum(
            lengths - jnp.float32(EFFECTIVE_MAX_LEN), 0.0)

    policy_row = (loss_per - BASELINE_LOSS) * eff_lp        # logprob_r == 0
    policy_len_row = (len_loss - BASELINE_LEN) * eff_lp
    entropy_row = SENDER_ENTROPY_COEFF * eff_ent            # receiver entropy == 0
    opt_row = loss_per + policy_row + policy_len_row - entropy_row

    # Epilogue: one (B,1)->(1,1) reduction + masked store per statistic
    # (replaces the previous 8x iota/select packing on padded vregs).
    inv_b = 1.0 / bsz
    cols = (opt_row,                       # 0 optimized loss
            loss_per,                      # 1 original loss
            policy_row,                    # 2 policy loss
            policy_len_row,                # 3 policy length loss
            entropy_row,                   # 4 entropy term
            ent_sum * (1.0 / L),           # 5 sender entropy (unmasked mean)
            jnp.zeros_like(loss_per),      # 6 receiver entropy
            lengths)                       # 7 mean length
    for i, c in enumerate(cols):
        stats_ref[0:1, i:i + 1] = jnp.sum(c, axis=0, keepdims=True) * inv_b


# ----------------------------- wrapper --------------------------------------
def sender_receiver_rnn_reinforce_forward(w_packed, sender_input, labels):
    # Grid-less single invocation at B=8 (per review: grid steps would only
    # add fixed overhead; on v7x a batch grid is only worth it for B >> 8).
    vmem = pl.BlockSpec(memory_space=pltpu.MemorySpace.VMEM)
    stats2d = pl.pallas_call(
        fused_reinforce_kernel,
        out_shape=jax.ShapeDtypeStruct((1, 8), jnp.float32),
        in_specs=[vmem, vmem, vmem],
        out_specs=vmem,
        scratch_shapes=[pltpu.VMEM((B, 3 * H), jnp.float32)],
    )(sender_input, labels, w_packed)
    stats = stats2d[0]
    rest = {
        "loss": stats[0],
        "original_loss": stats[1],
        "policy_loss": stats[2],
        "policy_len_loss": stats[3],
        "entropy_term": stats[4],
        "sender_entropy": stats[5],
        "receiver_entropy": stats[6],
        "mean_length": stats[7],
    }
    return stats[0], rest


# ----------------------------- params (simulated sub-modules) ---------------
def init_params(key):
    ks = jax.random.split(key, 10)
    s = 0.3
    return dict(
        s_Win=s * jax.random.normal(ks[0], (D_IN, H), jnp.float32),
        s_bin=jnp.zeros((H,), jnp.float32),
        s_Wv=s * jax.random.normal(ks[1], (H, V), jnp.float32),
        s_bv=jnp.zeros((V,), jnp.float32),
        s_emb=s * jax.random.normal(ks[2], (V, H), jnp.float32),
        s_Whh=s * jax.random.normal(ks[3], (H, H), jnp.float32),
        s_Uhh=s * jax.random.normal(ks[4], (H, H), jnp.float32),
        s_bh=jnp.zeros((H,), jnp.float32),
        r_emb=s * jax.random.normal(ks[5], (V, H), jnp.float32),
        r_Whh=s * jax.random.normal(ks[6], (H, H), jnp.float32),
        r_Uhh=s * jax.random.normal(ks[7], (H, H), jnp.float32),
        r_bh=jnp.zeros((H,), jnp.float32),
        r_Wout=s * jax.random.normal(ks[8], (H, O), jnp.float32),
        r_bout=jnp.zeros((O,), jnp.float32),
    )


# ----------------------------- pure-JAX reference ----------------------------
# The reference uses the SAME bf16-rounded matmul operands as the kernel so the
# greedy argmax decisions (discrete message) agree symbol-for-symbol.
def _bf(x):
    return x.astype(BF16).astype(F32)


def _mm(a, b):
    return jnp.dot(a.astype(BF16), b.astype(BF16), preferred_element_type=F32)


def run_sender(p, x):
    """Greedy (eval-mode) RNN sender: returns message, logprob_s, entropy_s (B, L)."""
    h0 = jnp.tanh(_mm(x, p["s_Win"]) + _bf(p["s_bin"]))
    emb_bf = _bf(p["s_emb"])

    def step(h, _):
        logits = _mm(h, p["s_Wv"]) + _bf(p["s_bv"])
        logp = jax.nn.log_softmax(logits, axis=-1)
        sym = jnp.argmax(logits, axis=-1).astype(jnp.int32)
        lp = jnp.take_along_axis(logp, sym[:, None], axis=-1)[:, 0]
        ent = -jnp.sum(jnp.exp(logp) * logp, axis=-1)
        e = emb_bf[sym]
        h_new = jnp.tanh(_mm(e, p["s_Whh"]) + _mm(h, p["s_Uhh"]) + _bf(p["s_bh"]))
        return h_new, (sym, lp, ent)

    _, (msg, lps, ents) = jax.lax.scan(step, h0, None, length=L)
    return msg.T, lps.T, ents.T  # (B, L) each


def find_lengths_jax(msg):
    iota = jnp.arange(L, dtype=jnp.int32)[None, :]
    first = jnp.min(jnp.where(msg == 0, iota, L), axis=1)
    return jnp.where(first < L, first + 1, L)


def run_receiver(p, msg, lengths):
    """Deterministic RNN receiver: logprob_r = entropy_r = 0."""
    emb = _bf(p["r_emb"])[msg]                  # (B, L, H)
    h0 = jnp.zeros((msg.shape[0], H), jnp.float32)

    def step(h, e_t):
        h_new = jnp.tanh(_mm(e_t, p["r_Whh"]) + _mm(h, p["r_Uhh"]) + _bf(p["r_bh"]))
        return h_new, h_new

    _, hs = jax.lax.scan(step, h0, jnp.swapaxes(emb, 0, 1))
    hs = jnp.swapaxes(hs, 0, 1)                 # (B, L, H)
    h_last = jnp.take_along_axis(hs, (lengths - 1)[:, None, None], axis=1)[:, 0]
    out = _mm(h_last, p["r_Wout"]) + _bf(p["r_bout"])
    zeros = jnp.zeros((msg.shape[0],), jnp.float32)
    return out, zeros, zeros


def reference_forward(params, sender_input, labels):
    msg, lp_s, ent_s = run_sender(params, sender_input)
    lengths = find_lengths_jax(msg)
    recv_out, lp_r, ent_r = run_receiver(params, msg, lengths)

    lengths_f = lengths.astype(jnp.float32)
    eff_ent = jnp.zeros_like(ent_r)
    eff_lp = jnp.zeros_like(lp_r)
    denom = jnp.zeros_like(lengths_f)
    ratio = 1.0
    for i in range(L):
        not_eosed = (i < lengths).astype(jnp.float32)
        eff_ent = eff_ent + ent_s[:, i] * not_eosed * ratio
        eff_lp = eff_lp + lp_s[:, i] * not_eosed
        denom = denom + ratio * not_eosed
        ratio *= SENDER_ENTROPY_COMMON_RATIO
    eff_ent = eff_ent / denom
    logprob = eff_lp + lp_r
    entropy = (eff_ent.mean() * SENDER_ENTROPY_COEFF
               + ent_r.mean() * RECEIVER_ENTROPY_COEFF)
    loss = jnp.mean((recv_out - labels) ** 2, axis=1)
    if EFFECTIVE_MAX_LEN is None:
        len_loss = jnp.zeros_like(lengths_f)
    else:
        len_loss = LENGTH_COST * jnp.clip(lengths_f - EFFECTIVE_MAX_LEN, 0.0)
    policy_loss = ((loss - BASELINE_LOSS) * logprob).mean()
    policy_len_loss = ((len_loss - BASELINE_LEN) * eff_lp).mean()
    opt = loss.mean() + policy_loss + policy_len_loss - entropy
    stats = dict(original_loss=loss.mean(),
                 sender_entropy=ent_s.mean(),
                 receiver_entropy=ent_r.mean(),
                 mean_length=lengths_f.mean())
    return opt, stats


# ----------------------------- main -----------------------------------------
if __name__ == "__main__":
    key = jax.random.PRNGKey(0)
    k_param, k_x, k_y = jax.random.split(key, 3)
    params = init_params(k_param)
    sender_input = jax.random.normal(k_x, (B, D_IN), jnp.float32)
    labels = jax.random.normal(k_y, (B, O), jnp.float32)

    # One-time weight packing (init-time cost, not per-forward).
    w_packed = pack_params(params)

    opt_loss, rest = sender_receiver_rnn_reinforce_forward(w_packed, sender_input, labels)
    opt_loss = jax.block_until_ready(opt_loss)

    ref_loss, ref_stats = reference_forward(params, sender_input, labels)
    ref_loss = jax.block_until_ready(ref_loss)

    assert np.allclose(np.asarray(opt_loss), np.asarray(ref_loss),
                       atol=1e-3, rtol=1e-3), f"kernel={opt_loss} ref={ref_loss}"
    for name in ("original_loss", "sender_entropy", "receiver_entropy", "mean_length"):
        assert np.allclose(np.asarray(rest[name]), np.asarray(ref_stats[name]),
                           atol=1e-3, rtol=1e-3), (
            f"{name}: kernel={rest[name]} ref={ref_stats[name]}")

    print("KERNEL_OK")
</pallas_src>

<mosaic_0001>
module attributes {stable_mosaic.version = 11 : i64} {
  func.func @fused_reinforce_kernel(%arg0: memref<8x16xf32, #tpu.memory_space<vmem>>, %arg1: memref<8x16xf32, #tpu.memory_space<vmem>>, %arg2: memref<208x128xbf16, #tpu.memory_space<vmem>>, %arg3: memref<1x8xf32, #tpu.memory_space<vmem>>, %arg4: memref<8x96xf32, #tpu.memory_space<vmem>>) attributes {dimension_semantics = [], scalar_prefetch = 0 : i64, scratch_operands = 1 : i64, tpu.core_type = #tpu.core_type<tc>} {
    %c0 = arith.constant 0 : index
    %c0_0 = arith.constant 0 : index
    %0 = vector.load %arg0[%c0, %c0_0] : memref<8x16xf32, #tpu.memory_space<vmem>>, vector<8x16xf32>
    %c0_1 = arith.constant 0 : index
    %c0_2 = arith.constant 0 : index
    %1 = vector.load %arg1[%c0_1, %c0_2] : memref<8x16xf32, #tpu.memory_space<vmem>>, vector<8x16xf32>
    %c0_3 = arith.constant 0 : index
    %c0_4 = arith.constant 0 : index
    %2 = vector.load %arg2[%c0_3, %c0_4] : memref<208x128xbf16, #tpu.memory_space<vmem>>, vector<32x48xbf16>
    %c32 = arith.constant 32 : index
    %c0_5 = arith.constant 0 : index
    %3 = vector.load %arg2[%c32, %c0_5] : memref<208x128xbf16, #tpu.memory_space<vmem>>, vector<16x64xbf16>
    %c48 = arith.constant 48 : index
    %c0_6 = arith.constant 0 : index
    %4 = vector.load %arg2[%c48, %c0_6] : memref<208x128xbf16, #tpu.memory_space<vmem>>, vector<96x64xbf16>
    %c144 = arith.constant 144 : index
    %c0_7 = arith.constant 0 : index
    %5 = vector.load %arg2[%c144, %c0_7] : memref<208x128xbf16, #tpu.memory_space<vmem>>, vector<16x32xbf16>
    %c160 = arith.constant 160 : index
    %c0_8 = arith.constant 0 : index
    %6 = vector.load %arg2[%c160, %c0_8] : memref<208x128xbf16, #tpu.memory_space<vmem>>, vector<32x16xbf16>
    %c192 = arith.constant 192 : index
    %c0_9 = arith.constant 0 : index
    %7 = vector.load %arg2[%c192, %c0_9] : memref<208x128xbf16, #tpu.memory_space<vmem>>, vector<1x32xbf16>
    %8 = arith.extf %7 : vector<1x32xbf16> to vector<1x32xf32>
    %c192_10 = arith.constant 192 : index
    %c32_11 = arith.constant 32 : index
    %9 = vector.load %arg2[%c192_10, %c32_11] : memref<208x128xbf16, #tpu.memory_space<vmem>>, vector<1x16xbf16>
    %10 = arith.extf %9 : vector<1x16xbf16> to vector<1x16xf32>
    %c192_12 = arith.constant 192 : index
    %c48_13 = arith.constant 48 : index
    %11 = vector.load %arg2[%c192_12, %c48_13] : memref<208x128xbf16, #tpu.memory_space<vmem>>, vector<1x64xbf16>
    %12 = arith.extf %11 : vector<1x64xbf16> to vector<1x64xf32>
    %c192_14 = arith.constant 192 : index
    %c112 = arith.constant 112 : index
    %13 = vector.load %arg2[%c192_14, %c112] : memref<208x128xbf16, #tpu.memory_space<vmem>>, vector<1x16xbf16>
    %14 = arith.extf %13 : vector<1x16xbf16> to vector<1x16xf32>
    %15 = arith.truncf %0 : vector<8x16xf32> to vector<8x16xbf16>
    %cst = arith.constant dense<0.000000e+00> : vector<8x32xf32>
    %16 = tpu.matmul %15, %5, %cst {dimension_numbers = #tpu.dot_dimension_numbers<[1], [0], [0], [1], [0, 0, 1, 1], [], []>} : vector<8x16xbf16>, vector<16x32xbf16>, vector<8x32xf32> -> vector<8x32xf32>
    %17 = vector.broadcast %8 : vector<1x32xf32> to vector<8x32xf32>
    %18 = arith.addf %16, %17 : vector<8x32xf32>
    %19 = math.tanh %18 : vector<8x32xf32>
    %cst_15 = arith.constant 0.000000e+00 : f32
    %20 = vector.broadcast %cst_15 : f32 to vector<8x32xf32>
    %cst_16 = arith.constant 0.000000e+00 : f32
    %21 = vector.broadcast %cst_16 : f32 to vector<8x32xf32>
    %cst_17 = arith.constant 0.000000e+00 : f32
    %22 = vector.broadcast %cst_17 : f32 to vector<8x1xf32>
    %cst_18 = arith.constant 0.000000e+00 : f32
    %23 = vector.broadcast %cst_18 : f32 to vector<8x1xf32>
    %cst_19 = arith.constant 0.000000e+00 : f32
    %24 = vector.broadcast %cst_19 : f32 to vector<8x1xf32>
    %cst_20 = arith.constant 0.000000e+00 : f32
    %25 = vector.broadcast %cst_20 : f32 to vector<8x1xf32>
    %cst_21 = arith.constant 0.000000e+00 : f32
    %26 = vector.broadcast %cst_21 : f32 to vector<8x1xf32>
    %cst_22 = arith.constant 0.000000e+00 : f32
    %27 = vector.broadcast %cst_22 : f32 to vector<8x1xf32>
    %28 = tpu.iota {dimensions = array<i32: 1>} : vector<8x16xi32>
    %29 = arith.truncf %19 : vector<8x32xf32> to vector<8x32xbf16>
    %cst_23 = arith.constant dense<0.000000e+00> : vector<8x48xf32>
    %30 = tpu.matmul %29, %2, %cst_23 {dimension_numbers = #tpu.dot_dimension_numbers<[1], [0], [0], [1], [0, 0, 1, 1], [], []>} : vector<8x32xbf16>, vector<32x48xbf16>, vector<8x48xf32> -> vector<8x48xf32>
    %31 = vector.extract_strided_slice %30 {offsets = [0, 0], sizes = [8, 16], strides = [1, 1]} : vector<8x48xf32> to vector<8x16xf32>
    %32 = vector.broadcast %10 : vector<1x16xf32> to vector<8x16xf32>
    %33 = arith.addf %31, %32 : vector<8x16xf32>
    %34 = vector.extract_strided_slice %30 {offsets = [0, 16], sizes = [8, 32], strides = [1, 1]} : vector<8x48xf32> to vector<8x32xf32>
    %cst_24 = arith.constant dense<0xFF800000> : vector<8xf32>
    %35 = vector.multi_reduction <maximumf>, %33, %cst_24 [1] : vector<8x16xf32> to vector<8xf32>
    %36 = vector.shape_cast %35 : vector<8xf32> to vector<8x1xf32>
    %37 = vector.broadcast %36 : vector<8x1xf32> to vector<8x16xf32>
    %38 = arith.subf %33, %37 : vector<8x16xf32>
    %39 = math.exp %38 : vector<8x16xf32>
    %cst_25 = arith.constant dense<0.000000e+00> : vector<8xf32>
    %40 = vector.multi_reduction <add>, %39, %cst_25 [1] : vector<8x16xf32> to vector<8xf32>
    %41 = vector.shape_cast %40 : vector<8xf32> to vector<8x1xf32>
    %42 = math.log %41 : vector<8x1xf32>
    %cst_26 = arith.constant 0.000000e+00 : f32
    %43 = vector.broadcast %cst_26 : f32 to vector<8x1xf32>
    %44 = arith.subf %43, %42 : vector<8x1xf32>
    %45 = arith.mulf %39, %38 : vector<8x16xf32>
    %cst_27 = arith.constant dense<0.000000e+00> : vector<8xf32>
    %46 = vector.multi_reduction <add>, %45, %cst_27 [1] : vector<8x16xf32> to vector<8xf32>
    %47 = vector.shape_cast %46 : vector<8xf32> to vector<8x1xf32>
    %48 = arith.divf %47, %41 : vector<8x1xf32>
    %49 = arith.subf %42, %48 : vector<8x1xf32>
    %50 = vector.broadcast %36 : vector<8x1xf32> to vector<8x16xf32>
    %51 = arith.cmpf oeq, %33, %50 : vector<8x16xf32>
    %c16_i32 = arith.constant 16 : i32
    %52 = vector.broadcast %c16_i32 : i32 to vector<8x16xi32>
    %53 = arith.select %51, %28, %52 : vector<8x16xi1>, vector<8x16xi32>
    %cst_28 = arith.constant dense<2147483647> : vector<8xi32>
    %54 = vector.multi_reduction <minsi>, %53, %cst_28 [1] : vector<8x16xi32> to vector<8xi32>
    %55 = vector.shape_cast %54 : vector<8xi32> to vector<8x1xi32>
    %56 = vector.broadcast %55 : vector<8x1xi32> to vector<8x16xi32>
    %57 = arith.cmpi eq, %28, %56 : vector<8x16xi32>
    %58 = arith.extui %57 : vector<8x16xi1> to vector<8x16xi32>
    %59 = arith.sitofp %58 : vector<8x16xi32> to vector<8x16xf32>
    %cst_29 = arith.constant 1.000000e+00 : f32
    %60 = vector.broadcast %cst_29 : f32 to vector<8x1xf32>
    %61 = arith.subf %60, %22 : vector<8x1xf32>
    %62 = arith.mulf %49, %61 : vector<8x1xf32>
    %cst_30 = arith.constant 1.000000e+00 : f32
    %63 = vector.broadcast %cst_30 : f32 to vector<8x1xf32>
    %64 = arith.mulf %62, %63 : vector<8x1xf32>
    %65 = arith.addf %23, %64 : vector<8x1xf32>
    %66 = arith.mulf %44, %61 : vector<8x1xf32>
    %67 = arith.addf %24, %66 : vector<8x1xf32>
    %cst_31 = arith.constant 1.000000e+00 : f32
    %68 = vector.broadcast %cst_31 : f32 to vector<8x1xf32>
    %69 = arith.mulf %68, %61 : vector<8x1xf32>
    %70 = arith.addf %25, %69 : vector<8x1xf32>
    %71 = arith.addf %26, %61 : vector<8x1xf32>
    %72 = arith.addf %27, %49 : vector<8x1xf32>
    %73 = arith.truncf %59 : vector<8x16xf32> to vector<8x16xbf16>
    %cst_32 = arith.constant dense<0.000000e+00> : vector<8x64xf32>
    %74 = tpu.matmul %73, %3, %cst_32 {dimension_numbers = #tpu.dot_dimension_numbers<[1], [0], [0], [1], [0, 0, 1, 1], [], []>} : vector<8x16xbf16>, vector<16x64xbf16>, vector<8x64xf32> -> vector<8x64xf32>
    %c0_33 = arith.constant 0 : index
    %c0_34 = arith.constant 0 : index
    %75 = vector.load %arg4[%c0_33, %c0_34] : memref<8x96xf32, #tpu.memory_space<vmem>>, vector<8x64xf32>
    tpu.vector_store %arg4[%c0_33, %c0_34], %74 {strides = array<i32>} : memref<8x96xf32, #tpu.memory_space<vmem>>, vector<8x64xf32>,
    %c0_35 = arith.constant 0 : index
    %c64 = arith.constant 64 : index
    %76 = vector.load %arg4[%c0_35, %c64] : memref<8x96xf32, #tpu.memory_space<vmem>>, vector<8x32xf32>
    tpu.vector_store %arg4[%c0_35, %c64], %20 {strides = array<i32>} : memref<8x96xf32, #tpu.memory_space<vmem>>, vector<8x32xf32>,
    %c0_36 = arith.constant 0 : index
    %c0_37 = arith.constant 0 : index
    %77 = vector.load %arg4[%c0_36, %c0_37] : memref<8x96xf32, #tpu.memory_space<vmem>>, vector<8x96xf32>
    %78 = arith.truncf %77 : vector<8x96xf32> to vector<8x96xbf16>
    %cst_38 = arith.constant dense<0.000000e+00> : vector<8x64xf32>
    %79 = tpu.matmul %78, %4, %cst_38 {dimension_numbers = #tpu.dot_dimension_numbers<[1], [0], [0], [1], [0, 0, 1, 1], [], []>} : vector<8x96xbf16>, vector<96x64xbf16>, vector<8x64xf32> -> vector<8x64xf32>
    %80 = vector.broadcast %12 : vector<1x64xf32> to vector<8x64xf32>
    %81 = arith.addf %79, %80 : vector<8x64xf32>
    %82 = vector.extract_strided_slice %81 {offsets = [0, 32], sizes = [8, 32], strides = [1, 1]} : vector<8x64xf32> to vector<8x32xf32>
    %83 = math.tanh %82 : vector<8x32xf32>
    %c0_i32 = arith.constant 0 : i32
    %84 = vector.broadcast %c0_i32 : i32 to vector<8x1xi32>
    %85 = arith.cmpi eq, %55, %84 : vector<8x1xi32>
    %86 = arith.extui %85 : vector<8x1xi1> to vector<8x1xi32>
    %87 = arith.sitofp %86 : vector<8x1xi32> to vector<8x1xf32>
    %88 = arith.mulf %61, %87 : vector<8x1xf32>
    %89 = arith.subf %83, %21 : vector<8x32xf32>
    %90 = vector.broadcast %88 : vector<8x1xf32> to vector<8x32xf32>
    %91 = arith.mulf %90, %89 : vector<8x32xf32>
    %92 = arith.addf %21, %91 : vector<8x32xf32>
    %93 = arith.maximumf %22, %87 : vector<8x1xf32>
    %94 = vector.extract_strided_slice %81 {offsets = [0, 0], sizes = [8, 32], strides = [1, 1]} : vector<8x64xf32> to vector<8x32xf32>
    %95 = arith.addf %94, %34 : vector<8x32xf32>
    %96 = math.tanh %95 : vector<8x32xf32>
    %97 = arith.truncf %96 : vector<8x32xf32> to vector<8x32xbf16>
    %cst_39 = arith.constant dense<0.000000e+00> : vector<8x48xf32>
    %98 = tpu.matmul %97, %2, %cst_39 {dimension_numbers = #tpu.dot_dimension_numbers<[1], [0], [0], [1], [0, 0, 1, 1], [], []>} : vector<8x32xbf16>, vector<32x48xbf16>, vector<8x48xf32> -> vector<8x48xf32>
    %99 = vector.extract_strided_slice %98 {offsets = [0, 0], sizes = [8, 16], strides = [1, 1]} : vector<8x48xf32> to vector<8x16xf32>
    %100 = vector.broadcast %10 : vector<1x16xf32> to vector<8x16xf32>
    %101 = arith.addf %99, %100 : vector<8x16xf32>
    %102 = vector.extract_strided_slice %98 {offsets = [0, 16], sizes = [8, 32], strides = [1, 1]} : vector<8x48xf32> to vector<8x32xf32>
    %cst_40 = arith.constant dense<0xFF800000> : vector<8xf32>
    %103 = vector.multi_reduction <maximumf>, %101, %cst_40 [1] : vector<8x16xf32> to vector<8xf32>
    %104 = vector.shape_cast %103 : vector<8xf32> to vector<8x1xf32>
    %105 = vector.broadcast %104 : vector<8x1xf32> to vector<8x16xf32>
    %106 = arith.subf %101, %105 : vector<8x16xf32>
    %107 = math.exp %106 : vector<8x16xf32>
    %cst_41 = arith.constant dense<0.000000e+00> : vector<8xf32>
    %108 = vector.multi_reduction <add>, %107, %cst_41 [1] : vector<8x16xf32> to vector<8xf32>
    %109 = vector.shape_cast %108 : vector<8xf32> to vector<8x1xf32>
    %110 = math.log %109 : vector<8x1xf32>
    %cst_42 = arith.constant 0.000000e+00 : f32
    %111 = vector.broadcast %cst_42 : f32 to vector<8x1xf32>
    %112 = arith.subf %111, %110 : vector<8x1xf32>
    %113 = arith.mulf %107, %106 : vector<8x16xf32>
    %cst_43 = arith.constant dense<0.000000e+00> : vector<8xf32>
    %114 = vector.multi_reduction <add>, %113, %cst_43 [1] : vector<8x16xf32> to vector<8xf32>
    %115 = vector.shape_cast %114 : vector<8xf32> to vector<8x1xf32>
    %116 = arith.divf %115, %109 : vector<8x1xf32>
    %117 = arith.subf %110, %116 : vector<8x1xf32>
    %118 = vector.broadcast %104 : vector<8x1xf32> to vector<8x16xf32>
    %119 = arith.cmpf oeq, %101, %118 : vector<8x16xf32>
    %c16_i32_44 = arith.constant 16 : i32
    %120 = vector.broadcast %c16_i32_44 : i32 to vector<8x16xi32>
    %121 = arith.select %119, %28, %120 : vector<8x16xi1>, vector<8x16xi32>
    %cst_45 = arith.constant dense<2147483647> : vector<8xi32>
    %122 = vector.multi_reduction <minsi>, %121, %cst_45 [1] : vector<8x16xi32> to vector<8xi32>
    %123 = vector.shape_cast %122 : vector<8xi32> to vector<8x1xi32>
    %124 = vector.broadcast %123 : vector<8x1xi32> to vector<8x16xi32>
    %125 = arith.cmpi eq, %28, %124 : vector<8x16xi32>
    %126 = arith.extui %125 : vector<8x16xi1> to vector<8x16xi32>
    %127 = arith.sitofp %126 : vector<8x16xi32> to vector<8x16xf32>
    %cst_46 = arith.constant 1.000000e+00 : f32
    %128 = vector.broadcast %cst_46 : f32 to vector<8x1xf32>
    %129 = arith.subf %128, %93 : vector<8x1xf32>
    %130 = arith.mulf %117, %129 : vector<8x1xf32>
    %cst_47 = arith.constant 1.000000e+00 : f32
    %131 = vector.broadcast %cst_47 : f32 to vector<8x1xf32>
    %132 = arith.mulf %130, %131 : vector<8x1xf32>
    %133 = arith.addf %65, %132 : vector<8x1xf32>
    %134 = arith.mulf %112, %129 : vector<8x1xf32>
    %135 = arith.addf %67, %134 : vector<8x1xf32>
    %cst_48 = arith.constant 1.000000e+00 : f32
    %136 = vector.broadcast %cst_48 : f32 to vector<8x1xf32>
    %137 = arith.mulf %136, %129 : vector<8x1xf32>
    %138 = arith.addf %70, %137 : vector<8x1xf32>
    %139 = arith.addf %71, %129 : vector<8x1xf32>
    %140 = arith.addf %72, %117 : vector<8x1xf32>
    %141 = arith.truncf %127 : vector<8x16xf32> to vector<8x16xbf16>
    %cst_49 = arith.constant dense<0.000000e+00> : vector<8x64xf32>
    %142 = tpu.matmul %141, %3, %cst_49 {dimension_numbers = #tpu.dot_dimension_numbers<[1], [0], [0], [1], [0, 0, 1, 1], [], []>} : vector<8x16xbf16>, vector<16x64xbf16>, vector<8x64xf32> -> vector<8x64xf32>
    %c0_50 = arith.constant 0 : index
    %c0_51 = arith.constant 0 : index
    %143 = vector.load %arg4[%c0_50, %c0_51] : memref<8x96xf32, #tpu.memory_space<vmem>>, vector<8x64xf32>
    tpu.vector_store %arg4[%c0_50, %c0_51], %142 {strides = array<i32>} : memref<8x96xf32, #tpu.memory_space<vmem>>, vector<8x64xf32>,
    %c0_52 = arith.constant 0 : index
    %c64_53 = arith.constant 64 : index
    %144 = vector.load %arg4[%c0_52, %c64_53] : memref<8x96xf32, #tpu.memory_space<vmem>>, vector<8x32xf32>
    tpu.vector_store %arg4[%c0_52, %c64_53], %83 {strides = array<i32>} : memref<8x96xf32, #tpu.memory_space<vmem>>, vector<8x32xf32>,
    %c0_54 = arith.constant 0 : index
    %c0_55 = arith.constant 0 : index
    %145 = vector.load %arg4[%c0_54, %c0_55] : memref<8x96xf32, #tpu.memory_space<vmem>>, vector<8x96xf32>
    %146 = arith.truncf %145 : vector<8x96xf32> to vector<8x96xbf16>
    %cst_56 = arith.constant dense<0.000000e+00> : vector<8x64xf32>
    %147 = tpu.matmul %146, %4, %cst_56 {dimension_numbers = #tpu.dot_dimension_numbers<[1], [0], [0], [1], [0, 0, 1, 1], [], []>} : vector<8x96xbf16>, vector<96x64xbf16>, vector<8x64xf32> -> vector<8x64xf32>
    %148 = vector.broadcast %12 : vector<1x64xf32> to vector<8x64xf32>
    %149 = arith.addf %147, %148 : vector<8x64xf32>
    %150 = vector.extract_strided_slice %149 {offsets = [0, 32], sizes = [8, 32], strides = [1, 1]} : vector<8x64xf32> to vector<8x32xf32>
    %151 = math.tanh %150 : vector<8x32xf32>
    %c0_i32_57 = arith.constant 0 : i32
    %152 = vector.broadcast %c0_i32_57 : i32 to vector<8x1xi32>
    %153 = arith.cmpi eq, %123, %152 : vector<8x1xi32>
    %154 = arith.extui %153 : vector<8x1xi1> to vector<8x1xi32>
    %155 = arith.sitofp %154 : vector<8x1xi32> to vector<8x1xf32>
    %156 = arith.mulf %129, %155 : vector<8x1xf32>
    %157 = arith.subf %151, %92 : vector<8x32xf32>
    %158 = vector.broadcast %156 : vector<8x1xf32> to vector<8x32xf32>
    %159 = arith.mulf %158, %157 : vector<8x32xf32>
    %160 = arith.addf %92, %159 : vector<8x32xf32>
    %161 = arith.maximumf %93, %155 : vector<8x1xf32>
    %162 = vector.extract_strided_slice %149 {offsets = [0, 0], sizes = [8, 32], strides = [1, 1]} : vector<8x64xf32> to vector<8x32xf32>
    %163 = arith.addf %162, %102 : vector<8x32xf32>
    %164 = math.tanh %163 : vector<8x32xf32>
    %165 = arith.truncf %164 : vector<8x32xf32> to vector<8x32xbf16>
    %cst_58 = arith.constant dense<0.000000e+00> : vector<8x48xf32>
    %166 = tpu.matmul %165, %2, %cst_58 {dimension_numbers = #tpu.dot_dimension_numbers<[1], [0], [0], [1], [0, 0, 1, 1], [], []>} : vector<8x32xbf16>, vector<32x48xbf16>, vector<8x48xf32> -> vector<8x48xf32>
    %167 = vector.extract_strided_slice %166 {offsets = [0, 0], sizes = [8, 16], strides = [1, 1]} : vector<8x48xf32> to vector<8x16xf32>
    %168 = vector.broadcast %10 : vector<1x16xf32> to vector<8x16xf32>
    %169 = arith.addf %167, %168 : vector<8x16xf32>
    %170 = vector.extract_strided_slice %166 {offsets = [0, 16], sizes = [8, 32], strides = [1, 1]} : vector<8x48xf32> to vector<8x32xf32>
    %cst_59 = arith.constant dense<0xFF800000> : vector<8xf32>
    %171 = vector.multi_reduction <maximumf>, %169, %cst_59 [1] : vector<8x16xf32> to vector<8xf32>
    %172 = vector.shape_cast %171 : vector<8xf32> to vector<8x1xf32>
    %173 = vector.broadcast %172 : vector<8x1xf32> to vector<8x16xf32>
    %174 = arith.subf %169, %173 : vector<8x16xf32>
    %175 = math.exp %174 : vector<8x16xf32>
    %cst_60 = arith.constant dense<0.000000e+00> : vector<8xf32>
    %176 = vector.multi_reduction <add>, %175, %cst_60 [1] : vector<8x16xf32> to vector<8xf32>
    %177 = vector.shape_cast %176 : vector<8xf32> to vector<8x1xf32>
    %178 = math.log %177 : vector<8x1xf32>
    %cst_61 = arith.constant 0.000000e+00 : f32
    %179 = vector.broadcast %cst_61 : f32 to vector<8x1xf32>
    %180 = arith.subf %179, %178 : vector<8x1xf32>
    %181 = arith.mulf %175, %174 : vector<8x16xf32>
    %cst_62 = arith.constant dense<0.000000e+00> : vector<8xf32>
    %182 = vector.multi_reduction <add>, %181, %cst_62 [1] : vector<8x16xf32> to vector<8xf32>
    %183 = vector.shape_cast %182 : vector<8xf32> to vector<8x1xf32>
    %184 = arith.divf %183, %177 : vector<8x1xf32>
    %185 = arith.subf %178, %184 : vector<8x1xf32>
    %186 = vector.broadcast %172 : vector<8x1xf32> to vector<8x16xf32>
    %187 = arith.cmpf oeq, %169, %186 : vector<8x16xf32>
    %c16_i32_63 = arith.constant 16 : i32
    %188 = vector.broadcast %c16_i32_63 : i32 to vector<8x16xi32>
    %189 = arith.select %187, %28, %188 : vector<8x16xi1>, vector<8x16xi32>
    %cst_64 = arith.constant dense<2147483647> : vector<8xi32>
    %190 = vector.multi_reduction <minsi>, %189, %cst_64 [1] : vector<8x16xi32> to vector<8xi32>
    %191 = vector.shape_cast %190 : vector<8xi32> to vector<8x1xi32>
    %192 = vector.broadcast %191 : vector<8x1xi32> to vector<8x16xi32>
    %193 = arith.cmpi eq, %28, %192 : vector<8x16xi32>
    %194 = arith.extui %193 : vector<8x16xi1> to vector<8x16xi32>
    %195 = arith.sitofp %194 : vector<8x16xi32> to vector<8x16xf32>
    %cst_65 = arith.constant 1.000000e+00 : f32
    %196 = vector.broadcast %cst_65 : f32 to vector<8x1xf32>
    %197 = arith.subf %196, %161 : vector<8x1xf32>
    %198 = arith.mulf %185, %197 : vector<8x1xf32>
    %cst_66 = arith.constant 1.000000e+00 : f32
    %199 = vector.broadcast %cst_66 : f32 to vector<8x1xf32>
    %200 = arith.mulf %198, %199 : vector<8x1xf32>
    %201 = arith.addf %133, %200 : vector<8x1xf32>
    %202 = arith.mulf %180, %197 : vector<8x1xf32>
    %203 = arith.addf %135, %202 : vector<8x1xf32>
    %cst_67 = arith.constant 1.000000e+00 : f32
    %204 = vector.broadcast %cst_67 : f32 to vector<8x1xf32>
    %205 = arith.mulf %204, %197 : vector<8x1xf32>
    %206 = arith.addf %138, %205 : vector<8x1xf32>
    %207 = arith.addf %139, %197 : vector<8x1xf32>
    %208 = arith.addf %140, %185 : vector<8x1xf32>
    %209 = arith.truncf %195 : vector<8x16xf32> to vector<8x16xbf16>
    %cst_68 = arith.constant dense<0.000000e+00> : vector<8x64xf32>
    %210 = tpu.matmul %209, %3, %cst_68 {dimension_numbers = #tpu.dot_dimension_numbers<[1], [0], [0], [1], [0, 0, 1, 1], [], []>} : vector<8x16xbf16>, vector<16x64xbf16>, vector<8x64xf32> -> vector<8x64xf32>
    %c0_69 = arith.constant 0 : index
    %c0_70 = arith.constant 0 : index
    %211 = vector.load %arg4[%c0_69, %c0_70] : memref<8x96xf32, #tpu.memory_space<vmem>>, vector<8x64xf32>
    tpu.vector_store %arg4[%c0_69, %c0_70], %210 {strides = array<i32>} : memref<8x96xf32, #tpu.memory_space<vmem>>, vector<8x64xf32>,
    %c0_71 = arith.constant 0 : index
    %c64_72 = arith.constant 64 : index
    %212 = vector.load %arg4[%c0_71, %c64_72] : memref<8x96xf32, #tpu.memory_space<vmem>>, vector<8x32xf32>
    tpu.vector_store %arg4[%c0_71, %c64_72], %151 {strides = array<i32>} : memref<8x96xf32, #tpu.memory_space<vmem>>, vector<8x32xf32>,
    %c0_73 = arith.constant 0 : index
    %c0_74 = arith.constant 0 : index
    %213 = vector.load %arg4[%c0_73, %c0_74] : memref<8x96xf32, #tpu.memory_space<vmem>>, vector<8x96xf32>
    %214 = arith.truncf %213 : vector<8x96xf32> to vector<8x96xbf16>
    %cst_75 = arith.constant dense<0.000000e+00> : vector<8x64xf32>
    %215 = tpu.matmul %214, %4, %cst_75 {dimension_numbers = #tpu.dot_dimension_numbers<[1], [0], [0], [1], [0, 0, 1, 1], [], []>} : vector<8x96xbf16>, vector<96x64xbf16>, vector<8x64xf32> -> vector<8x64xf32>
    %216 = vector.broadcast %12 : vector<1x64xf32> to vector<8x64xf32>
    %217 = arith.addf %215, %216 : vector<8x64xf32>
    %218 = vector.extract_strided_slice %217 {offsets = [0, 32], sizes = [8, 32], strides = [1, 1]} : vector<8x64xf32> to vector<8x32xf32>
    %219 = math.tanh %218 : vector<8x32xf32>
    %c0_i32_76 = arith.constant 0 : i32
    %220 = vector.broadcast %c0_i32_76 : i32 to vector<8x1xi32>
    %221 = arith.cmpi eq, %191, %220 : vector<8x1xi32>
    %222 = arith.extui %221 : vector<8x1xi1> to vector<8x1xi32>
    %223 = arith.sitofp %222 : vector<8x1xi32> to vector<8x1xf32>
    %224 = arith.mulf %197, %223 : vector<8x1xf32>
    %225 = arith.subf %219, %160 : vector<8x32xf32>
    %226 = vector.broadcast %224 : vector<8x1xf32> to vector<8x32xf32>
    %227 = arith.mulf %226, %225 : vector<8x32xf32>
    %228 = arith.addf %160, %227 : vector<8x32xf32>
    %229 = arith.maximumf %161, %223 : vector<8x1xf32>
    %230 = vector.extract_strided_slice %217 {offsets = [0, 0], sizes = [8, 32], strides = [1, 1]} : vector<8x64xf32> to vector<8x32xf32>
    %231 = arith.addf %230, %170 : vector<8x32xf32>
    %232 = math.tanh %231 : vector<8x32xf32>
    %233 = arith.truncf %232 : vector<8x32xf32> to vector<8x32xbf16>
    %cst_77 = arith.constant dense<0.000000e+00> : vector<8x48xf32>
    %234 = tpu.matmul %233, %2, %cst_77 {dimension_numbers = #tpu.dot_dimension_numbers<[1], [0], [0], [1], [0, 0, 1, 1], [], []>} : vector<8x32xbf16>, vector<32x48xbf16>, vector<8x48xf32> -> vector<8x48xf32>
    %235 = vector.extract_strided_slice %234 {offsets = [0, 0], sizes = [8, 16], strides = [1, 1]} : vector<8x48xf32> to vector<8x16xf32>
    %236 = vector.broadcast %10 : vector<1x16xf32> to vector<8x16xf32>
    %237 = arith.addf %235, %236 : vector<8x16xf32>
    %238 = vector.extract_strided_slice %234 {offsets = [0, 16], sizes = [8, 32], strides = [1, 1]} : vector<8x48xf32> to vector<8x32xf32>
    %cst_78 = arith.constant dense<0xFF800000> : vector<8xf32>
    %239 = vector.multi_reduction <maximumf>, %237, %cst_78 [1] : vector<8x16xf32> to vector<8xf32>
    %240 = vector.shape_cast %239 : vector<8xf32> to vector<8x1xf32>
    %241 = vector.broadcast %240 : vector<8x1xf32> to vector<8x16xf32>
    %242 = arith.subf %237, %241 : vector<8x16xf32>
    %243 = math.exp %242 : vector<8x16xf32>
    %cst_79 = arith.constant dense<0.000000e+00> : vector<8xf32>
    %244 = vector.multi_reduction <add>, %243, %cst_79 [1] : vector<8x16xf32> to vector<8xf32>
    %245 = vector.shape_cast %244 : vector<8xf32> to vector<8x1xf32>
    %246 = math.log %245 : vector<8x1xf32>
    %cst_80 = arith.constant 0.000000e+00 : f32
    %247 = vector.broadcast %cst_80 : f32 to vector<8x1xf32>
    %248 = arith.subf %247, %246 : vector<8x1xf32>
    %249 = arith.mulf %243, %242 : vector<8x16xf32>
    %cst_81 = arith.constant dense<0.000000e+00> : vector<8xf32>
    %250 = vector.multi_reduction <add>, %249, %cst_81 [1] : vector<8x16xf32> to vector<8xf32>
    %251 = vector.shape_cast %250 : vector<8xf32> to vector<8x1xf32>
    %252 = arith.divf %251, %245 : vector<8x1xf32>
    %253 = arith.subf %246, %252 : vector<8x1xf32>
    %254 = vector.broadcast %240 : vector<8x1xf32> to vector<8x16xf32>
    %255 = arith.cmpf oeq, %237, %254 : vector<8x16xf32>
    %c16_i32_82 = arith.constant 16 : i32
    %256 = vector.broadcast %c16_i32_82 : i32 to vector<8x16xi32>
    %257 = arith.select %255, %28, %256 : vector<8x16xi1>, vector<8x16xi32>
    %cst_83 = arith.constant dense<2147483647> : vector<8xi32>
    %258 = vector.multi_reduction <minsi>, %257, %cst_83 [1] : vector<8x16xi32> to vector<8xi32>
    %259 = vector.shape_cast %258 : vector<8xi32> to vector<8x1xi32>
    %260 = vector.broadcast %259 : vector<8x1xi32> to vector<8x16xi32>
    %261 = arith.cmpi eq, %28, %260 : vector<8x16xi32>
    %262 = arith.extui %261 : vector<8x16xi1> to vector<8x16xi32>
    %263 = arith.sitofp %262 : vector<8x16xi32> to vector<8x16xf32>
    %cst_84 = arith.constant 1.000000e+00 : f32
    %264 = vector.broadcast %cst_84 : f32 to vector<8x1xf32>
    %265 = arith.subf %264, %229 : vector<8x1xf32>
    %266 = arith.mulf %253, %265 : vector<8x1xf32>
    %cst_85 = arith.constant 1.000000e+00 : f32
    %267 = vector.broadcast %cst_85 : f32 to vector<8x1xf32>
    %268 = arith.mulf %266, %267 : vector<8x1xf32>
    %269 = arith.addf %201, %268 : vector<8x1xf32>
    %270 = arith.mulf %248, %265 : vector<8x1xf32>
    %271 = arith.addf %203, %270 : vector<8x1xf32>
    %cst_86 = arith.constant 1.000000e+00 : f32
    %272 = vector.broadcast %cst_86 : f32 to vector<8x1xf32>
    %273 = arith.mulf %272, %265 : vector<8x1xf32>
    %274 = arith.addf %206, %273 : vector<8x1xf32>
    %275 = arith.addf %207, %265 : vector<8x1xf32>
    %276 = arith.addf %208, %253 : vector<8x1xf32>
    %277 = arith.truncf %263 : vector<8x16xf32> to vector<8x16xbf16>
    %cst_87 = arith.constant dense<0.000000e+00> : vector<8x64xf32>
    %278 = tpu.matmul %277, %3, %cst_87 {dimension_numbers = #tpu.dot_dimension_numbers<[1], [0], [0], [1], [0, 0, 1, 1], [], []>} : vector<8x16xbf16>, vector<16x64xbf16>, vector<8x64xf32> -> vector<8x64xf32>
    %c0_88 = arith.constant 0 : index
    %c0_89 = arith.constant 0 : index
    %279 = vector.load %arg4[%c0_88, %c0_89] : memref<8x96xf32, #tpu.memory_space<vmem>>, vector<8x64xf32>
    tpu.vector_store %arg4[%c0_88, %c0_89], %278 {strides = array<i32>} : memref<8x96xf32, #tpu.memory_space<vmem>>, vector<8x64xf32>,
    %c0_90 = arith.constant 0 : index
    %c64_91 = arith.constant 64 : index
    %280 = vector.load %arg4[%c0_90, %c64_91] : memref<8x96xf32, #tpu.memory_space<vmem>>, vector<8x32xf32>
    tpu.vector_store %arg4[%c0_90, %c64_91], %219 {strides = array<i32>} : memref<8x96xf32, #tpu.memory_space<vmem>>, vector<8x32xf32>,
    %c0_92 = arith.constant 0 : index
    %c0_93 = arith.constant 0 : index
    %281 = vector.load %arg4[%c0_92, %c0_93] : memref<8x96xf32, #tpu.memory_space<vmem>>, vector<8x96xf32>
    %282 = arith.truncf %281 : vector<8x96xf32> to vector<8x96xbf16>
    %cst_94 = arith.constant dense<0.000000e+00> : vector<8x64xf32>
    %283 = tpu.matmul %282, %4, %cst_94 {dimension_numbers = #tpu.dot_dimension_numbers<[1], [0], [0], [1], [0, 0, 1, 1], [], []>} : vector<8x96xbf16>, vector<96x64xbf16>, vector<8x64xf32> -> vector<8x64xf32>
    %284 = vector.broadcast %12 : vector<1x64xf32> to vector<8x64xf32>
    %285 = arith.addf %283, %284 : vector<8x64xf32>
    %286 = vector.extract_strided_slice %285 {offsets = [0, 32], sizes = [8, 32], strides = [1, 1]} : vector<8x64xf32> to vector<8x32xf32>
    %287 = math.tanh %286 : vector<8x32xf32>
    %c0_i32_95 = arith.constant 0 : i32
    %288 = vector.broadcast %c0_i32_95 : i32 to vector<8x1xi32>
    %289 = arith.cmpi eq, %259, %288 : vector<8x1xi32>
    %290 = arith.extui %289 : vector<8x1xi1> to vector<8x1xi32>
    %291 = arith.sitofp %290 : vector<8x1xi32> to vector<8x1xf32>
    %292 = arith.mulf %265, %291 : vector<8x1xf32>
    %293 = arith.subf %287, %228 : vector<8x32xf32>
    %294 = vector.broadcast %292 : vector<8x1xf32> to vector<8x32xf32>
    %295 = arith.mulf %294, %293 : vector<8x32xf32>
    %296 = arith.addf %228, %295 : vector<8x32xf32>
    %297 = arith.maximumf %229, %291 : vector<8x1xf32>
    %298 = vector.extract_strided_slice %285 {offsets = [0, 0], sizes = [8, 32], strides = [1, 1]} : vector<8x64xf32> to vector<8x32xf32>
    %299 = arith.addf %298, %238 : vector<8x32xf32>
    %300 = math.tanh %299 : vector<8x32xf32>
    %301 = arith.truncf %300 : vector<8x32xf32> to vector<8x32xbf16>
    %cst_96 = arith.constant dense<0.000000e+00> : vector<8x48xf32>
    %302 = tpu.matmul %301, %2, %cst_96 {dimension_numbers = #tpu.dot_dimension_numbers<[1], [0], [0], [1], [0, 0, 1, 1], [], []>} : vector<8x32xbf16>, vector<32x48xbf16>, vector<8x48xf32> -> vector<8x48xf32>
    %303 = vector.extract_strided_slice %302 {offsets = [0, 0], sizes = [8, 16], strides = [1, 1]} : vector<8x48xf32> to vector<8x16xf32>
    %304 = vector.broadcast %10 : vector<1x16xf32> to vector<8x16xf32>
    %305 = arith.addf %303, %304 : vector<8x16xf32>
    %306 = vector.extract_strided_slice %302 {offsets = [0, 16], sizes = [8, 32], strides = [1, 1]} : vector<8x48xf32> to vector<8x32xf32>
    %cst_97 = arith.constant dense<0xFF800000> : vector<8xf32>
    %307 = vector.multi_reduction <maximumf>, %305, %cst_97 [1] : vector<8x16xf32> to vector<8xf32>
    %308 = vector.shape_cast %307 : vector<8xf32> to vector<8x1xf32>
    %309 = vector.broadcast %308 : vector<8x1xf32> to vector<8x16xf32>
    %310 = arith.subf %305, %309 : vector<8x16xf32>
    %311 = math.exp %310 : vector<8x16xf32>
    %cst_98 = arith.constant dense<0.000000e+00> : vector<8xf32>
    %312 = vector.multi_reduction <add>, %311, %cst_98 [1] : vector<8x16xf32> to vector<8xf32>
    %313 = vector.shape_cast %312 : vector<8xf32> to vector<8x1xf32>
    %314 = math.log %313 : vector<8x1xf32>
    %cst_99 = arith.constant 0.000000e+00 : f32
    %315 = vector.broadcast %cst_99 : f32 to vector<8x1xf32>
    %316 = arith.subf %315, %314 : vector<8x1xf32>
    %317 = arith.mulf %311, %310 : vector<8x16xf32>
    %cst_100 = arith.constant dense<0.000000e+00> : vector<8xf32>
    %318 = vector.multi_reduction <add>, %317, %cst_100 [1] : vector<8x16xf32> to vector<8xf32>
    %319 = vector.shape_cast %318 : vector<8xf32> to vector<8x1xf32>
    %320 = arith.divf %319, %313 : vector<8x1xf32>
    %321 = arith.subf %314, %320 : vector<8x1xf32>
    %322 = vector.broadcast %308 : vector<8x1xf32> to vector<8x16xf32>
    %323 = arith.cmpf oeq, %305, %322 : vector<8x16xf32>
    %c16_i32_101 = arith.constant 16 : i32
    %324 = vector.broadcast %c16_i32_101 : i32 to vector<8x16xi32>
    %325 = arith.select %323, %28, %324 : vector<8x16xi1>, vector<8x16xi32>
    %cst_102 = arith.constant dense<2147483647> : vector<8xi32>
    %326 = vector.multi_reduction <minsi>, %325, %cst_102 [1] : vector<8x16xi32> to vector<8xi32>
    %327 = vector.shape_cast %326 : vector<8xi32> to vector<8x1xi32>
    %328 = vector.broadcast %327 : vector<8x1xi32> to vector<8x16xi32>
    %329 = arith.cmpi eq, %28, %328 : vector<8x16xi32>
    %330 = arith.extui %329 : vector<8x16xi1> to vector<8x16xi32>
    %331 = arith.sitofp %330 : vector<8x16xi32> to vector<8x16xf32>
    %cst_103 = arith.constant 1.000000e+00 : f32
    %332 = vector.broadcast %cst_103 : f32 to vector<8x1xf32>
    %333 = arith.subf %332, %297 : vector<8x1xf32>
    %334 = arith.mulf %321, %333 : vector<8x1xf32>
    %cst_104 = arith.constant 1.000000e+00 : f32
    %335 = vector.broadcast %cst_104 : f32 to vector<8x1xf32>
    %336 = arith.mulf %334, %335 : vector<8x1xf32>
    %337 = arith.addf %269, %336 : vector<8x1xf32>
    %338 = arith.mulf %316, %333 : vector<8x1xf32>
    %339 = arith.addf %271, %338 : vector<8x1xf32>
    %cst_105 = arith.constant 1.000000e+00 : f32
    %340 = vector.broadcast %cst_105 : f32 to vector<8x1xf32>
    %341 = arith.mulf %340, %333 : vector<8x1xf32>
    %342 = arith.addf %274, %341 : vector<8x1xf32>
    %343 = arith.addf %275, %333 : vector<8x1xf32>
    %344 = arith.addf %276, %321 : vector<8x1xf32>
    %345 = arith.truncf %331 : vector<8x16xf32> to vector<8x16xbf16>
    %cst_106 = arith.constant dense<0.000000e+00> : vector<8x64xf32>
    %346 = tpu.matmul %345, %3, %cst_106 {dimension_numbers = #tpu.dot_dimension_numbers<[1], [0], [0], [1], [0, 0, 1, 1], [], []>} : vector<8x16xbf16>, vector<16x64xbf16>, vector<8x64xf32> -> vector<8x64xf32>
    %c0_107 = arith.constant 0 : index
    %c0_108 = arith.constant 0 : index
    %347 = vector.load %arg4[%c0_107, %c0_108] : memref<8x96xf32, #tpu.memory_space<vmem>>, vector<8x64xf32>
    tpu.vector_store %arg4[%c0_107, %c0_108], %346 {strides = array<i32>} : memref<8x96xf32, #tpu.memory_space<vmem>>, vector<8x64xf32>,
    %c0_109 = arith.constant 0 : index
    %c64_110 = arith.constant 64 : index
    %348 = vector.load %arg4[%c0_109, %c64_110] : memref<8x96xf32, #tpu.memory_space<vmem>>, vector<8x32xf32>
    tpu.vector_store %arg4[%c0_109, %c64_110], %287 {strides = array<i32>} : memref<8x96xf32, #tpu.memory_space<vmem>>, vector<8x32xf32>,
    %c0_111 = arith.constant 0 : index
    %c0_112 = arith.constant 0 : index
    %349 = vector.load %arg4[%c0_111, %c0_112] : memref<8x96xf32, #tpu.memory_space<vmem>>, vector<8x96xf32>
    %350 = arith.truncf %349 : vector<8x96xf32> to vector<8x96xbf16>
    %cst_113 = arith.constant dense<0.000000e+00> : vector<8x64xf32>
    %351 = tpu.matmul %350, %4, %cst_113 {dimension_numbers = #tpu.dot_dimension_numbers<[1], [0], [0], [1], [0, 0, 1, 1], [], []>} : vector<8x96xbf16>, vector<96x64xbf16>, vector<8x64xf32> -> vector<8x64xf32>
    %352 = vector.broadcast %12 : vector<1x64xf32> to vector<8x64xf32>
    %353 = arith.addf %351, %352 : vector<8x64xf32>
    %354 = vector.extract_strided_slice %353 {offsets = [0, 32], sizes = [8, 32], strides = [1, 1]} : vector<8x64xf32> to vector<8x32xf32>
    %355 = math.tanh %354 : vector<8x32xf32>
    %c0_i32_114 = arith.constant 0 : i32
    %356 = vector.broadcast %c0_i32_114 : i32 to vector<8x1xi32>
    %357 = arith.cmpi eq, %327, %356 : vector<8x1xi32>
    %358 = arith.extui %357 : vector<8x1xi1> to vector<8x1xi32>
    %359 = arith.sitofp %358 : vector<8x1xi32> to vector<8x1xf32>
    %360 = arith.mulf %333, %359 : vector<8x1xf32>
    %361 = arith.subf %355, %296 : vector<8x32xf32>
    %362 = vector.broadcast %360 : vector<8x1xf32> to vector<8x32xf32>
    %363 = arith.mulf %362, %361 : vector<8x32xf32>
    %364 = arith.addf %296, %363 : vector<8x32xf32>
    %365 = arith.maximumf %297, %359 : vector<8x1xf32>
    %366 = vector.extract_strided_slice %353 {offsets = [0, 0], sizes = [8, 32], strides = [1, 1]} : vector<8x64xf32> to vector<8x32xf32>
    %367 = arith.addf %366, %306 : vector<8x32xf32>
    %368 = math.tanh %367 : vector<8x32xf32>
    %369 = arith.truncf %368 : vector<8x32xf32> to vector<8x32xbf16>
    %cst_115 = arith.constant dense<0.000000e+00> : vector<8x48xf32>
    %370 = tpu.matmul %369, %2, %cst_115 {dimension_numbers = #tpu.dot_dimension_numbers<[1], [0], [0], [1], [0, 0, 1, 1], [], []>} : vector<8x32xbf16>, vector<32x48xbf16>, vector<8x48xf32> -> vector<8x48xf32>
    %371 = vector.extract_strided_slice %370 {offsets = [0, 0], sizes = [8, 16], strides = [1, 1]} : vector<8x48xf32> to vector<8x16xf32>
    %372 = vector.broadcast %10 : vector<1x16xf32> to vector<8x16xf32>
    %373 = arith.addf %371, %372 : vector<8x16xf32>
    %374 = vector.extract_strided_slice %370 {offsets = [0, 16], sizes = [8, 32], strides = [1, 1]} : vector<8x48xf32> to vector<8x32xf32>
    %cst_116 = arith.constant dense<0xFF800000> : vector<8xf32>
    %375 = vector.multi_reduction <maximumf>, %373, %cst_116 [1] : vector<8x16xf32> to vector<8xf32>
    %376 = vector.shape_cast %375 : vector<8xf32> to vector<8x1xf32>
    %377 = vector.broadcast %376 : vector<8x1xf32> to vector<8x16xf32>
    %378 = arith.subf %373, %377 : vector<8x16xf32>
    %379 = math.exp %378 : vector<8x16xf32>
    %cst_117 = arith.constant dense<0.000000e+00> : vector<8xf32>
    %380 = vector.multi_reduction <add>, %379, %cst_117 [1] : vector<8x16xf32> to vector<8xf32>
    %381 = vector.shape_cast %380 : vector<8xf32> to vector<8x1xf32>
    %382 = math.log %381 : vector<8x1xf32>
    %cst_118 = arith.constant 0.000000e+00 : f32
    %383 = vector.broadcast %cst_118 : f32 to vector<8x1xf32>
    %384 = arith.subf %383, %382 : vector<8x1xf32>
    %385 = arith.mulf %379, %378 : vector<8x16xf32>
    %cst_119 = arith.constant dense<0.000000e+00> : vector<8xf32>
    %386 = vector.multi_reduction <add>, %385, %cst_119 [1] : vector<8x16xf32> to vector<8xf32>
    %387 = vector.shape_cast %386 : vector<8xf32> to vector<8x1xf32>
    %388 = arith.divf %387, %381 : vector<8x1xf32>
    %389 = arith.subf %382, %388 : vector<8x1xf32>
    %390 = vector.broadcast %376 : vector<8x1xf32> to vector<8x16xf32>
    %391 = arith.cmpf oeq, %373, %390 : vector<8x16xf32>
    %c16_i32_120 = arith.constant 16 : i32
    %392 = vector.broadcast %c16_i32_120 : i32 to vector<8x16xi32>
    %393 = arith.select %391, %28, %392 : vector<8x16xi1>, vector<8x16xi32>
    %cst_121 = arith.constant dense<2147483647> : vector<8xi32>
    %394 = vector.multi_reduction <minsi>, %393, %cst_121 [1] : vector<8x16xi32> to vector<8xi32>
    %395 = vector.shape_cast %394 : vector<8xi32> to vector<8x1xi32>
    %396 = vector.broadcast %395 : vector<8x1xi32> to vector<8x16xi32>
    %397 = arith.cmpi eq, %28, %396 : vector<8x16xi32>
    %398 = arith.extui %397 : vector<8x16xi1> to vector<8x16xi32>
    %399 = arith.sitofp %398 : vector<8x16xi32> to vector<8x16xf32>
    %cst_122 = arith.constant 1.000000e+00 : f32
    %400 = vector.broadcast %cst_122 : f32 to vector<8x1xf32>
    %401 = arith.subf %400, %365 : vector<8x1xf32>
    %402 = arith.mulf %389, %401 : vector<8x1xf32>
    %cst_123 = arith.constant 1.000000e+00 : f32
    %403 = vector.broadcast %cst_123 : f32 to vector<8x1xf32>
    %404 = arith.mulf %402, %403 : vector<8x1xf32>
    %405 = arith.addf %337, %404 : vector<8x1xf32>
    %406 = arith.mulf %384, %401 : vector<8x1xf32>
    %407 = arith.addf %339, %406 : vector<8x1xf32>
    %cst_124 = arith.constant 1.000000e+00 : f32
    %408 = vector.broadcast %cst_124 : f32 to vector<8x1xf32>
    %409 = arith.mulf %408, %401 : vector<8x1xf32>
    %410 = arith.addf %342, %409 : vector<8x1xf32>
    %411 = arith.addf %343, %401 : vector<8x1xf32>
    %412 = arith.addf %344, %389 : vector<8x1xf32>
    %413 = arith.truncf %399 : vector<8x16xf32> to vector<8x16xbf16>
    %cst_125 = arith.constant dense<0.000000e+00> : vector<8x64xf32>
    %414 = tpu.matmul %413, %3, %cst_125 {dimension_numbers = #tpu.dot_dimension_numbers<[1], [0], [0], [1], [0, 0, 1, 1], [], []>} : vector<8x16xbf16>, vector<16x64xbf16>, vector<8x64xf32> -> vector<8x64xf32>
    %c0_126 = arith.constant 0 : index
    %c0_127 = arith.constant 0 : index
    %415 = vector.load %arg4[%c0_126, %c0_127] : memref<8x96xf32, #tpu.memory_space<vmem>>, vector<8x64xf32>
    tpu.vector_store %arg4[%c0_126, %c0_127], %414 {strides = array<i32>} : memref<8x96xf32, #tpu.memory_space<vmem>>, vector<8x64xf32>,
    %c0_128 = arith.constant 0 : index
    %c64_129 = arith.constant 64 : index
    %416 = vector.load %arg4[%c0_128, %c64_129] : memref<8x96xf32, #tpu.memory_space<vmem>>, vector<8x32xf32>
    tpu.vector_store %arg4[%c0_128, %c64_129], %355 {strides = array<i32>} : memref<8x96xf32, #tpu.memory_space<vmem>>, vector<8x32xf32>,
    %c0_130 = arith.constant 0 : index
    %c0_131 = arith.constant 0 : index
    %417 = vector.load %arg4[%c0_130, %c0_131] : memref<8x96xf32, #tpu.memory_space<vmem>>, vector<8x96xf32>
    %418 = arith.truncf %417 : vector<8x96xf32> to vector<8x96xbf16>
    %cst_132 = arith.constant dense<0.000000e+00> : vector<8x64xf32>
    %419 = tpu.matmul %418, %4, %cst_132 {dimension_numbers = #tpu.dot_dimension_numbers<[1], [0], [0], [1], [0, 0, 1, 1], [], []>} : vector<8x96xbf16>, vector<96x64xbf16>, vector<8x64xf32> -> vector<8x64xf32>
    %420 = vector.broadcast %12 : vector<1x64xf32> to vector<8x64xf32>
    %421 = arith.addf %419, %420 : vector<8x64xf32>
    %422 = vector.extract_strided_slice %421 {offsets = [0, 32], sizes = [8, 32], strides = [1, 1]} : vector<8x64xf32> to vector<8x32xf32>
    %423 = math.tanh %422 : vector<8x32xf32>
    %c0_i32_133 = arith.constant 0 : i32
    %424 = vector.broadcast %c0_i32_133 : i32 to vector<8x1xi32>
    %425 = arith.cmpi eq, %395, %424 : vector<8x1xi32>
    %426 = arith.extui %425 : vector<8x1xi1> to vector<8x1xi32>
    %427 = arith.sitofp %426 : vector<8x1xi32> to vector<8x1xf32>
    %428 = arith.mulf %401, %427 : vector<8x1xf32>
    %429 = arith.subf %423, %364 : vector<8x32xf32>
    %430 = vector.broadcast %428 : vector<8x1xf32> to vector<8x32xf32>
    %431 = arith.mulf %430, %429 : vector<8x32xf32>
    %432 = arith.addf %364, %431 : vector<8x32xf32>
    %433 = arith.maximumf %365, %427 : vector<8x1xf32>
    %434 = vector.extract_strided_slice %421 {offsets = [0, 0], sizes = [8, 32], strides = [1, 1]} : vector<8x64xf32> to vector<8x32xf32>
    %435 = arith.addf %434, %374 : vector<8x32xf32>
    %436 = math.tanh %435 : vector<8x32xf32>
    %437 = arith.truncf %436 : vector<8x32xf32> to vector<8x32xbf16>
    %cst_134 = arith.constant dense<0.000000e+00> : vector<8x48xf32>
    %438 = tpu.matmul %437, %2, %cst_134 {dimension_numbers = #tpu.dot_dimension_numbers<[1], [0], [0], [1], [0, 0, 1, 1], [], []>} : vector<8x32xbf16>, vector<32x48xbf16>, vector<8x48xf32> -> vector<8x48xf32>
    %439 = vector.extract_strided_slice %438 {offsets = [0, 0], sizes = [8, 16], strides = [1, 1]} : vector<8x48xf32> to vector<8x16xf32>
    %440 = vector.broadcast %10 : vector<1x16xf32> to vector<8x16xf32>
    %441 = arith.addf %439, %440 : vector<8x16xf32>
    %442 = vector.extract_strided_slice %438 {offsets = [0, 16], sizes = [8, 32], strides = [1, 1]} : vector<8x48xf32> to vector<8x32xf32>
    %cst_135 = arith.constant dense<0xFF800000> : vector<8xf32>
    %443 = vector.multi_reduction <maximumf>, %441, %cst_135 [1] : vector<8x16xf32> to vector<8xf32>
    %444 = vector.shape_cast %443 : vector<8xf32> to vector<8x1xf32>
    %445 = vector.broadcast %444 : vector<8x1xf32> to vector<8x16xf32>
    %446 = arith.subf %441, %445 : vector<8x16xf32>
    %447 = math.exp %446 : vector<8x16xf32>
    %cst_136 = arith.constant dense<0.000000e+00> : vector<8xf32>
    %448 = vector.multi_reduction <add>, %447, %cst_136 [1] : vector<8x16xf32> to vector<8xf32>
    %449 = vector.shape_cast %448 : vector<8xf32> to vector<8x1xf32>
    %450 = math.log %449 : vector<8x1xf32>
    %cst_137 = arith.constant 0.000000e+00 : f32
    %451 = vector.broadcast %cst_137 : f32 to vector<8x1xf32>
    %452 = arith.subf %451, %450 : vector<8x1xf32>
    %453 = arith.mulf %447, %446 : vector<8x16xf32>
    %cst_138 = arith.constant dense<0.000000e+00> : vector<8xf32>
    %454 = vector.multi_reduction <add>, %453, %cst_138 [1] : vector<8x16xf32> to vector<8xf32>
    %455 = vector.shape_cast %454 : vector<8xf32> to vector<8x1xf32>
    %456 = arith.divf %455, %449 : vector<8x1xf32>
    %457 = arith.subf %450, %456 : vector<8x1xf32>
    %458 = vector.broadcast %444 : vector<8x1xf32> to vector<8x16xf32>
    %459 = arith.cmpf oeq, %441, %458 : vector<8x16xf32>
    %c16_i32_139 = arith.constant 16 : i32
    %460 = vector.broadcast %c16_i32_139 : i32 to vector<8x16xi32>
    %461 = arith.select %459, %28, %460 : vector<8x16xi1>, vector<8x16xi32>
    %cst_140 = arith.constant dense<2147483647> : vector<8xi32>
    %462 = vector.multi_reduction <minsi>, %461, %cst_140 [1] : vector<8x16xi32> to vector<8xi32>
    %463 = vector.shape_cast %462 : vector<8xi32> to vector<8x1xi32>
    %464 = vector.broadcast %463 : vector<8x1xi32> to vector<8x16xi32>
    %465 = arith.cmpi eq, %28, %464 : vector<8x16xi32>
    %466 = arith.extui %465 : vector<8x16xi1> to vector<8x16xi32>
    %467 = arith.sitofp %466 : vector<8x16xi32> to vector<8x16xf32>
    %cst_141 = arith.constant 1.000000e+00 : f32
    %468 = vector.broadcast %cst_141 : f32 to vector<8x1xf32>
    %469 = arith.subf %468, %433 : vector<8x1xf32>
    %470 = arith.mulf %457, %469 : vector<8x1xf32>
    %cst_142 = arith.constant 1.000000e+00 : f32
    %471 = vector.broadcast %cst_142 : f32 to vector<8x1xf32>
    %472 = arith.mulf %470, %471 : vector<8x1xf32>
    %473 = arith.addf %405, %472 : vector<8x1xf32>
    %474 = arith.mulf %452, %469 : vector<8x1xf32>
    %475 = arith.addf %407, %474 : vector<8x1xf32>
    %cst_143 = arith.constant 1.000000e+00 : f32
    %476 = vector.broadcast %cst_143 : f32 to vector<8x1xf32>
    %477 = arith.mulf %476, %469 : vector<8x1xf32>
    %478 = arith.addf %410, %477 : vector<8x1xf32>
    %479 = arith.addf %411, %469 : vector<8x1xf32>
    %480 = arith.addf %412, %457 : vector<8x1xf32>
    %481 = arith.truncf %467 : vector<8x16xf32> to vector<8x16xbf16>
    %cst_144 = arith.constant dense<0.000000e+00> : vector<8x64xf32>
    %482 = tpu.matmul %481, %3, %cst_144 {dimension_numbers = #tpu.dot_dimension_numbers<[1], [0], [0], [1], [0, 0, 1, 1], [], []>} : vector<8x16xbf16>, vector<16x64xbf16>, vector<8x64xf32> -> vector<8x64xf32>
    %c0_145 = arith.constant 0 : index
    %c0_146 = arith.constant 0 : index
    %483 = vector.load %arg4[%c0_145, %c0_146] : memref<8x96xf32, #tpu.memory_space<vmem>>, vector<8x64xf32>
    tpu.vector_store %arg4[%c0_145, %c0_146], %482 {strides = array<i32>} : memref<8x96xf32, #tpu.memory_space<vmem>>, vector<8x64xf32>,
    %c0_147 = arith.constant 0 : index
    %c64_148 = arith.constant 64 : index
    %484 = vector.load %arg4[%c0_147, %c64_148] : memref<8x96xf32, #tpu.memory_space<vmem>>, vector<8x32xf32>
    tpu.vector_store %arg4[%c0_147, %c64_148], %423 {strides = array<i32>} : memref<8x96xf32, #tpu.memory_space<vmem>>, vector<8x32xf32>,
    %c0_149 = arith.constant 0 : index
    %c0_150 = arith.constant 0 : index
    %485 = vector.load %arg4[%c0_149, %c0_150] : memref<8x96xf32, #tpu.memory_space<vmem>>, vector<8x96xf32>
    %486 = arith.truncf %485 : vector<8x96xf32> to vector<8x96xbf16>
    %cst_151 = arith.constant dense<0.000000e+00> : vector<8x64xf32>
    %487 = tpu.matmul %486, %4, %cst_151 {dimension_numbers = #tpu.dot_dimension_numbers<[1], [0], [0], [1], [0, 0, 1, 1], [], []>} : vector<8x96xbf16>, vector<96x64xbf16>, vector<8x64xf32> -> vector<8x64xf32>
    %488 = vector.broadcast %12 : vector<1x64xf32> to vector<8x64xf32>
    %489 = arith.addf %487, %488 : vector<8x64xf32>
    %490 = vector.extract_strided_slice %489 {offsets = [0, 32], sizes = [8, 32], strides = [1, 1]} : vector<8x64xf32> to vector<8x32xf32>
    %491 = math.tanh %490 : vector<8x32xf32>
    %c0_i32_152 = arith.constant 0 : i32
    %492 = vector.broadcast %c0_i32_152 : i32 to vector<8x1xi32>
    %493 = arith.cmpi eq, %463, %492 : vector<8x1xi32>
    %494 = arith.extui %493 : vector<8x1xi1> to vector<8x1xi32>
    %495 = arith.sitofp %494 : vector<8x1xi32> to vector<8x1xf32>
    %496 = arith.mulf %469, %495 : vector<8x1xf32>
    %497 = arith.subf %491, %432 : vector<8x32xf32>
    %498 = vector.broadcast %496 : vector<8x1xf32> to vector<8x32xf32>
    %499 = arith.mulf %498, %497 : vector<8x32xf32>
    %500 = arith.addf %432, %499 : vector<8x32xf32>
    %501 = arith.maximumf %433, %495 : vector<8x1xf32>
    %502 = vector.extract_strided_slice %489 {offsets = [0, 0], sizes = [8, 32], strides = [1, 1]} : vector<8x64xf32> to vector<8x32xf32>
    %503 = arith.addf %502, %442 : vector<8x32xf32>
    %504 = math.tanh %503 : vector<8x32xf32>
    %505 = arith.truncf %504 : vector<8x32xf32> to vector<8x32xbf16>
    %cst_153 = arith.constant dense<0.000000e+00> : vector<8x48xf32>
    %506 = tpu.matmul %505, %2, %cst_153 {dimension_numbers = #tpu.dot_dimension_numbers<[1], [0], [0], [1], [0, 0, 1, 1], [], []>} : vector<8x32xbf16>, vector<32x48xbf16>, vector<8x48xf32> -> vector<8x48xf32>
    %507 = vector.extract_strided_slice %506 {offsets = [0, 0], sizes = [8, 16], strides = [1, 1]} : vector<8x48xf32> to vector<8x16xf32>
    %508 = vector.broadcast %10 : vector<1x16xf32> to vector<8x16xf32>
    %509 = arith.addf %507, %508 : vector<8x16xf32>
    %cst_154 = arith.constant dense<0xFF800000> : vector<8xf32>
    %510 = vector.multi_reduction <maximumf>, %509, %cst_154 [1] : vector<8x16xf32> to vector<8xf32>
    %511 = vector.shape_cast %510 : vector<8xf32> to vector<8x1xf32>
    %512 = vector.broadcast %511 : vector<8x1xf32> to vector<8x16xf32>
    %513 = arith.subf %509, %512 : vector<8x16xf32>
    %514 = math.exp %513 : vector<8x16xf32>
    %cst_155 = arith.constant dense<0.000000e+00> : vector<8xf32>
    %515 = vector.multi_reduction <add>, %514, %cst_155 [1] : vector<8x16xf32> to vector<8xf32>
    %516 = vector.shape_cast %515 : vector<8xf32> to vector<8x1xf32>
    %517 = math.log %516 : vector<8x1xf32>
    %cst_156 = arith.constant 0.000000e+00 : f32
    %518 = vector.broadcast %cst_156 : f32 to vector<8x1xf32>
    %519 = arith.subf %518, %517 : vector<8x1xf32>
    %520 = arith.mulf %514, %513 : vector<8x16xf32>
    %cst_157 = arith.constant dense<0.000000e+00> : vector<8xf32>
    %521 = vector.multi_reduction <add>, %520, %cst_157 [1] : vector<8x16xf32> to vector<8xf32>
    %522 = vector.shape_cast %521 : vector<8xf32> to vector<8x1xf32>
    %523 = arith.divf %522, %516 : vector<8x1xf32>
    %524 = arith.subf %517, %523 : vector<8x1xf32>
    %525 = vector.broadcast %511 : vector<8x1xf32> to vector<8x16xf32>
    %526 = arith.cmpf oeq, %509, %525 : vector<8x16xf32>
    %c16_i32_158 = arith.constant 16 : i32
    %527 = vector.broadcast %c16_i32_158 : i32 to vector<8x16xi32>
    %528 = arith.select %526, %28, %527 : vector<8x16xi1>, vector<8x16xi32>
    %cst_159 = arith.constant dense<2147483647> : vector<8xi32>
    %529 = vector.multi_reduction <minsi>, %528, %cst_159 [1] : vector<8x16xi32> to vector<8xi32>
    %530 = vector.shape_cast %529 : vector<8xi32> to vector<8x1xi32>
    %531 = vector.broadcast %530 : vector<8x1xi32> to vector<8x16xi32>
    %532 = arith.cmpi eq, %28, %531 : vector<8x16xi32>
    %533 = arith.extui %532 : vector<8x16xi1> to vector<8x16xi32>
    %534 = arith.sitofp %533 : vector<8x16xi32> to vector<8x16xf32>
    %cst_160 = arith.constant 1.000000e+00 : f32
    %535 = vector.broadcast %cst_160 : f32 to vector<8x1xf32>
    %536 = arith.subf %535, %501 : vector<8x1xf32>
    %537 = arith.mulf %524, %536 : vector<8x1xf32>
    %cst_161 = arith.constant 1.000000e+00 : f32
    %538 = vector.broadcast %cst_161 : f32 to vector<8x1xf32>
    %539 = arith.mulf %537, %538 : vector<8x1xf32>
    %540 = arith.addf %473, %539 : vector<8x1xf32>
    %541 = arith.mulf %519, %536 : vector<8x1xf32>
    %542 = arith.addf %475, %541 : vector<8x1xf32>
    %cst_162 = arith.constant 1.000000e+00 : f32
    %543 = vector.broadcast %cst_162 : f32 to vector<8x1xf32>
    %544 = arith.mulf %543, %536 : vector<8x1xf32>
    %545 = arith.addf %478, %544 : vector<8x1xf32>
    %546 = arith.addf %479, %536 : vector<8x1xf32>
    %547 = arith.addf %480, %524 : vector<8x1xf32>
    %548 = arith.truncf %534 : vector<8x16xf32> to vector<8x16xbf16>
    %cst_163 = arith.constant dense<0.000000e+00> : vector<8x64xf32>
    %549 = tpu.matmul %548, %3, %cst_163 {dimension_numbers = #tpu.dot_dimension_numbers<[1], [0], [0], [1], [0, 0, 1, 1], [], []>} : vector<8x16xbf16>, vector<16x64xbf16>, vector<8x64xf32> -> vector<8x64xf32>
    %c0_164 = arith.constant 0 : index
    %c0_165 = arith.constant 0 : index
    %550 = vector.load %arg4[%c0_164, %c0_165] : memref<8x96xf32, #tpu.memory_space<vmem>>, vector<8x64xf32>
    tpu.vector_store %arg4[%c0_164, %c0_165], %549 {strides = array<i32>} : memref<8x96xf32, #tpu.memory_space<vmem>>, vector<8x64xf32>,
    %c0_166 = arith.constant 0 : index
    %c64_167 = arith.constant 64 : index
    %551 = vector.load %arg4[%c0_166, %c64_167] : memref<8x96xf32, #tpu.memory_space<vmem>>, vector<8x32xf32>
    tpu.vector_store %arg4[%c0_166, %c64_167], %491 {strides = array<i32>} : memref<8x96xf32, #tpu.memory_space<vmem>>, vector<8x32xf32>,
    %c0_168 = arith.constant 0 : index
    %c0_169 = arith.constant 0 : index
    %552 = vector.load %arg4[%c0_168, %c0_169] : memref<8x96xf32, #tpu.memory_space<vmem>>, vector<8x96xf32>
    %553 = arith.truncf %552 : vector<8x96xf32> to vector<8x96xbf16>
    %cst_170 = arith.constant dense<0.000000e+00> : vector<8x64xf32>
    %554 = tpu.matmul %553, %4, %cst_170 {dimension_numbers = #tpu.dot_dimension_numbers<[1], [0], [0], [1], [0, 0, 1, 1], [], []>} : vector<8x96xbf16>, vector<96x64xbf16>, vector<8x64xf32> -> vector<8x64xf32>
    %555 = vector.broadcast %12 : vector<1x64xf32> to vector<8x64xf32>
    %556 = arith.addf %554, %555 : vector<8x64xf32>
    %557 = vector.extract_strided_slice %556 {offsets = [0, 32], sizes = [8, 32], strides = [1, 1]} : vector<8x64xf32> to vector<8x32xf32>
    %558 = math.tanh %557 : vector<8x32xf32>
    %559 = arith.subf %558, %500 : vector<8x32xf32>
    %560 = vector.broadcast %536 : vector<8x1xf32> to vector<8x32xf32>
    %561 = arith.mulf %560, %559 : vector<8x32xf32>
    %562 = arith.addf %500, %561 : vector<8x32xf32>
    %563 = arith.divf %540, %545 : vector<8x1xf32>
    %564 = arith.truncf %562 : vector<8x32xf32> to vector<8x32xbf16>
    %cst_171 = arith.constant dense<0.000000e+00> : vector<8x16xf32>
    %565 = tpu.matmul %564, %6, %cst_171 {dimension_numbers = #tpu.dot_dimension_numbers<[1], [0], [0], [1], [0, 0, 1, 1], [], []>} : vector<8x32xbf16>, vector<32x16xbf16>, vector<8x16xf32> -> vector<8x16xf32>
    %566 = vector.broadcast %14 : vector<1x16xf32> to vector<8x16xf32>
    %567 = arith.addf %565, %566 : vector<8x16xf32>
    %568 = arith.subf %567, %1 : vector<8x16xf32>
    %569 = arith.mulf %568, %568 : vector<8x16xf32>
    %cst_172 = arith.constant dense<0.000000e+00> : vector<8xf32>
    %570 = vector.multi_reduction <add>, %569, %cst_172 [1] : vector<8x16xf32> to vector<8xf32>
    %571 = vector.shape_cast %570 : vector<8xf32> to vector<8x1xf32>
    %cst_173 = arith.constant 6.250000e-02 : f32
    %572 = vector.broadcast %cst_173 : f32 to vector<8x1xf32>
    %573 = arith.mulf %571, %572 : vector<8x1xf32>
    %cst_174 = arith.constant 4.000000e+00 : f32
    %574 = vector.broadcast %cst_174 : f32 to vector<8x1xf32>
    %575 = arith.subf %546, %574 : vector<8x1xf32>
    %cst_175 = arith.constant 0.000000e+00 : f32
    %576 = vector.broadcast %cst_175 : f32 to vector<8x1xf32>
    %577 = arith.maximumf %575, %576 : vector<8x1xf32>
    %cst_176 = arith.constant 1.000000e-01 : f32
    %578 = vector.broadcast %cst_176 : f32 to vector<8x1xf32>
    %579 = arith.mulf %578, %577 : vector<8x1xf32>
    %cst_177 = arith.constant 0.000000e+00 : f32
    %580 = vector.broadcast %cst_177 : f32 to vector<8x1xf32>
    %581 = arith.subf %573, %580 : vector<8x1xf32>
    %582 = arith.mulf %581, %542 : vector<8x1xf32>
    %cst_178 = arith.constant 0.000000e+00 : f32
    %583 = vector.broadcast %cst_178 : f32 to vector<8x1xf32>
    %584 = arith.subf %579, %583 : vector<8x1xf32>
    %585 = arith.mulf %584, %542 : vector<8x1xf32>
    %cst_179 = arith.constant 1.000000e-01 : f32
    %586 = vector.broadcast %cst_179 : f32 to vector<8x1xf32>
    %587 = arith.mulf %586, %563 : vector<8x1xf32>
    %588 = arith.addf %573, %582 : vector<8x1xf32>
    %589 = arith.addf %588, %585 : vector<8x1xf32>
    %590 = arith.subf %589, %587 : vector<8x1xf32>
    %cst_180 = arith.constant 1.250000e-01 : f32
    %591 = vector.broadcast %cst_180 : f32 to vector<8x1xf32>
    %592 = arith.mulf %547, %591 : vector<8x1xf32>
    %cst_181 = arith.constant 0.000000e+00 : f32
    %593 = vector.broadcast %cst_181 : f32 to vector<8x1xf32>
    %cst_182 = arith.constant dense<0.000000e+00> : vector<1xf32>
    %594 = vector.multi_reduction <add>, %590, %cst_182 [0] : vector<8x1xf32> to vector<1xf32>
    %595 = vector.shape_cast %594 : vector<1xf32> to vector<1x1xf32>
    %cst_183 = arith.constant 1.250000e-01 : f32
    %596 = vector.broadcast %cst_183 : f32 to vector<1x1xf32>
    %597 = arith.mulf %595, %596 : vector<1x1xf32>
    %c0_184 = arith.constant 0 : index
    %c0_185 = arith.constant 0 : index
    %598 = vector.load %arg3[%c0_184, %c0_185] : memref<1x8xf32, #tpu.memory_space<vmem>>, vector<1x1xf32>
    tpu.vector_store %arg3[%c0_184, %c0_185], %597 {strides = array<i32>} : memref<1x8xf32, #tpu.memory_space<vmem>>, vector<1x1xf32>,
    %cst_186 = arith.constant dense<0.000000e+00> : vector<1xf32>
    %599 = vector.multi_reduction <add>, %573, %cst_186 [0] : vector<8x1xf32> to vector<1xf32>
    %600 = vector.shape_cast %599 : vector<1xf32> to vector<1x1xf32>
    %cst_187 = arith.constant 1.250000e-01 : f32
    %601 = vector.broadcast %cst_187 : f32 to vector<1x1xf32>
    %602 = arith.mulf %600, %601 : vector<1x1xf32>
    %c0_188 = arith.constant 0 : index
    %c1 = arith.constant 1 : index
    %603 = vector.load %arg3[%c0_188, %c1] : memref<1x8xf32, #tpu.memory_space<vmem>>, vector<1x1xf32>
    tpu.vector_store %arg3[%c0_188, %c1], %602 {strides = array<i32>} : memref<1x8xf32, #tpu.memory_space<vmem>>, vector<1x1xf32>,
    %cst_189 = arith.constant dense<0.000000e+00> : vector<1xf32>
    %604 = vector.multi_reduction <add>, %582, %cst_189 [0] : vector<8x1xf32> to vector<1xf32>
    %605 = vector.shape_cast %604 : vector<1xf32> to vector<1x1xf32>
    %cst_190 = arith.constant 1.250000e-01 : f32
    %606 = vector.broadcast %cst_190 : f32 to vector<1x1xf32>
    %607 = arith.mulf %605, %606 : vector<1x1xf32>
    %c0_191 = arith.constant 0 : index
    %c2 = arith.constant 2 : index
    %608 = vector.load %arg3[%c0_191, %c2] : memref<1x8xf32, #tpu.memory_space<vmem>>, vector<1x1xf32>
    tpu.vector_store %arg3[%c0_191, %c2], %607 {strides = array<i32>} : memref<1x8xf32, #tpu.memory_space<vmem>>, vector<1x1xf32>,
    %cst_192 = arith.constant dense<0.000000e+00> : vector<1xf32>
    %609 = vector.multi_reduction <add>, %585, %cst_192 [0] : vector<8x1xf32> to vector<1xf32>
    %610 = vector.shape_cast %609 : vector<1xf32> to vector<1x1xf32>
    %cst_193 = arith.constant 1.250000e-01 : f32
    %611 = vector.broadcast %cst_193 : f32 to vector<1x1xf32>
    %612 = arith.mulf %610, %611 : vector<1x1xf32>
    %c0_194 = arith.constant 0 : index
    %c3 = arith.constant 3 : index
    %613 = vector.load %arg3[%c0_194, %c3] : memref<1x8xf32, #tpu.memory_space<vmem>>, vector<1x1xf32>
    tpu.vector_store %arg3[%c0_194, %c3], %612 {strides = array<i32>} : memref<1x8xf32, #tpu.memory_space<vmem>>, vector<1x1xf32>,
    %cst_195 = arith.constant dense<0.000000e+00> : vector<1xf32>
    %614 = vector.multi_reduction <add>, %587, %cst_195 [0] : vector<8x1xf32> to vector<1xf32>
    %615 = vector.shape_cast %614 : vector<1xf32> to vector<1x1xf32>
    %cst_196 = arith.constant 1.250000e-01 : f32
    %616 = vector.broadcast %cst_196 : f32 to vector<1x1xf32>
    %617 = arith.mulf %615, %616 : vector<1x1xf32>
    %c0_197 = arith.constant 0 : index
    %c4 = arith.constant 4 : index
    %618 = vector.load %arg3[%c0_197, %c4] : memref<1x8xf32, #tpu.memory_space<vmem>>, vector<1x1xf32>
    tpu.vector_store %arg3[%c0_197, %c4], %617 {strides = array<i32>} : memref<1x8xf32, #tpu.memory_space<vmem>>, vector<1x1xf32>,
    %cst_198 = arith.constant dense<0.000000e+00> : vector<1xf32>
    %619 = vector.multi_reduction <add>, %592, %cst_198 [0] : vector<8x1xf32> to vector<1xf32>
    %620 = vector.shape_cast %619 : vector<1xf32> to vector<1x1xf32>
    %cst_199 = arith.constant 1.250000e-01 : f32
    %621 = vector.broadcast %cst_199 : f32 to vector<1x1xf32>
    %622 = arith.mulf %620, %621 : vector<1x1xf32>
    %c0_200 = arith.constant 0 : index
    %c5 = arith.constant 5 : index
    %623 = vector.load %arg3[%c0_200, %c5] : memref<1x8xf32, #tpu.memory_space<vmem>>, vector<1x1xf32>
    tpu.vector_store %arg3[%c0_200, %c5], %622 {strides = array<i32>} : memref<1x8xf32, #tpu.memory_space<vmem>>, vector<1x1xf32>,
    %cst_201 = arith.constant dense<0.000000e+00> : vector<1xf32>
    %624 = vector.multi_reduction <add>, %593, %cst_201 [0] : vector<8x1xf32> to vector<1xf32>
    %625 = vector.shape_cast %624 : vector<1xf32> to vector<1x1xf32>
    %cst_202 = arith.constant 1.250000e-01 : f32
    %626 = vector.broadcast %cst_202 : f32 to vector<1x1xf32>
    %627 = arith.mulf %625, %626 : vector<1x1xf32>
    %c0_203 = arith.constant 0 : index
    %c6 = arith.constant 6 : index
    %628 = vector.load %arg3[%c0_203, %c6] : memref<1x8xf32, #tpu.memory_space<vmem>>, vector<1x1xf32>
    tpu.vector_store %arg3[%c0_203, %c6], %627 {strides = array<i32>} : memref<1x8xf32, #tpu.memory_space<vmem>>, vector<1x1xf32>,
    %cst_204 = arith.constant dense<0.000000e+00> : vector<1xf32>
    %629 = vector.multi_reduction <add>, %546, %cst_204 [0] : vector<8x1xf32> to vector<1xf32>
    %630 = vector.shape_cast %629 : vector<1xf32> to vector<1x1xf32>
    %cst_205 = arith.constant 1.250000e-01 : f32
    %631 = vector.broadcast %cst_205 : f32 to vector<1x1xf32>
    %632 = arith.mulf %630, %631 : vector<1x1xf32>
    %c0_206 = arith.constant 0 : index
    %c7 = arith.constant 7 : index
    %633 = vector.load %arg3[%c0_206, %c7] : memref<1x8xf32, #tpu.memory_space<vmem>>, vector<1x1xf32>
    tpu.vector_store %arg3[%c0_206, %c7], %632 {strides = array<i32>} : memref<1x8xf32, #tpu.memory_space<vmem>>, vector<1x1xf32>,
    return
  }
}

</mosaic_0001>

<llo_original>
// kernel: tpu_custom_call.1
$region0: #{tpu_custom_call.1}
  #allocation0 [shape = 'u32[]', space=smem, size = 0x4, offset = 0x4, fixed_abs, tag = 'smem constant byte address 0x4 - core index']
  #allocation1 [shape = 'u32[144,128]{1,0:T(1,128)}', space=vmem, size = 0x12000, scoped, tag = 'internal scratch']
  #allocation2 [shape = 'f32[8,96]{1,0:T(8,128)}', space=vmem, size = 0x1000, scoped, tag = 'scratch operand']
  %s0 = inlined_call_operand.hbm [shape: f32[8,16], index: 0, kind: input, shape index: {}]
  %s1 = inlined_call_operand.hbm [shape: f32[8,16], index: 1, kind: input, shape index: {}]
  %s2 = inlined_call_operand.hbm [shape: bf16[208,128], index: 2, kind: input, shape index: {}]
  %s3 = inlined_call_operand.hbm [shape: f32[1,8], index: 3, kind: output, shape index: {}]
  %s4 = sld [smem:[#allocation0]]
  $region34: #{tpu_custom_call.1} parent=0
    _
  %s6 = ssub.s32 1, %s4
  %s7 = scalar_select 0, %s6, %s4
  $region1: #{tpu_custom_call.1} parent=0
    #allocation3 [shape = 'u8[4096]{0}', space=vmem, size = 0x1000, scoped, tag = 'input window, operand 0, single buffered']
    #allocation4 [shape = 's32[1]{0}', space=sflag, size = 0x4, scoped, tag = 'scoped memory for tpu_custom_call.1']
    #allocation5 [shape = 's32[1]{0}', space=sflag, size = 0x4, scoped, tag = 'scoped memory for tpu_custom_call.1']
    #allocation6 [shape = 'u8[4096]{0}', space=vmem, size = 0x1000, scoped, tag = 'input window, operand 1, single buffered']
    #allocation7 [shape = 's32[1]{0}', space=sflag, size = 0x4, scoped, tag = 'scoped memory for tpu_custom_call.1']
    #allocation8 [shape = 'u8[53248]{0}', space=vmem, size = 0xd000, scoped, tag = 'input window, operand 2, single buffered']
    #allocation9 [shape = 'u8[512]{0}', space=vmem, size = 0x400, scoped, tag = 'output window, operand 0, single buffered']
    %8 = vsyncpa [#allocation4], 0
    %9 = vsyncpa [#allocation7], 0
    %10 = vsyncpa [#allocation5], 0
    // Predicated region
    $region2: #{tpu_custom_call.1} parent=1 // pred_check
      _
    $region3: #{tpu_custom_call.1} parent=1 // pred_check_branch
      %12 = sbr.rel (0) target = $region5
    $region4: #{tpu_custom_call.1} parent=1 // pred_region
      %s14 = ssub.s32 128, 128
      %15 = vsyncadd [#allocation4], %s14
      %s17 = sshll.u32 [#allocation3], 4
      %s18 = int_to_ptr.vmem [resolvable:$true] %s17
      %20 = dma.hbm_to_vmem [thread:$0]  %s0, 128, %s18, [#allocation4]
    $region5: #{tpu_custom_call.1} parent=1 // pred_fallthru
      _
    // Predicated region
    $region6: #{tpu_custom_call.1} parent=1 // pred_check
      _
    $region7: #{tpu_custom_call.1} parent=1 // pred_check_branch
      %22 = sbr.rel (0) target = $region9
    $region8: #{tpu_custom_call.1} parent=1 // pred_region
      %s24 = ssub.s32 128, 128
      %25 = vsyncadd [#allocation7], %s24
      %s27 = sshll.u32 [#allocation6], 4
      %s28 = int_to_ptr.vmem [resolvable:$true] %s27
      %30 = dma.hbm_to_vmem [thread:$0]  %s1, 128, %s28, [#allocation7]
    $region9: #{tpu_custom_call.1} parent=1 // pred_fallthru
      _
    // Predicated region
    $region10: #{tpu_custom_call.1} parent=1 // pred_check
      _
    $region11: #{tpu_custom_call.1} parent=1 // pred_check_branch
      %32 = sbr.rel (0) target = $region13
    $region12: #{tpu_custom_call.1} parent=1 // pred_region
      %s34 = ssub.s32 1664, 1664
      %35 = vsyncadd [#allocation7], %s34
      %s36 = sshll.u32 [#allocation8], 4
      %s37 = int_to_ptr.vmem [resolvable:$true] %s36
      %42 = dma.hbm_to_vmem [thread:$0]  %s2, 1664, %s37, [#allocation7], 64, 64, 4
    $region13: #{tpu_custom_call.1} parent=1 // pred_fallthru
      _
    // Predicated region
    $region14: #{tpu_custom_call.1} parent=1 // pred_check
      _
    $region15: #{tpu_custom_call.1} parent=1 // pred_check_branch
      %44 = sbr.rel (0) target = $region17
    $region16: #{tpu_custom_call.1} parent=1 // pred_region
      %45 = dma.done [#allocation4], 128
    $region17: #{tpu_custom_call.1} parent=1 // pred_fallthru
      _
    // Predicated region
    $region18: #{tpu_custom_call.1} parent=1 // pred_check
      _
    $region19: #{tpu_custom_call.1} parent=1 // pred_check_branch
      %47 = sbr.rel (0) target = $region21
    $region20: #{tpu_custom_call.1} parent=1 // pred_region
      %48 = dma.done [#allocation7], 128
    $region21: #{tpu_custom_call.1} parent=1 // pred_fallthru
      _
    // Predicated region
    $region22: #{tpu_custom_call.1} parent=1 // pred_check
      _
    $region23: #{tpu_custom_call.1} parent=1 // pred_check_branch
      %50 = sbr.rel (0) target = $region25
    $region24: #{tpu_custom_call.1} parent=1 // pred_region
      %51 = dma.done [#allocation7], 1664
    $region25: #{tpu_custom_call.1} parent=1 // pred_fallthru
      _
    %v53 = vld [vmem:[#allocation3] sm:$0xff]
    %v54 = vld [vmem:[#allocation6] sm:$0xff]
    %v55 = vld [vmem:[#allocation8] sm:$0xf]
    %v56 = vld [vmem:[#allocation8 + $0x4] sm:$0xf]
    %v57 = vld [vmem:[#allocation8 + $0x8] sm:$0xf]
    %v58 = vld [vmem:[#allocation8 + $0xc] sm:$0xf]
    %v59 = vld [vmem:[#allocation8 + $0x10] sm:$0xf]
    %v60 = vld [vmem:[#allocation8 + $0x14] sm:$0xf]
    %v61 = vld [vmem:[#allocation8 + $0x18] sm:$0xf]
    %v62 = vld [vmem:[#allocation8 + $0x1c] sm:$0xf]
    %v63 = vld [vmem:[#allocation8 + $0x20] sm:$0xf]
    %v64 = vld [vmem:[#allocation8 + $0x24] sm:$0xf]
    %v65 = vld [vmem:[#allocation8 + $0x28] sm:$0xf]
    %v66 = vld [vmem:[#allocation8 + $0x2c] sm:$0xf]
    %v67 = vld [vmem:[#allocation8 + $0x30] sm:$0xf]
    %v68 = vld [vmem:[#allocation8 + $0x34] sm:$0xf]
    %v69 = vld [vmem:[#allocation8 + $0x38] sm:$0xf]
    %v70 = vld [vmem:[#allocation8 + $0x3c] sm:$0xf]
    %v71 = vld [vmem:[#allocation8 + $0x40] sm:$0xf]
    %v72 = vld [vmem:[#allocation8 + $0x44] sm:$0xf]
    %v73 = vld [vmem:[#allocation8 + $0x48] sm:$0xf]
    %v74 = vld [vmem:[#allocation8 + $0x4c] sm:$0xf]
    %v75 = vld [vmem:[#allocation8 + $0x50] sm:$0xf]
    %v76 = vld [vmem:[#allocation8 + $0x54] sm:$0xf]
    %v77 = vld [vmem:[#allocation8 + $0x58] sm:$0xf]
    %v78 = vld [vmem:[#allocation8 + $0x5c] sm:$0xf]
    %v79 = vld [vmem:[#allocation8 + $0x60] sm:$0x1]
    %v80 = vunpack.c.l.bf16 %v79
    %v81 = vpack.c.bf16 %v53, %v53
    %v82 = vlaneseq
    %v83 = vshrl.u32 %v82, 7
    %v84 = vsub.s32 0, %v83
    %v85 = vrot.slane %v80, %v84
    %v88 = vunpack.c.l.b16 %v73
    %v89 = vunpack.c.l.b16 %v74
    %v90 = vpack.c.b16 %v89, %v88
    %vm92 = vcmask 130048
    %v94 = vsel %vm92, %v81, 0
    %96 = vmatprep.subr.bf16.mxu0 0
    %97 = vmatpush1.bf16.msra.mxu0 %v90
    %98 = vmatprep.subr.bf16.mxu0 0
    %99 = vmatpush1.bf16.msra.mxu0 0
    %100 = vmatprep.subr.bf16.mxu0 0
    %101 = vmatpush1.bf16.msra.mxu0 0
    %102 = vmatprep.subr.bf16.mxu0 0
    %103 = vmatpush1.bf16.msra.mxu0 0
    %104 = vmatprep.subr.bf16.mxu0 0
    %105 = vmatpush1.bf16.msra.mxu0 0
    %106 = vmatprep.subr.bf16.mxu0 0
    %107 = vmatpush1.bf16.msra.mxu0 0
    %108 = vmatprep.subr.bf16.mxu0 0
    %109 = vmatpush1.bf16.msra.mxu0 0
    %110 = vmatprep.subr.bf16.mxu0 0
    %111 = vmatpush1.bf16.msra.mxu0 0
    %112 = vmatprep.subr.bf16.mxu0 0
    %113 = vmatpush1.bf16.msra.mxu0 0
    %114 = vmatprep.subr.bf16.mxu0 0
    %115 = vmatpush1.bf16.msra.mxu0 0
    %116 = vmatprep.subr.bf16.mxu0 0
    %117 = vmatpush1.bf16.msra.mxu0 0
    %118 = vmatprep.subr.bf16.mxu0 0
    %119 = vmatpush1.bf16.msra.mxu0 0
    %120 = vmatprep.subr.bf16.mxu0 0
    %121 = vmatpush1.bf16.msra.mxu0 0
    %122 = vmatprep.subr.bf16.mxu0 0
    %123 = vmatpush1.bf16.msra.mxu0 0
    %124 = vmatprep.subr.bf16.mxu0 0
    %125 = vmatpush1.bf16.msra.mxu0 0
    %126 = vmatprep.subr.bf16.mxu0 0
    %127 = vmatpush1.bf16.msra.mxu0 0
    %128 = vmatprep.mubr.bf16.mxu0 0
    %129 = vmatmul.mubr.bf16.gmra.mrb[0].mxu0 %v94
    %v130 = vpop.f32.mrb[0].mxu0
    %v131 = vadd.f32 %v85, %v130
    %v132 = vpop.f32.mrb[0].mxu0
    %v133 = vpop.f32.mrb[0].mxu0
    %v134 = vpop.f32.mrb[0].mxu0
    %135 = vdwg.mxu0
    %v136 = vtanh.pop %v131
    %v137 = vlaneseq
    %v138 = vand.u32 %v137, 127
    %v139 = vpack.c.bf16 %v136, %v136
    %v144 = vunpack.c.l.b16 %v55
    %v145 = vunpack.c.l.b16 %v56
    %v146 = vunpack.c.l.b16 %v57
    %v147 = vunpack.c.l.b16 %v58
    %v148 = vpack.c.b16 %v145, %v144
    %v149 = vpack.c.b16 %v147, %v146
    %vm152 = vcmask 261120
    %v154 = vsel %vm152, %v139, 0
    %156 = vmatprep.subr.bf16.mxu0 0
    %157 = vmatpush1.bf16.msra.mxu0 %v148
    %158 = vmatprep.subr.bf16.mxu0 0
    %159 = vmatpush1.bf16.msra.mxu0 %v149
    %160 = vmatprep.subr.bf16.mxu0 0
    %161 = vmatpush1.bf16.msra.mxu0 0
    %162 = vmatprep.subr.bf16.mxu0 0
    %163 = vmatpush1.bf16.msra.mxu0 0
    %164 = vmatprep.subr.bf16.mxu0 0
    %165 = vmatpush1.bf16.msra.mxu0 0
    %166 = vmatprep.subr.bf16.mxu0 0
    %167 = vmatpush1.bf16.msra.mxu0 0
    %168 = vmatprep.subr.bf16.mxu0 0
    %169 = vmatpush1.bf16.msra.mxu0 0
    %170 = vmatprep.subr.bf16.mxu0 0
    %171 = vmatpush1.bf16.msra.mxu0 0
    %172 = vmatprep.subr.bf16.mxu0 0
    %173 = vmatpush1.bf16.msra.mxu0 0
    %174 = vmatprep.subr.bf16.mxu0 0
    %175 = vmatpush1.bf16.msra.mxu0 0
    %176 = vmatprep.subr.bf16.mxu0 0
    %177 = vmatpush1.bf16.msra.mxu0 0
    %178 = vmatprep.subr.bf16.mxu0 0
    %179 = vmatpush1.bf16.msra.mxu0 0
    %180 = vmatprep.subr.bf16.mxu0 0
    %181 = vmatpush1.bf16.msra.mxu0 0
    %182 = vmatprep.subr.bf16.mxu0 0
    %183 = vmatpush1.bf16.msra.mxu0 0
    %184 = vmatprep.subr.bf16.mxu0 0
    %185 = vmatpush1.bf16.msra.mxu0 0
    %186 = vmatprep.subr.bf16.mxu0 0
    %187 = vmatpush1.bf16.msra.mxu0 0
    %188 = vmatprep.mubr.bf16.mxu0 0
    %189 = vmatmul.mubr.bf16.gmra.mrb[0].mxu0 %v154
    %v190 = vpop.f32.mrb[0].mxu0
    %v191 = vadd.f32 0.0, %v190
    %v192 = vpop.f32.mrb[0].mxu0
    %v193 = vpop.f32.mrb[0].mxu0
    %v194 = vpop.f32.mrb[0].mxu0
    %195 = vdwg.mxu0
    %197 = vrot.lane.b32.xlu0 %v85, 96
    %v198 = vpop.permute.xlu0 %197
    %v200 = vadd.f32 %v191, %v198
    %v201 = vsel %vm92, %v200, -inf
    %202 = vmax.xlane.f32.xlu0 %v201
    %v203 = vpop.xlane.xlu0 %202
    %v204 = vsub.f32 %v200, %v203
    %v205 = vmul.f32 %v204, 1.442695
    %v206 = vpow.pop %v205
    %v207 = vsel %vm92, %v206, 0.0
    %208 = vadd.xlane.f32.xlu0 %v207
    %v209 = vpop.xlane.xlu0 %208
    %v210 = vlog2.pop %v209
    %v211 = vmul.f32 %v210, 0.6931472
    %v212 = vsub.f32 0.0, %v211
    %v213 = vmul.f32 %v206, %v204
    %v214 = vsel %vm92, %v213, 0.0
    %215 = vadd.xlane.f32.xlu0 %v214
    %v216 = vpop.xlane.xlu0 %215
    %v217 = vrcp.pop %v209
    %v218 = vmul.f32 %v216, %v217
    %v219 = vsub.f32 %v211, %v218
    %vm220 = vcmp.eq.f32.partialorder %v200, %v203
    %v221 = vsel %vm220, %v138, 16
    %v222 = vsel %vm92, %v221, 2147483647
    %v223 = vand.u32 %v222, 65535
    %v224 = vshra.s32 %v222, 16
    %v225 = vcvt.s32.f32 %v223
    %v226 = vcvt.s32.f32 %v224
    %227 = vmin.xlane.f32.xlu0 %v226
    %v228 = vpop.xlane.xlu0 %227
    %vm229 = vcmp.eq.f32.partialorder %v226, %v228
    %v230 = vsel %vm229, %v225, inf
    %231 = vmin.xlane.f32.xlu0 %v230
    %v232 = vpop.xlane.xlu0 %231
    %v233 = vcvt.f32.s32 %v232
    %v234 = vcvt.f32.s32 %v228
    %v235 = vshll.u32 %v234, 16
    %v236 = vadd.s32 %v235, %v233
    %vm237 = vcmp.eq.s32.totalorder %v138, %v236
    %v238 = vadd.f32 %v219, 0.0
    %v239 = vadd.f32 %v212, 0.0
    %v240 = vsel %vm237, 1, 0
    %v241 = vcvt.s32.f32 %v240
    %v242 = vpack.c.bf16 %v241, %v241
    %v245 = vunpack.c.l.b16 %v59
    %v246 = vunpack.c.l.b16 %v60
    %v247 = vpack.c.b16 %v246, %v245
    %v250 = vsel %vm92, %v242, 0
    %252 = vmatprep.subr.bf16.mxu0 0
    %253 = vmatpush1.bf16.msra.mxu0 %v247
    %254 = vmatprep.subr.bf16.mxu0 0
    %255 = vmatpush1.bf16.msra.mxu0 0
    %256 = vmatprep.subr.bf16.mxu0 0
    %257 = vmatpush1.bf16.msra.mxu0 0
    %258 = vmatprep.subr.bf16.mxu0 0
    %259 = vmatpush1.bf16.msra.mxu0 0
    %260 = vmatprep.subr.bf16.mxu0 0
    %261 = vmatpush1.bf16.msra.mxu0 0
    %262 = vmatprep.subr.bf16.mxu0 0
    %263 = vmatpush1.bf16.msra.mxu0 0
    %264 = vmatprep.subr.bf16.mxu0 0
    %265 = vmatpush1.bf16.msra.mxu0 0
    %266 = vmatprep.subr.bf16.mxu0 0
    %267 = vmatpush1.bf16.msra.mxu0 0
    %268 = vmatprep.subr.bf16.mxu0 0
    %269 = vmatpush1.bf16.msra.mxu0 0
    %270 = vmatprep.subr.bf16.mxu0 0
    %271 = vmatpush1.bf16.msra.mxu0 0
    %272 = vmatprep.subr.bf16.mxu0 0
    %273 = vmatpush1.bf16.msra.mxu0 0
    %274 = vmatprep.subr.bf16.mxu0 0
    %275 = vmatpush1.bf16.msra.mxu0 0
    %276 = vmatprep.subr.bf16.mxu0 0
    %277 = vmatpush1.bf16.msra.mxu0 0
    %278 = vmatprep.subr.bf16.mxu0 0
    %279 = vmatpush1.bf16.msra.mxu0 0
    %280 = vmatprep.subr.bf16.mxu0 0
    %281 = vmatpush1.bf16.msra.mxu0 0
    %282 = vmatprep.subr.bf16.mxu0 0
    %283 = vmatpush1.bf16.msra.mxu0 0
    %284 = vmatprep.mubr.bf16.mxu0 0
    %285 = vmatmul.mubr.bf16.gmra.mrb[0].mxu0 %v250
    %v286 = vpop.f32.mrb[0].mxu0
    %v287 = vadd.f32 0.0, %v286
    %v288 = vpop.f32.mrb[0].mxu0
    %v289 = vpop.f32.mrb[0].mxu0
    %v290 = vpop.f32.mrb[0].mxu0
    %291 = vdwg.mxu0
    %vm292 = vcmask 523264
    %293 = vst.msk [vmem:[#allocation2] sm:$0xff] %vm292, %v287
    %vm294 = vcmask 785920
    %295 = vst.msk [vmem:[#allocation2] sm:$0xff] %vm294, 0.0
    %v296 = vld [vmem:[#allocation2] sm:$0xff]
    %v297 = vpack.c.bf16 %v296, %v296
    %v310 = vunpack.c.l.b16 %v61
    %v311 = vunpack.c.l.b16 %v62
    %v312 = vunpack.c.l.b16 %v63
    %v313 = vunpack.c.l.b16 %v64
    %v314 = vunpack.c.l.b16 %v65
    %v315 = vunpack.c.l.b16 %v66
    %v316 = vunpack.c.l.b16 %v67
    %v317 = vunpack.c.l.b16 %v68
    %v318 = vunpack.c.l.b16 %v69
    %v319 = vunpack.c.l.b16 %v70
    %v320 = vunpack.c.l.b16 %v71
    %v321 = vunpack.c.l.b16 %v72
    %v322 = vpack.c.b16 %v311, %v310
    %v323 = vpack.c.b16 %v313, %v312
    %v324 = vpack.c.b16 %v315, %v314
    %v325 = vpack.c.b16 %v317, %v316
    %v326 = vpack.c.b16 %v319, %v318
    %v327 = vpack.c.b16 %v321, %v320
    %334 = vrot.lane.b32.xlu0 %v85, 80
    %v335 = vpop.permute.xlu0 %334
    %vm337 = vcmask 785408
    %v339 = vsel %vm337, %v297, 0
    %341 = vmatprep.subr.bf16.mxu0 0
    %342 = vmatpush1.bf16.msra.mxu0 %v322
    %343 = vmatprep.subr.bf16.mxu0 0
    %344 = vmatpush1.bf16.msra.mxu0 %v323
    %345 = vmatprep.subr.bf16.mxu0 0
    %346 = vmatpush1.bf16.msra.mxu0 %v324
    %347 = vmatprep.subr.bf16.mxu0 0
    %348 = vmatpush1.bf16.msra.mxu0 %v325
    %349 = vmatprep.subr.bf16.mxu0 0
    %350 = vmatpush1.bf16.msra.mxu0 %v326
    %351 = vmatprep.subr.bf16.mxu0 0
    %352 = vmatpush1.bf16.msra.mxu0 %v327
    %353 = vmatprep.subr.bf16.mxu0 0
    %354 = vmatpush1.bf16.msra.mxu0 0
    %355 = vmatprep.subr.bf16.mxu0 0
    %356 = vmatpush1.bf16.msra.mxu0 0
    %357 = vmatprep.subr.bf16.mxu0 0
    %358 = vmatpush1.bf16.msra.mxu0 0
    %359 = vmatprep.subr.bf16.mxu0 0
    %360 = vmatpush1.bf16.msra.mxu0 0
    %361 = vmatprep.subr.bf16.mxu0 0
    %362 = vmatpush1.bf16.msra.mxu0 0
    %363 = vmatprep.subr.bf16.mxu0 0
    %364 = vmatpush1.bf16.msra.mxu0 0
    %365 = vmatprep.subr.bf16.mxu0 0
    %366 = vmatpush1.bf16.msra.mxu0 0
    %367 = vmatprep.subr.bf16.mxu0 0
    %368 = vmatpush1.bf16.msra.mxu0 0
    %369 = vmatprep.subr.bf16.mxu0 0
    %370 = vmatpush1.bf16.msra.mxu0 0
    %371 = vmatprep.subr.bf16.mxu0 0
    %372 = vmatpush1.bf16.msra.mxu0 0
    %373 = vmatprep.mubr.bf16.mxu0 0
    %374 = vmatmul.mubr.bf16.gmra.mrb[0].mxu0 %v339
    %v375 = vpop.f32.mrb[0].mxu0
    %v376 = vadd.f32 %v335, %v375
    %v377 = vpop.f32.mrb[0].mxu0
    %v378 = vpop.f32.mrb[0].mxu0
    %v379 = vpop.f32.mrb[0].mxu0
    %380 = vdwg.mxu0
    %v381 = vtanh.pop %v376
    %vm382 = vcmp.eq.s32.totalorder %v236, 0
    %v383 = vsel %vm382, 1, 0
    %v384 = vcvt.s32.f32 %v383
    %v385 = vmul.f32 %v384, %v381
    %v386 = vadd.f32 %v385, 0.0
    %v387 = vmax.f32 %v384, 0.0
    %389 = vrot.lane.b32.xlu0 %v191, 112
    %v390 = vpop.permute.xlu0 %389
    %v392 = vadd.f32 %v376, %v390
    %v393 = vtanh.pop %v392
    %v394 = vpack.c.bf16 %v393, %v393
    %v396 = vsel %vm152, %v394, 0
    %398 = vmatprep.subr.bf16.mxu0 0
    %399 = vmatpush1.bf16.msra.mxu0 %v148
    %400 = vmatprep.subr.bf16.mxu0 0
    %401 = vmatpush1.bf16.msra.mxu0 %v149
    %402 = vmatprep.subr.bf16.mxu0 0
    %403 = vmatpush1.bf16.msra.mxu0 0
    %404 = vmatprep.subr.bf16.mxu0 0
    %405 = vmatpush1.bf16.msra.mxu0 0
    %406 = vmatprep.subr.bf16.mxu0 0
    %407 = vmatpush1.bf16.msra.mxu0 0
    %408 = vmatprep.subr.bf16.mxu0 0
    %409 = vmatpush1.bf16.msra.mxu0 0
    %410 = vmatprep.subr.bf16.mxu0 0
    %411 = vmatpush1.bf16.msra.mxu0 0
    %412 = vmatprep.subr.bf16.mxu0 0
    %413 = vmatpush1.bf16.msra.mxu0 0
    %414 = vmatprep.subr.bf16.mxu0 0
    %415 = vmatpush1.bf16.msra.mxu0 0
    %416 = vmatprep.subr.bf16.mxu0 0
    %417 = vmatpush1.bf16.msra.mxu0 0
    %418 = vmatprep.subr.bf16.mxu0 0
    %419 = vmatpush1.bf16.msra.mxu0 0
    %420 = vmatprep.subr.bf16.mxu0 0
    %421 = vmatpush1.bf16.msra.mxu0 0
    %422 = vmatprep.subr.bf16.mxu0 0
    %423 = vmatpush1.bf16.msra.mxu0 0
    %424 = vmatprep.subr.bf16.mxu0 0
    %425 = vmatpush1.bf16.msra.mxu0 0
    %426 = vmatprep.subr.bf16.mxu0 0
    %427 = vmatpush1.bf16.msra.mxu0 0
    %428 = vmatprep.subr.bf16.mxu0 0
    %429 = vmatpush1.bf16.msra.mxu0 0
    %430 = vmatprep.mubr.bf16.mxu0 0
    %431 = vmatmul.mubr.bf16.gmra.mrb[0].mxu0 %v396
    %v432 = vpop.f32.mrb[0].mxu0
    %v433 = vadd.f32 0.0, %v432
    %v434 = vpop.f32.mrb[0].mxu0
    %v435 = vpop.f32.mrb[0].mxu0
    %v436 = vpop.f32.mrb[0].mxu0
    %437 = vdwg.mxu0
    %v438 = vadd.f32 %v433, %v198
    %v439 = vsel %vm92, %v438, -inf
    %440 = vmax.xlane.f32.xlu0 %v439
    %v441 = vpop.xlane.xlu0 %440
    %v442 = vsub.f32 %v438, %v441
    %v443 = vmul.f32 %v442, 1.442695
    %v444 = vpow.pop %v443
    %v445 = vsel %vm92, %v444, 0.0
    %446 = vadd.xlane.f32.xlu0 %v445
    %v447 = vpop.xlane.xlu0 %446
    %v448 = vlog2.pop %v447
    %v449 = vmul.f32 %v448, 0.6931472
    %v450 = vsub.f32 0.0, %v449
    %v451 = vmul.f32 %v444, %v442
    %v452 = vsel %vm92, %v451, 0.0
    %453 = vadd.xlane.f32.xlu0 %v452
    %v454 = vpop.xlane.xlu0 %453
    %v455 = vrcp.pop %v447
    %v456 = vmul.f32 %v454, %v455
    %v457 = vsub.f32 %v449, %v456
    %vm458 = vcmp.eq.f32.partialorder %v438, %v441
    %v459 = vsel %vm458, %v138, 16
    %v460 = vsel %vm92, %v459, 2147483647
    %v461 = vand.u32 %v460, 65535
    %v462 = vshra.s32 %v460, 16
    %v463 = vcvt.s32.f32 %v461
    %v464 = vcvt.s32.f32 %v462
    %465 = vmin.xlane.f32.xlu0 %v464
    %v466 = vpop.xlane.xlu0 %465
    %vm467 = vcmp.eq.f32.partialorder %v464, %v466
    %v468 = vsel %vm467, %v463, inf
    %469 = vmin.xlane.f32.xlu0 %v468
    %v470 = vpop.xlane.xlu0 %469
    %v471 = vcvt.f32.s32 %v470
    %v472 = vcvt.f32.s32 %v466
    %v473 = vshll.u32 %v472, 16
    %v474 = vadd.s32 %v473, %v471
    %vm475 = vcmp.eq.s32.totalorder %v138, %v474
    %v476 = vsub.f32 1.0, %v387
    %v477 = vmul.f32 %v457, %v476
    %v478 = vadd.f32 %v238, %v477
    %v479 = vmul.f32 %v450, %v476
    %v480 = vadd.f32 %v239, %v479
    %v481 = vadd.f32 %v476, 1.0
    %v482 = vadd.f32 %v238, %v457
    %v483 = vsel %vm475, 1, 0
    %v484 = vcvt.s32.f32 %v483
    %v485 = vpack.c.bf16 %v484, %v484
    %v487 = vsel %vm92, %v485, 0
    %489 = vmatprep.subr.bf16.mxu0 0
    %490 = vmatpush1.bf16.msra.mxu0 %v247
    %491 = vmatprep.subr.bf16.mxu0 0
    %492 = vmatpush1.bf16.msra.mxu0 0
    %493 = vmatprep.subr.bf16.mxu0 0
    %494 = vmatpush1.bf16.msra.mxu0 0
    %495 = vmatprep.subr.bf16.mxu0 0
    %496 = vmatpush1.bf16.msra.mxu0 0
    %497 = vmatprep.subr.bf16.mxu0 0
    %498 = vmatpush1.bf16.msra.mxu0 0
    %499 = vmatprep.subr.bf16.mxu0 0
    %500 = vmatpush1.bf16.msra.mxu0 0
    %501 = vmatprep.subr.bf16.mxu0 0
    %502 = vmatpush1.bf16.msra.mxu0 0
    %503 = vmatprep.subr.bf16.mxu0 0
    %504 = vmatpush1.bf16.msra.mxu0 0
    %505 = vmatprep.subr.bf16.mxu0 0
    %506 = vmatpush1.bf16.msra.mxu0 0
    %507 = vmatprep.subr.bf16.mxu0 0
    %508 = vmatpush1.bf16.msra.mxu0 0
    %509 = vmatprep.subr.bf16.mxu0 0
    %510 = vmatpush1.bf16.msra.mxu0 0
    %511 = vmatprep.subr.bf16.mxu0 0
    %512 = vmatpush1.bf16.msra.mxu0 0
    %513 = vmatprep.subr.bf16.mxu0 0
    %514 = vmatpush1.bf16.msra.mxu0 0
    %515 = vmatprep.subr.bf16.mxu0 0
    %516 = vmatpush1.bf16.msra.mxu0 0
    %517 = vmatprep.subr.bf16.mxu0 0
    %518 = vmatpush1.bf16.msra.mxu0 0
    %519 = vmatprep.subr.bf16.mxu0 0
    %520 = vmatpush1.bf16.msra.mxu0 0
    %521 = vmatprep.mubr.bf16.mxu0 0
    %522 = vmatmul.mubr.bf16.gmra.mrb[0].mxu0 %v487
    %v523 = vpop.f32.mrb[0].mxu0
    %v524 = vadd.f32 0.0, %v523
    %v525 = vpop.f32.mrb[0].mxu0
    %v526 = vpop.f32.mrb[0].mxu0
    %v527 = vpop.f32.mrb[0].mxu0
    %528 = vdwg.mxu0
    %529 = vst.msk [vmem:[#allocation2] sm:$0xff] %vm292, %v524
    %531 = vrot.lane.b32.xlu0 %v381, 32
    %v532 = vpop.permute.xlu0 %531
    %534 = vst.msk [vmem:[#allocation2] sm:$0xff] %vm294, %v532
    %v535 = vld [vmem:[#allocation2] sm:$0xff]
    %v536 = vpack.c.bf16 %v535, %v535
    %v538 = vsel %vm337, %v536, 0
    %540 = vmatprep.subr.bf16.mxu0 0
    %541 = vmatpush1.bf16.msra.mxu0 %v322
    %542 = vmatprep.subr.bf16.mxu0 0
    %543 = vmatpush1.bf16.msra.mxu0 %v323
    %544 = vmatprep.subr.bf16.mxu0 0
    %545 = vmatpush1.bf16.msra.mxu0 %v324
    %546 = vmatprep.subr.bf16.mxu0 0
    %547 = vmatpush1.bf16.msra.mxu0 %v325
    %548 = vmatprep.subr.bf16.mxu0 0
    %549 = vmatpush1.bf16.msra.mxu0 %v326
    %550 = vmatprep.subr.bf16.mxu0 0
    %551 = vmatpush1.bf16.msra.mxu0 %v327
    %552 = vmatprep.subr.bf16.mxu0 0
    %553 = vmatpush1.bf16.msra.mxu0 0
    %554 = vmatprep.subr.bf16.mxu0 0
    %555 = vmatpush1.bf16.msra.mxu0 0
    %556 = vmatprep.subr.bf16.mxu0 0
    %557 = vmatpush1.bf16.msra.mxu0 0
    %558 = vmatprep.subr.bf16.mxu0 0
    %559 = vmatpush1.bf16.msra.mxu0 0
    %560 = vmatprep.subr.bf16.mxu0 0
    %561 = vmatpush1.bf16.msra.mxu0 0
    %562 = vmatprep.subr.bf16.mxu0 0
    %563 = vmatpush1.bf16.msra.mxu0 0
    %564 = vmatprep.subr.bf16.mxu0 0
    %565 = vmatpush1.bf16.msra.mxu0 0
    %566 = vmatprep.subr.bf16.mxu0 0
    %567 = vmatpush1.bf16.msra.mxu0 0
    %568 = vmatprep.subr.bf16.mxu0 0
    %569 = vmatpush1.bf16.msra.mxu0 0
    %570 = vmatprep.subr.bf16.mxu0 0
    %571 = vmatpush1.bf16.msra.mxu0 0
    %572 = vmatprep.mubr.bf16.mxu0 0
    %573 = vmatmul.mubr.bf16.gmra.mrb[0].mxu0 %v538
    %v574 = vpop.f32.mrb[0].mxu0
    %v575 = vadd.f32 %v335, %v574
    %v576 = vpop.f32.mrb[0].mxu0
    %v577 = vpop.f32.mrb[0].mxu0
    %v578 = vpop.f32.mrb[0].mxu0
    %579 = vdwg.mxu0
    %v580 = vtanh.pop %v575
    %vm581 = vcmp.eq.s32.totalorder %v474, 0
    %v582 = vsel %vm581, 1, 0
    %v583 = vcvt.s32.f32 %v582
    %v584 = vmul.f32 %v476, %v583
    %v585 = vsub.f32 %v580, %v386
    %v586 = vmul.f32 %v584, %v585
    %v587 = vadd.f32 %v386, %v586
    %v588 = vmax.f32 %v387, %v583
    %590 = vrot.lane.b32.xlu0 %v433, 112
    %v591 = vpop.permute.xlu0 %590
    %v593 = vadd.f32 %v575, %v591
    %v594 = vtanh.pop %v593
    %v595 = vpack.c.bf16 %v594, %v594
    %v597 = vsel %vm152, %v595, 0
    %599 = vmatprep.subr.bf16.mxu0 0
    %600 = vmatpush1.bf16.msra.mxu0 %v148
    %601 = vmatprep.subr.bf16.mxu0 0
    %602 = vmatpush1.bf16.msra.mxu0 %v149
    %603 = vmatprep.subr.bf16.mxu0 0
    %604 = vmatpush1.bf16.msra.mxu0 0
    %605 = vmatprep.subr.bf16.mxu0 0
    %606 = vmatpush1.bf16.msra.mxu0 0
    %607 = vmatprep.subr.bf16.mxu0 0
    %608 = vmatpush1.bf16.msra.mxu0 0
    %609 = vmatprep.subr.bf16.mxu0 0
    %610 = vmatpush1.bf16.msra.mxu0 0
    %611 = vmatprep.subr.bf16.mxu0 0
    %612 = vmatpush1.bf16.msra.mxu0 0
    %613 = vmatprep.subr.bf16.mxu0 0
    %614 = vmatpush1.bf16.msra.mxu0 0
    %615 = vmatprep.subr.bf16.mxu0 0
    %616 = vmatpush1.bf16.msra.mxu0 0
    %617 = vmatprep.subr.bf16.mxu0 0
    %618 = vmatpush1.bf16.msra.mxu0 0
    %619 = vmatprep.subr.bf16.mxu0 0
    %620 = vmatpush1.bf16.msra.mxu0 0
    %621 = vmatprep.subr.bf16.mxu0 0
    %622 = vmatpush1.bf16.msra.mxu0 0
    %623 = vmatprep.subr.bf16.mxu0 0
    %624 = vmatpush1.bf16.msra.mxu0 0
    %625 = vmatprep.subr.bf16.mxu0 0
    %626 = vmatpush1.bf16.msra.mxu0 0
    %627 = vmatprep.subr.bf16.mxu0 0
    %628 = vmatpush1.bf16.msra.mxu0 0
    %629 = vmatprep.subr.bf16.mxu0 0
    %630 = vmatpush1.bf16.msra.mxu0 0
    %631 = vmatprep.mubr.bf16.mxu0 0
    %632 = vmatmul.mubr.bf16.gmra.mrb[0].mxu0 %v597
    %v633 = vpop.f32.mrb[0].mxu0
    %v634 = vadd.f32 0.0, %v633
    %v635 = vpop.f32.mrb[0].mxu0
    %v636 = vpop.f32.mrb[0].mxu0
    %v637 = vpop.f32.mrb[0].mxu0
    %638 = vdwg.mxu0
    %v639 = vadd.f32 %v634, %v198
    %v640 = vsel %vm92, %v639, -inf
    %641 = vmax.xlane.f32.xlu0 %v640
    %v642 = vpop.xlane.xlu0 %641
    %v643 = vsub.f32 %v639, %v642
    %v644 = vmul.f32 %v643, 1.442695
    %v645 = vpow.pop %v644
    %v646 = vsel %vm92, %v645, 0.0
    %647 = vadd.xlane.f32.xlu0 %v646
    %v648 = vpop.xlane.xlu0 %647
    %v649 = vlog2.pop %v648
    %v650 = vmul.f32 %v649, 0.6931472
    %v651 = vsub.f32 0.0, %v650
    %v652 = vmul.f32 %v645, %v643
    %v653 = vsel %vm92, %v652, 0.0
    %654 = vadd.xlane.f32.xlu0 %v653
    %v655 = vpop.xlane.xlu0 %654
    %v656 = vrcp.pop %v648
    %v657 = vmul.f32 %v655, %v656
    %v658 = vsub.f32 %v650, %v657
    %vm659 = vcmp.eq.f32.partialorder %v639, %v642
    %v660 = vsel %vm659, %v138, 16
    %v661 = vsel %vm92, %v660, 2147483647
    %v662 = vand.u32 %v661, 65535
    %v663 = vshra.s32 %v661, 16
    %v664 = vcvt.s32.f32 %v662
    %v665 = vcvt.s32.f32 %v663
    %666 = vmin.xlane.f32.xlu0 %v665
    %v667 = vpop.xlane.xlu0 %666
    %vm668 = vcmp.eq.f32.partialorder %v665, %v667
    %v669 = vsel %vm668, %v664, inf
    %670 = vmin.xlane.f32.xlu0 %v669
    %v671 = vpop.xlane.xlu0 %670
    %v672 = vcvt.f32.s32 %v671
    %v673 = vcvt.f32.s32 %v667
    %v674 = vshll.u32 %v673, 16
    %v675 = vadd.s32 %v674, %v672
    %vm676 = vcmp.eq.s32.totalorder %v138, %v675
    %v677 = vsub.f32 1.0, %v588
    %v678 = vmul.f32 %v658, %v677
    %v679 = vadd.f32 %v478, %v678
    %v680 = vmul.f32 %v651, %v677
    %v681 = vadd.f32 %v480, %v680
    %v682 = vadd.f32 %v481, %v677
    %v683 = vadd.f32 %v482, %v658
    %v684 = vsel %vm676, 1, 0
    %v685 = vcvt.s32.f32 %v684
    %v686 = vpack.c.bf16 %v685, %v685
    %v688 = vsel %vm92, %v686, 0
    %690 = vmatprep.subr.bf16.mxu0 0
    %691 = vmatpush1.bf16.msra.mxu0 %v247
    %692 = vmatprep.subr.bf16.mxu0 0
    %693 = vmatpush1.bf16.msra.mxu0 0
    %694 = vmatprep.subr.bf16.mxu0 0
    %695 = vmatpush1.bf16.msra.mxu0 0
    %696 = vmatprep.subr.bf16.mxu0 0
    %697 = vmatpush1.bf16.msra.mxu0 0
    %698 = vmatprep.subr.bf16.mxu0 0
    %699 = vmatpush1.bf16.msra.mxu0 0
    %700 = vmatprep.subr.bf16.mxu0 0
    %701 = vmatpush1.bf16.msra.mxu0 0
    %702 = vmatprep.subr.bf16.mxu0 0
    %703 = vmatpush1.bf16.msra.mxu0 0
    %704 = vmatprep.subr.bf16.mxu0 0
    %705 = vmatpush1.bf16.msra.mxu0 0
    %706 = vmatprep.subr.bf16.mxu0 0
    %707 = vmatpush1.bf16.msra.mxu0 0
    %708 = vmatprep.subr.bf16.mxu0 0
    %709 = vmatpush1.bf16.msra.mxu0 0
    %710 = vmatprep.subr.bf16.mxu0 0
    %711 = vmatpush1.bf16.msra.mxu0 0
    %712 = vmatprep.subr.bf16.mxu0 0
    %713 = vmatpush1.bf16.msra.mxu0 0
    %714 = vmatprep.subr.bf16.mxu0 0
    %715 = vmatpush1.bf16.msra.mxu0 0
    %716 = vmatprep.subr.bf16.mxu0 0
    %717 = vmatpush1.bf16.msra.mxu0 0
    %718 = vmatprep.subr.bf16.mxu0 0
    %719 = vmatpush1.bf16.msra.mxu0 0
    %720 = vmatprep.subr.bf16.mxu0 0
    %721 = vmatpush1.bf16.msra.mxu0 0
    %722 = vmatprep.mubr.bf16.mxu0 0
    %723 = vmatmul.mubr.bf16.gmra.mrb[0].mxu0 %v688
    %v724 = vpop.f32.mrb[0].mxu0
    %v725 = vadd.f32 0.0, %v724
    %v726 = vpop.f32.mrb[0].mxu0
    %v727 = vpop.f32.mrb[0].mxu0
    %v728 = vpop.f32.mrb[0].mxu0
    %729 = vdwg.mxu0
    %730 = vst.msk [vmem:[#allocation2] sm:$0xff] %vm292, %v725
    %732 = vrot.lane.b32.xlu0 %v580, 32
    %v733 = vpop.permute.xlu0 %732
    %735 = vst.msk [vmem:[#allocation2] sm:$0xff] %vm294, %v733
    %v736 = vld [vmem:[#allocation2] sm:$0xff]
    %v737 = vpack.c.bf16 %v736, %v736
    %v739 = vsel %vm337, %v737, 0
    %741 = vmatprep.subr.bf16.mxu0 0
    %742 = vmatpush1.bf16.msra.mxu0 %v322
    %743 = vmatprep.subr.bf16.mxu0 0
    %744 = vmatpush1.bf16.msra.mxu0 %v323
    %745 = vmatprep.subr.bf16.mxu0 0
    %746 = vmatpush1.bf16.msra.mxu0 %v324
    %747 = vmatprep.subr.bf16.mxu0 0
    %748 = vmatpush1.bf16.msra.mxu0 %v325
    %749 = vmatprep.subr.bf16.mxu0 0
    %750 = vmatpush1.bf16.msra.mxu0 %v326
    %751 = vmatprep.subr.bf16.mxu0 0
    %752 = vmatpush1.bf16.msra.mxu0 %v327
    %753 = vmatprep.subr.bf16.mxu0 0
    %754 = vmatpush1.bf16.msra.mxu0 0
    %755 = vmatprep.subr.bf16.mxu0 0
    %756 = vmatpush1.bf16.msra.mxu0 0
    %757 = vmatprep.subr.bf16.mxu0 0
    %758 = vmatpush1.bf16.msra.mxu0 0
    %759 = vmatprep.subr.bf16.mxu0 0
    %760 = vmatpush1.bf16.msra.mxu0 0
    %761 = vmatprep.subr.bf16.mxu0 0
    %762 = vmatpush1.bf16.msra.mxu0 0
    %763 = vmatprep.subr.bf16.mxu0 0
    %764 = vmatpush1.bf16.msra.mxu0 0
    %765 = vmatprep.subr.bf16.mxu0 0
    %766 = vmatpush1.bf16.msra.mxu0 0
    %767 = vmatprep.subr.bf16.mxu0 0
    %768 = vmatpush1.bf16.msra.mxu0 0
    %769 = vmatprep.subr.bf16.mxu0 0
    %770 = vmatpush1.bf16.msra.mxu0 0
    %771 = vmatprep.subr.bf16.mxu0 0
    %772 = vmatpush1.bf16.msra.mxu0 0
    %773 = vmatprep.mubr.bf16.mxu0 0
    %774 = vmatmul.mubr.bf16.gmra.mrb[0].mxu0 %v739
    %v775 = vpop.f32.mrb[0].mxu0
    %v776 = vadd.f32 %v335, %v775
    %v777 = vpop.f32.mrb[0].mxu0
    %v778 = vpop.f32.mrb[0].mxu0
    %v779 = vpop.f32.mrb[0].mxu0
    %780 = vdwg.mxu0
    %v781 = vtanh.pop %v776
    %vm782 = vcmp.eq.s32.totalorder %v675, 0
    %v783 = vsel %vm782, 1, 0
    %v784 = vcvt.s32.f32 %v783
    %v785 = vmul.f32 %v677, %v784
    %v786 = vsub.f32 %v781, %v587
    %v787 = vmul.f32 %v785, %v786
    %v788 = vadd.f32 %v587, %v787
    %v789 = vmax.f32 %v588, %v784
    %791 = vrot.lane.b32.xlu0 %v634, 112
    %v792 = vpop.permute.xlu0 %791
    %v794 = vadd.f32 %v776, %v792
    %v795 = vtanh.pop %v794
    %v796 = vpack.c.bf16 %v795, %v795
    %v798 = vsel %vm152, %v796, 0
    %800 = vmatprep.subr.bf16.mxu0 0
    %801 = vmatpush1.bf16.msra.mxu0 %v148
    %802 = vmatprep.subr.bf16.mxu0 0
    %803 = vmatpush1.bf16.msra.mxu0 %v149
    %804 = vmatprep.subr.bf16.mxu0 0
    %805 = vmatpush1.bf16.msra.mxu0 0
    %806 = vmatprep.subr.bf16.mxu0 0
    %807 = vmatpush1.bf16.msra.mxu0 0
    %808 = vmatprep.subr.bf16.mxu0 0
    %809 = vmatpush1.bf16.msra.mxu0 0
    %810 = vmatprep.subr.bf16.mxu0 0
    %811 = vmatpush1.bf16.msra.mxu0 0
    %812 = vmatprep.subr.bf16.mxu0 0
    %813 = vmatpush1.bf16.msra.mxu0 0
    %814 = vmatprep.subr.bf16.mxu0 0
    %815 = vmatpush1.bf16.msra.mxu0 0
    %816 = vmatprep.subr.bf16.mxu0 0
    %817 = vmatpush1.bf16.msra.mxu0 0
    %818 = vmatprep.subr.bf16.mxu0 0
    %819 = vmatpush1.bf16.msra.mxu0 0
    %820 = vmatprep.subr.bf16.mxu0 0
    %821 = vmatpush1.bf16.msra.mxu0 0
    %822 = vmatprep.subr.bf16.mxu0 0
    %823 = vmatpush1.bf16.msra.mxu0 0
    %824 = vmatprep.subr.bf16.mxu0 0
    %825 = vmatpush1.bf16.msra.mxu0 0
    %826 = vmatprep.subr.bf16.mxu0 0
    %827 = vmatpush1.bf16.msra.mxu0 0
    %828 = vmatprep.subr.bf16.mxu0 0
    %829 = vmatpush1.bf16.msra.mxu0 0
    %830 = vmatprep.subr.bf16.mxu0 0
    %831 = vmatpush1.bf16.msra.mxu0 0
    %832 = vmatprep.mubr.bf16.mxu0 0
    %833 = vmatmul.mubr.bf16.gmra.mrb[0].mxu0 %v798
    %v834 = vpop.f32.mrb[0].mxu0
    %v835 = vadd.f32 0.0, %v834
    %v836 = vpop.f32.mrb[0].mxu0
    %v837 = vpop.f32.mrb[0].mxu0
    %v838 = vpop.f32.mrb[0].mxu0
    %839 = vdwg.mxu0
    %v840 = vadd.f32 %v835, %v198
    %v841 = vsel %vm92, %v840, -inf
    %842 = vmax.xlane.f32.xlu0 %v841
    %v843 = vpop.xlane.xlu0 %842
    %v844 = vsub.f32 %v840, %v843
    %v845 = vmul.f32 %v844, 1.442695
    %v846 = vpow.pop %v845
    %v847 = vsel %vm92, %v846, 0.0
    %848 = vadd.xlane.f32.xlu0 %v847
    %v849 = vpop.xlane.xlu0 %848
    %v850 = vlog2.pop %v849
    %v851 = vmul.f32 %v850, 0.6931472
    %v852 = vsub.f32 0.0, %v851
    %v853 = vmul.f32 %v846, %v844
    %v854 = vsel %vm92, %v853, 0.0
    %855 = vadd.xlane.f32.xlu0 %v854
    %v856 = vpop.xlane.xlu0 %855
    %v857 = vrcp.pop %v849
    %v858 = vmul.f32 %v856, %v857
    %v859 = vsub.f32 %v851, %v858
    %vm860 = vcmp.eq.f32.partialorder %v840, %v843
    %v861 = vsel %vm860, %v138, 16
    %v862 = vsel %vm92, %v861, 2147483647
    %v863 = vand.u32 %v862, 65535
    %v864 = vshra.s32 %v862, 16
    %v865 = vcvt.s32.f32 %v863
    %v866 = vcvt.s32.f32 %v864
    %867 = vmin.xlane.f32.xlu0 %v866
    %v868 = vpop.xlane.xlu0 %867
    %vm869 = vcmp.eq.f32.partialorder %v866, %v868
    %v870 = vsel %vm869, %v865, inf
    %871 = vmin.xlane.f32.xlu0 %v870
    %v872 = vpop.xlane.xlu0 %871
    %v873 = vcvt.f32.s32 %v872
    %v874 = vcvt.f32.s32 %v868
    %v875 = vshll.u32 %v874, 16
    %v876 = vadd.s32 %v875, %v873
    %vm877 = vcmp.eq.s32.totalorder %v138, %v876
    %v878 = vsub.f32 1.0, %v789
    %v879 = vmul.f32 %v859, %v878
    %v880 = vadd.f32 %v679, %v879
    %v881 = vmul.f32 %v852, %v878
    %v882 = vadd.f32 %v681, %v881
    %v883 = vadd.f32 %v682, %v878
    %v884 = vadd.f32 %v683, %v859
    %v885 = vsel %vm877, 1, 0
    %v886 = vcvt.s32.f32 %v885
    %v887 = vpack.c.bf16 %v886, %v886
    %v889 = vsel %vm92, %v887, 0
    %891 = vmatprep.subr.bf16.mxu0 0
    %892 = vmatpush1.bf16.msra.mxu0 %v247
    %893 = vmatprep.subr.bf16.mxu0 0
    %894 = vmatpush1.bf16.msra.mxu0 0
    %895 = vmatprep.subr.bf16.mxu0 0
    %896 = vmatpush1.bf16.msra.mxu0 0
    %897 = vmatprep.subr.bf16.mxu0 0
    %898 = vmatpush1.bf16.msra.mxu0 0
    %899 = vmatprep.subr.bf16.mxu0 0
    %900 = vmatpush1.bf16.msra.mxu0 0
    %901 = vmatprep.subr.bf16.mxu0 0
    %902 = vmatpush1.bf16.msra.mxu0 0
    %903 = vmatprep.subr.bf16.mxu0 0
    %904 = vmatpush1.bf16.msra.mxu0 0
    %905 = vmatprep.subr.bf16.mxu0 0
    %906 = vmatpush1.bf16.msra.mxu0 0
    %907 = vmatprep.subr.bf16.mxu0 0
    %908 = vmatpush1.bf16.msra.mxu0 0
    %909 = vmatprep.subr.bf16.mxu0 0
    %910 = vmatpush1.bf16.msra.mxu0 0
    %911 = vmatprep.subr.bf16.mxu0 0
    %912 = vmatpush1.bf16.msra.mxu0 0
    %913 = vmatprep.subr.bf16.mxu0 0
    %914 = vmatpush1.bf16.msra.mxu0 0
    %915 = vmatprep.subr.bf16.mxu0 0
    %916 = vmatpush1.bf16.msra.mxu0 0
    %917 = vmatprep.subr.bf16.mxu0 0
    %918 = vmatpush1.bf16.msra.mxu0 0
    %919 = vmatprep.subr.bf16.mxu0 0
    %920 = vmatpush1.bf16.msra.mxu0 0
    %921 = vmatprep.subr.bf16.mxu0 0
    %922 = vmatpush1.bf16.msra.mxu0 0
    %923 = vmatprep.mubr.bf16.mxu0 0
    %924 = vmatmul.mubr.bf16.gmra.mrb[0].mxu0 %v889
    %v925 = vpop.f32.mrb[0].mxu0
    %v926 = vadd.f32 0.0, %v925
    %v927 = vpop.f32.mrb[0].mxu0
    %v928 = vpop.f32.mrb[0].mxu0
    %v929 = vpop.f32.mrb[0].mxu0
    %930 = vdwg.mxu0
    %931 = vst.msk [vmem:[#allocation2] sm:$0xff] %vm292, %v926
    %933 = vrot.lane.b32.xlu0 %v781, 32
    %v934 = vpop.permute.xlu0 %933
    %936 = vst.msk [vmem:[#allocation2] sm:$0xff] %vm294, %v934
    %v937 = vld [vmem:[#allocation2] sm:$0xff]
    %v938 = vpack.c.bf16 %v937, %v937
    %v940 = vsel %vm337, %v938, 0
    %942 = vmatprep.subr.bf16.mxu0 0
    %943 = vmatpush1.bf16.msra.mxu0 %v322
    %944 = vmatprep.subr.bf16.mxu0 0
    %945 = vmatpush1.bf16.msra.mxu0 %v323
    %946 = vmatprep.subr.bf16.mxu0 0
    %947 = vmatpush1.bf16.msra.mxu0 %v324
    %948 = vmatprep.subr.bf16.mxu0 0
    %949 = vmatpush1.bf16.msra.mxu0 %v325
    %950 = vmatprep.subr.bf16.mxu0 0
    %951 = vmatpush1.bf16.msra.mxu0 %v326
    %952 = vmatprep.subr.bf16.mxu0 0
    %953 = vmatpush1.bf16.msra.mxu0 %v327
    %954 = vmatprep.subr.bf16.mxu0 0
    %955 = vmatpush1.bf16.msra.mxu0 0
    %956 = vmatprep.subr.bf16.mxu0 0
    %957 = vmatpush1.bf16.msra.mxu0 0
    %958 = vmatprep.subr.bf16.mxu0 0
    %959 = vmatpush1.bf16.msra.mxu0 0
    %960 = vmatprep.subr.bf16.mxu0 0
    %961 = vmatpush1.bf16.msra.mxu0 0
    %962 = vmatprep.subr.bf16.mxu0 0
    %963 = vmatpush1.bf16.msra.mxu0 0
    %964 = vmatprep.subr.bf16.mxu0 0
    %965 = vmatpush1.bf16.msra.mxu0 0
    %966 = vmatprep.subr.bf16.mxu0 0
    %967 = vmatpush1.bf16.msra.mxu0 0
    %968 = vmatprep.subr.bf16.mxu0 0
    %969 = vmatpush1.bf16.msra.mxu0 0
    %970 = vmatprep.subr.bf16.mxu0 0
    %971 = vmatpush1.bf16.msra.mxu0 0
    %972 = vmatprep.subr.bf16.mxu0 0
    %973 = vmatpush1.bf16.msra.mxu0 0
    %974 = vmatprep.mubr.bf16.mxu0 0
    %975 = vmatmul.mubr.bf16.gmra.mrb[0].mxu0 %v940
    %v976 = vpop.f32.mrb[0].mxu0
    %v977 = vadd.f32 %v335, %v976
    %v978 = vpop.f32.mrb[0].mxu0
    %v979 = vpop.f32.mrb[0].mxu0
    %v980 = vpop.f32.mrb[0].mxu0
    %981 = vdwg.mxu0
    %v982 = vtanh.pop %v977
    %vm983 = vcmp.eq.s32.totalorder %v876, 0
    %v984 = vsel %vm983, 1, 0
    %v985 = vcvt.s32.f32 %v984
    %v986 = vmul.f32 %v878, %v985
    %v987 = vsub.f32 %v982, %v788
    %v988 = vmul.f32 %v986, %v987
    %v989 = vadd.f32 %v788, %v988
    %v990 = vmax.f32 %v789, %v985
    %992 = vrot.lane.b32.xlu0 %v835, 112
    %v993 = vpop.permute.xlu0 %992
    %v995 = vadd.f32 %v977, %v993
    %v996 = vtanh.pop %v995
    %v997 = vpack.c.bf16 %v996, %v996
    %v999 = vsel %vm152, %v997, 0
    %1001 = vmatprep.subr.bf16.mxu0 0
    %1002 = vmatpush1.bf16.msra.mxu0 %v148
    %1003 = vmatprep.subr.bf16.mxu0 0
    %1004 = vmatpush1.bf16.msra.mxu0 %v149
    %1005 = vmatprep.subr.bf16.mxu0 0
    %1006 = vmatpush1.bf16.msra.mxu0 0
    %1007 = vmatprep.subr.bf16.mxu0 0
    %1008 = vmatpush1.bf16.msra.mxu0 0
    %1009 = vmatprep.subr.bf16.mxu0 0
    %1010 = vmatpush1.bf16.msra.mxu0 0
    %1011 = vmatprep.subr.bf16.mxu0 0
    %1012 = vmatpush1.bf16.msra.mxu0 0
    %1013 = vmatprep.subr.bf16.mxu0 0
    %1014 = vmatpush1.bf16.msra.mxu0 0
    %1015 = vmatprep.subr.bf16.mxu0 0
    %1016 = vmatpush1.bf16.msra.mxu0 0
    %1017 = vmatprep.subr.bf16.mxu0 0
    %1018 = vmatpush1.bf16.msra.mxu0 0
    %1019 = vmatprep.subr.bf16.mxu0 0
    %1020 = vmatpush1.bf16.msra.mxu0 0
    %1021 = vmatprep.subr.bf16.mxu0 0
    %1022 = vmatpush1.bf16.msra.mxu0 0
    %1023 = vmatprep.subr.bf16.mxu0 0
    %1024 = vmatpush1.bf16.msra.mxu0 0
    %1025 = vmatprep.subr.bf16.mxu0 0
    %1026 = vmatpush1.bf16.msra.mxu0 0
    %1027 = vmatprep.subr.bf16.mxu0 0
    %1028 = vmatpush1.bf16.msra.mxu0 0
    %1029 = vmatprep.subr.bf16.mxu0 0
    %1030 = vmatpush1.bf16.msra.mxu0 0
    %1031 = vmatprep.subr.bf16.mxu0 0
    %1032 = vmatpush1.bf16.msra.mxu0 0
    %1033 = vmatprep.mubr.bf16.mxu0 0
    %1034 = vmatmul.mubr.bf16.gmra.mrb[0].mxu0 %v999
    %v1035 = vpop.f32.mrb[0].mxu0
    %v1036 = vadd.f32 0.0, %v1035
    %v1037 = vpop.f32.mrb[0].mxu0
    %v1038 = vpop.f32.mrb[0].mxu0
    %v1039 = vpop.f32.mrb[0].mxu0
    %1040 = vdwg.mxu0
    %v1041 = vadd.f32 %v1036, %v198
    %v1042 = vsel %vm92, %v1041, -inf
    %1043 = vmax.xlane.f32.xlu0 %v1042
    %v1044 = vpop.xlane.xlu0 %1043
    %v1045 = vsub.f32 %v1041, %v1044
    %v1046 = vmul.f32 %v1045, 1.442695
    %v1047 = vpow.pop %v1046
    %v1048 = vsel %vm92, %v1047, 0.0
    %1049 = vadd.xlane.f32.xlu0 %v1048
    %v1050 = vpop.xlane.xlu0 %1049
    %v1051 = vlog2.pop %v1050
    %v1052 = vmul.f32 %v1051, 0.6931472
    %v1053 = vsub.f32 0.0, %v1052
    %v1054 = vmul.f32 %v1047, %v1045
    %v1055 = vsel %vm92, %v1054, 0.0
    %1056 = vadd.xlane.f32.xlu0 %v1055
    %v1057 = vpop.xlane.xlu0 %1056
    %v1058 = vrcp.pop %v1050
    %v1059 = vmul.f32 %v1057, %v1058
    %v1060 = vsub.f32 %v1052, %v1059
    %vm1061 = vcmp.eq.f32.partialorder %v1041, %v1044
    %v1062 = vsel %vm1061, %v138, 16
    %v1063 = vsel %vm92, %v1062, 2147483647
    %v1064 = vand.u32 %v1063, 65535
    %v1065 = vshra.s32 %v1063, 16
    %v1066 = vcvt.s32.f32 %v1064
    %v1067 = vcvt.s32.f32 %v1065
    %1068 = vmin.xlane.f32.xlu0 %v1067
    %v1069 = vpop.xlane.xlu0 %1068
    %vm1070 = vcmp.eq.f32.partialorder %v1067, %v1069
    %v1071 = vsel %vm1070, %v1066, inf
    %1072 = vmin.xlane.f32.xlu0 %v1071
    %v1073 = vpop.xlane.xlu0 %1072
    %v1074 = vcvt.f32.s32 %v1073
    %v1075 = vcvt.f32.s32 %v1069
    %v1076 = vshll.u32 %v1075, 16
    %v1077 = vadd.s32 %v1076, %v1074
    %vm1078 = vcmp.eq.s32.totalorder %v138, %v1077
    %v1079 = vsub.f32 1.0, %v990
    %v1080 = vmul.f32 %v1060, %v1079
    %v1081 = vadd.f32 %v880, %v1080
    %v1082 = vmul.f32 %v1053, %v1079
    %v1083 = vadd.f32 %v882, %v1082
    %v1084 = vadd.f32 %v883, %v1079
    %v1085 = vadd.f32 %v884, %v1060
    %v1086 = vsel %vm1078, 1, 0
    %v1087 = vcvt.s32.f32 %v1086
    %v1088 = vpack.c.bf16 %v1087, %v1087
    %v1090 = vsel %vm92, %v1088, 0
    %1092 = vmatprep.subr.bf16.mxu0 0
    %1093 = vmatpush1.bf16.msra.mxu0 %v247
    %1094 = vmatprep.subr.bf16.mxu0 0
    %1095 = vmatpush1.bf16.msra.mxu0 0
    %1096 = vmatprep.subr.bf16.mxu0 0
    %1097 = vmatpush1.bf16.msra.mxu0 0
    %1098 = vmatprep.subr.bf16.mxu0 0
    %1099 = vmatpush1.bf16.msra.mxu0 0
    %1100 = vmatprep.subr.bf16.mxu0 0
    %1101 = vmatpush1.bf16.msra.mxu0 0
    %1102 = vmatprep.subr.bf16.mxu0 0
    %1103 = vmatpush1.bf16.msra.mxu0 0
    %1104 = vmatprep.subr.bf16.mxu0 0
    %1105 = vmatpush1.bf16.msra.mxu0 0
    %1106 = vmatprep.subr.bf16.mxu0 0
    %1107 = vmatpush1.bf16.msra.mxu0 0
    %1108 = vmatprep.subr.bf16.mxu0 0
    %1109 = vmatpush1.bf16.msra.mxu0 0
    %1110 = vmatprep.subr.bf16.mxu0 0
    %1111 = vmatpush1.bf16.msra.mxu0 0
    %1112 = vmatprep.subr.bf16.mxu0 0
    %1113 = vmatpush1.bf16.msra.mxu0 0
    %1114 = vmatprep.subr.bf16.mxu0 0
    %1115 = vmatpush1.bf16.msra.mxu0 0
    %1116 = vmatprep.subr.bf16.mxu0 0
    %1117 = vmatpush1.bf16.msra.mxu0 0
    %1118 = vmatprep.subr.bf16.mxu0 0
    %1119 = vmatpush1.bf16.msra.mxu0 0
    %1120 = vmatprep.subr.bf16.mxu0 0
    %1121 = vmatpush1.bf16.msra.mxu0 0
    %1122 = vmatprep.subr.bf16.mxu0 0
    %1123 = vmatpush1.bf16.msra.mxu0 0
    %1124 = vmatprep.mubr.bf16.mxu0 0
    %1125 = vmatmul.mubr.bf16.gmra.mrb[0].mxu0 %v1090
    %v1126 = vpop.f32.mrb[0].mxu0
    %v1127 = vadd.f32 0.0, %v1126
    %v1128 = vpop.f32.mrb[0].mxu0
    %v1129 = vpop.f32.mrb[0].mxu0
    %v1130 = vpop.f32.mrb[0].mxu0
    %1131 = vdwg.mxu0
    %1132 = vst.msk [vmem:[#allocation2] sm:$0xff] %vm292, %v1127
    %1134 = vrot.lane.b32.xlu0 %v982, 32
    %v1135 = vpop.permute.xlu0 %1134
    %1137 = vst.msk [vmem:[#allocation2] sm:$0xff] %vm294, %v1135
    %v1138 = vld [vmem:[#allocation2] sm:$0xff]
    %v1139 = vpack.c.bf16 %v1138, %v1138
    %v1141 = vsel %vm337, %v1139, 0
    %1143 = vmatprep.subr.bf16.mxu0 0
    %1144 = vmatpush1.bf16.msra.mxu0 %v322
    %1145 = vmatprep.subr.bf16.mxu0 0
    %1146 = vmatpush1.bf16.msra.mxu0 %v323
    %1147 = vmatprep.subr.bf16.mxu0 0
    %1148 = vmatpush1.bf16.msra.mxu0 %v324
    %1149 = vmatprep.subr.bf16.mxu0 0
    %1150 = vmatpush1.bf16.msra.mxu0 %v325
    %1151 = vmatprep.subr.bf16.mxu0 0
    %1152 = vmatpush1.bf16.msra.mxu0 %v326
    %1153 = vmatprep.subr.bf16.mxu0 0
    %1154 = vmatpush1.bf16.msra.mxu0 %v327
    %1155 = vmatprep.subr.bf16.mxu0 0
    %1156 = vmatpush1.bf16.msra.mxu0 0
    %1157 = vmatprep.subr.bf16.mxu0 0
    %1158 = vmatpush1.bf16.msra.mxu0 0
    %1159 = vmatprep.subr.bf16.mxu0 0
    %1160 = vmatpush1.bf16.msra.mxu0 0
    %1161 = vmatprep.subr.bf16.mxu0 0
    %1162 = vmatpush1.bf16.msra.mxu0 0
    %1163 = vmatprep.subr.bf16.mxu0 0
    %1164 = vmatpush1.bf16.msra.mxu0 0
    %1165 = vmatprep.subr.bf16.mxu0 0
    %1166 = vmatpush1.bf16.msra.mxu0 0
    %1167 = vmatprep.subr.bf16.mxu0 0
    %1168 = vmatpush1.bf16.msra.mxu0 0
    %1169 = vmatprep.subr.bf16.mxu0 0
    %1170 = vmatpush1.bf16.msra.mxu0 0
    %1171 = vmatprep.subr.bf16.mxu0 0
    %1172 = vmatpush1.bf16.msra.mxu0 0
    %1173 = vmatprep.subr.bf16.mxu0 0
    %1174 = vmatpush1.bf16.msra.mxu0 0
    %1175 = vmatprep.mubr.bf16.mxu0 0
    %1176 = vmatmul.mubr.bf16.gmra.mrb[0].mxu0 %v1141
    %v1177 = vpop.f32.mrb[0].mxu0
    %v1178 = vadd.f32 %v335, %v1177
    %v1179 = vpop.f32.mrb[0].mxu0
    %v1180 = vpop.f32.mrb[0].mxu0
    %v1181 = vpop.f32.mrb[0].mxu0
    %1182 = vdwg.mxu0
    %v1183 = vtanh.pop %v1178
    %vm1184 = vcmp.eq.s32.totalorder %v1077, 0
    %v1185 = vsel %vm1184, 1, 0
    %v1186 = vcvt.s32.f32 %v1185
    %v1187 = vmul.f32 %v1079, %v1186
    %v1188 = vsub.f32 %v1183, %v989
    %v1189 = vmul.f32 %v1187, %v1188
    %v1190 = vadd.f32 %v989, %v1189
    %v1191 = vmax.f32 %v990, %v1186
    %1193 = vrot.lane.b32.xlu0 %v1036, 112
    %v1194 = vpop.permute.xlu0 %1193
    %v1196 = vadd.f32 %v1178, %v1194
    %v1197 = vtanh.pop %v1196
    %v1198 = vpack.c.bf16 %v1197, %v1197
    %v1200 = vsel %vm152, %v1198, 0
    %1202 = vmatprep.subr.bf16.mxu0 0
    %1203 = vmatpush1.bf16.msra.mxu0 %v148
    %1204 = vmatprep.subr.bf16.mxu0 0
    %1205 = vmatpush1.bf16.msra.mxu0 %v149
    %1206 = vmatprep.subr.bf16.mxu0 0
    %1207 = vmatpush1.bf16.msra.mxu0 0
    %1208 = vmatprep.subr.bf16.mxu0 0
    %1209 = vmatpush1.bf16.msra.mxu0 0
    %1210 = vmatprep.subr.bf16.mxu0 0
    %1211 = vmatpush1.bf16.msra.mxu0 0
    %1212 = vmatprep.subr.bf16.mxu0 0
    %1213 = vmatpush1.bf16.msra.mxu0 0
    %1214 = vmatprep.subr.bf16.mxu0 0
    %1215 = vmatpush1.bf16.msra.mxu0 0
    %1216 = vmatprep.subr.bf16.mxu0 0
    %1217 = vmatpush1.bf16.msra.mxu0 0
    %1218 = vmatprep.subr.bf16.mxu0 0
    %1219 = vmatpush1.bf16.msra.mxu0 0
    %1220 = vmatprep.subr.bf16.mxu0 0
    %1221 = vmatpush1.bf16.msra.mxu0 0
    %1222 = vmatprep.subr.bf16.mxu0 0
    %1223 = vmatpush1.bf16.msra.mxu0 0
    %1224 = vmatprep.subr.bf16.mxu0 0
    %1225 = vmatpush1.bf16.msra.mxu0 0
    %1226 = vmatprep.subr.bf16.mxu0 0
    %1227 = vmatpush1.bf16.msra.mxu0 0
    %1228 = vmatprep.subr.bf16.mxu0 0
    %1229 = vmatpush1.bf16.msra.mxu0 0
    %1230 = vmatprep.subr.bf16.mxu0 0
    %1231 = vmatpush1.bf16.msra.mxu0 0
    %1232 = vmatprep.subr.bf16.mxu0 0
    %1233 = vmatpush1.bf16.msra.mxu0 0
    %1234 = vmatprep.mubr.bf16.mxu0 0
    %1235 = vmatmul.mubr.bf16.gmra.mrb[0].mxu0 %v1200
    %v1236 = vpop.f32.mrb[0].mxu0
    %v1237 = vadd.f32 0.0, %v1236
    %v1238 = vpop.f32.mrb[0].mxu0
    %v1239 = vpop.f32.mrb[0].mxu0
    %v1240 = vpop.f32.mrb[0].mxu0
    %1241 = vdwg.mxu0
    %v1242 = vadd.f32 %v1237, %v198
    %v1243 = vsel %vm92, %v1242, -inf
    %1244 = vmax.xlane.f32.xlu0 %v1243
    %v1245 = vpop.xlane.xlu0 %1244
    %v1246 = vsub.f32 %v1242, %v1245
    %v1247 = vmul.f32 %v1246, 1.442695
    %v1248 = vpow.pop %v1247
    %v1249 = vsel %vm92, %v1248, 0.0
    %1250 = vadd.xlane.f32.xlu0 %v1249
    %v1251 = vpop.xlane.xlu0 %1250
    %v1252 = vlog2.pop %v1251
    %v1253 = vmul.f32 %v1252, 0.6931472
    %v1254 = vsub.f32 0.0, %v1253
    %v1255 = vmul.f32 %v1248, %v1246
    %v1256 = vsel %vm92, %v1255, 0.0
    %1257 = vadd.xlane.f32.xlu0 %v1256
    %v1258 = vpop.xlane.xlu0 %1257
    %v1259 = vrcp.pop %v1251
    %v1260 = vmul.f32 %v1258, %v1259
    %v1261 = vsub.f32 %v1253, %v1260
    %vm1262 = vcmp.eq.f32.partialorder %v1242, %v1245
    %v1263 = vsel %vm1262, %v138, 16
    %v1264 = vsel %vm92, %v1263, 2147483647
    %v1265 = vand.u32 %v1264, 65535
    %v1266 = vshra.s32 %v1264, 16
    %v1267 = vcvt.s32.f32 %v1265
    %v1268 = vcvt.s32.f32 %v1266
    %1269 = vmin.xlane.f32.xlu0 %v1268
    %v1270 = vpop.xlane.xlu0 %1269
    %vm1271 = vcmp.eq.f32.partialorder %v1268, %v1270
    %v1272 = vsel %vm1271, %v1267, inf
    %1273 = vmin.xlane.f32.xlu0 %v1272
    %v1274 = vpop.xlane.xlu0 %1273
    %v1275 = vcvt.f32.s32 %v1274
    %v1276 = vcvt.f32.s32 %v1270
    %v1277 = vshll.u32 %v1276, 16
    %v1278 = vadd.s32 %v1277, %v1275
    %vm1279 = vcmp.eq.s32.totalorder %v138, %v1278
    %v1280 = vsub.f32 1.0, %v1191
    %v1281 = vmul.f32 %v1261, %v1280
    %v1282 = vadd.f32 %v1081, %v1281
    %v1283 = vmul.f32 %v1254, %v1280
    %v1284 = vadd.f32 %v1083, %v1283
    %v1285 = vadd.f32 %v1084, %v1280
    %v1286 = vadd.f32 %v1085, %v1261
    %v1287 = vsel %vm1279, 1, 0
    %v1288 = vcvt.s32.f32 %v1287
    %v1289 = vpack.c.bf16 %v1288, %v1288
    %v1291 = vsel %vm92, %v1289, 0
    %1293 = vmatprep.subr.bf16.mxu0 0
    %1294 = vmatpush1.bf16.msra.mxu0 %v247
    %1295 = vmatprep.subr.bf16.mxu0 0
    %1296 = vmatpush1.bf16.msra.mxu0 0
    %1297 = vmatprep.subr.bf16.mxu0 0
    %1298 = vmatpush1.bf16.msra.mxu0 0
    %1299 = vmatprep.subr.bf16.mxu0 0
    %1300 = vmatpush1.bf16.msra.mxu0 0
    %1301 = vmatprep.subr.bf16.mxu0 0
    %1302 = vmatpush1.bf16.msra.mxu0 0
    %1303 = vmatprep.subr.bf16.mxu0 0
    %1304 = vmatpush1.bf16.msra.mxu0 0
    %1305 = vmatprep.subr.bf16.mxu0 0
    %1306 = vmatpush1.bf16.msra.mxu0 0
    %1307 = vmatprep.subr.bf16.mxu0 0
    %1308 = vmatpush1.bf16.msra.mxu0 0
    %1309 = vmatprep.subr.bf16.mxu0 0
    %1310 = vmatpush1.bf16.msra.mxu0 0
    %1311 = vmatprep.subr.bf16.mxu0 0
    %1312 = vmatpush1.bf16.msra.mxu0 0
    %1313 = vmatprep.subr.bf16.mxu0 0
    %1314 = vmatpush1.bf16.msra.mxu0 0
    %1315 = vmatprep.subr.bf16.mxu0 0
    %1316 = vmatpush1.bf16.msra.mxu0 0
    %1317 = vmatprep.subr.bf16.mxu0 0
    %1318 = vmatpush1.bf16.msra.mxu0 0
    %1319 = vmatprep.subr.bf16.mxu0 0
    %1320 = vmatpush1.bf16.msra.mxu0 0
    %1321 = vmatprep.subr.bf16.mxu0 0
    %1322 = vmatpush1.bf16.msra.mxu0 0
    %1323 = vmatprep.subr.bf16.mxu0 0
    %1324 = vmatpush1.bf16.msra.mxu0 0
    %1325 = vmatprep.mubr.bf16.mxu0 0
    %1326 = vmatmul.mubr.bf16.gmra.mrb[0].mxu0 %v1291
    %v1327 = vpop.f32.mrb[0].mxu0
    %v1328 = vadd.f32 0.0, %v1327
    %v1329 = vpop.f32.mrb[0].mxu0
    %v1330 = vpop.f32.mrb[0].mxu0
    %v1331 = vpop.f32.mrb[0].mxu0
    %1332 = vdwg.mxu0
    %1333 = vst.msk [vmem:[#allocation2] sm:$0xff] %vm292, %v1328
    %1335 = vrot.lane.b32.xlu0 %v1183, 32
    %v1336 = vpop.permute.xlu0 %1335
    %1338 = vst.msk [vmem:[#allocation2] sm:$0xff] %vm294, %v1336
    %v1339 = vld [vmem:[#allocation2] sm:$0xff]
    %v1340 = vpack.c.bf16 %v1339, %v1339
    %v1342 = vsel %vm337, %v1340, 0
    %1344 = vmatprep.subr.bf16.mxu0 0
    %1345 = vmatpush1.bf16.msra.mxu0 %v322
    %1346 = vmatprep.subr.bf16.mxu0 0
    %1347 = vmatpush1.bf16.msra.mxu0 %v323
    %1348 = vmatprep.subr.bf16.mxu0 0
    %1349 = vmatpush1.bf16.msra.mxu0 %v324
    %1350 = vmatprep.subr.bf16.mxu0 0
    %1351 = vmatpush1.bf16.msra.mxu0 %v325
    %1352 = vmatprep.subr.bf16.mxu0 0
    %1353 = vmatpush1.bf16.msra.mxu0 %v326
    %1354 = vmatprep.subr.bf16.mxu0 0
    %1355 = vmatpush1.bf16.msra.mxu0 %v327
    %1356 = vmatprep.subr.bf16.mxu0 0
    %1357 = vmatpush1.bf16.msra.mxu0 0
    %1358 = vmatprep.subr.bf16.mxu0 0
    %1359 = vmatpush1.bf16.msra.mxu0 0
    %1360 = vmatprep.subr.bf16.mxu0 0
    %1361 = vmatpush1.bf16.msra.mxu0 0
    %1362 = vmatprep.subr.bf16.mxu0 0
    %1363 = vmatpush1.bf16.msra.mxu0 0
    %1364 = vmatprep.subr.bf16.mxu0 0
    %1365 = vmatpush1.bf16.msra.mxu0 0
    %1366 = vmatprep.subr.bf16.mxu0 0
    %1367 = vmatpush1.bf16.msra.mxu0 0
    %1368 = vmatprep.subr.bf16.mxu0 0
    %1369 = vmatpush1.bf16.msra.mxu0 0
    %1370 = vmatprep.subr.bf16.mxu0 0
    %1371 = vmatpush1.bf16.msra.mxu0 0
    %1372 = vmatprep.subr.bf16.mxu0 0
    %1373 = vmatpush1.bf16.msra.mxu0 0
    %1374 = vmatprep.subr.bf16.mxu0 0
    %1375 = vmatpush1.bf16.msra.mxu0 0
    %1376 = vmatprep.mubr.bf16.mxu0 0
    %1377 = vmatmul.mubr.bf16.gmra.mrb[0].mxu0 %v1342
    %v1378 = vpop.f32.mrb[0].mxu0
    %v1379 = vadd.f32 %v335, %v1378
    %v1380 = vpop.f32.mrb[0].mxu0
    %v1381 = vpop.f32.mrb[0].mxu0
    %v1382 = vpop.f32.mrb[0].mxu0
    %1383 = vdwg.mxu0
    %v1384 = vtanh.pop %v1379
    %vm1385 = vcmp.eq.s32.totalorder %v1278, 0
    %v1386 = vsel %vm1385, 1, 0
    %v1387 = vcvt.s32.f32 %v1386
    %v1388 = vmul.f32 %v1280, %v1387
    %v1389 = vsub.f32 %v1384, %v1190
    %v1390 = vmul.f32 %v1388, %v1389
    %v1391 = vadd.f32 %v1190, %v1390
    %v1392 = vmax.f32 %v1191, %v1387
    %1394 = vrot.lane.b32.xlu0 %v1237, 112
    %v1395 = vpop.permute.xlu0 %1394
    %v1397 = vadd.f32 %v1379, %v1395
    %v1398 = vtanh.pop %v1397
    %v1399 = vpack.c.bf16 %v1398, %v1398
    %v1401 = vsel %vm152, %v1399, 0
    %1403 = vmatprep.subr.bf16.mxu0 0
    %1404 = vmatpush1.bf16.msra.mxu0 %v148
    %1405 = vmatprep.subr.bf16.mxu0 0
    %1406 = vmatpush1.bf16.msra.mxu0 %v149
    %1407 = vmatprep.subr.bf16.mxu0 0
    %1408 = vmatpush1.bf16.msra.mxu0 0
    %1409 = vmatprep.subr.bf16.mxu0 0
    %1410 = vmatpush1.bf16.msra.mxu0 0
    %1411 = vmatprep.subr.bf16.mxu0 0
    %1412 = vmatpush1.bf16.msra.mxu0 0
    %1413 = vmatprep.subr.bf16.mxu0 0
    %1414 = vmatpush1.bf16.msra.mxu0 0
    %1415 = vmatprep.subr.bf16.mxu0 0
    %1416 = vmatpush1.bf16.msra.mxu0 0
    %1417 = vmatprep.subr.bf16.mxu0 0
    %1418 = vmatpush1.bf16.msra.mxu0 0
    %1419 = vmatprep.subr.bf16.mxu0 0
    %1420 = vmatpush1.bf16.msra.mxu0 0
    %1421 = vmatprep.subr.bf16.mxu0 0
    %1422 = vmatpush1.bf16.msra.mxu0 0
    %1423 = vmatprep.subr.bf16.mxu0 0
    %1424 = vmatpush1.bf16.msra.mxu0 0
    %1425 = vmatprep.subr.bf16.mxu0 0
    %1426 = vmatpush1.bf16.msra.mxu0 0
    %1427 = vmatprep.subr.bf16.mxu0 0
    %1428 = vmatpush1.bf16.msra.mxu0 0
    %1429 = vmatprep.subr.bf16.mxu0 0
    %1430 = vmatpush1.bf16.msra.mxu0 0
    %1431 = vmatprep.subr.bf16.mxu0 0
    %1432 = vmatpush1.bf16.msra.mxu0 0
    %1433 = vmatprep.subr.bf16.mxu0 0
    %1434 = vmatpush1.bf16.msra.mxu0 0
    %1435 = vmatprep.mubr.bf16.mxu0 0
    %1436 = vmatmul.mubr.bf16.gmra.mrb[0].mxu0 %v1401
    %v1437 = vpop.f32.mrb[0].mxu0
    %v1438 = vadd.f32 0.0, %v1437
    %v1439 = vpop.f32.mrb[0].mxu0
    %v1440 = vpop.f32.mrb[0].mxu0
    %v1441 = vpop.f32.mrb[0].mxu0
    %1442 = vdwg.mxu0
    %v1443 = vadd.f32 %v1438, %v198
    %v1444 = vsel %vm92, %v1443, -inf
    %1445 = vmax.xlane.f32.xlu0 %v1444
    %v1446 = vpop.xlane.xlu0 %1445
    %v1447 = vsub.f32 %v1443, %v1446
    %v1448 = vmul.f32 %v1447, 1.442695
    %v1449 = vpow.pop %v1448
    %v1450 = vsel %vm92, %v1449, 0.0
    %1451 = vadd.xlane.f32.xlu0 %v1450
    %v1452 = vpop.xlane.xlu0 %1451
    %v1453 = vlog2.pop %v1452
    %v1454 = vmul.f32 %v1453, 0.6931472
    %v1455 = vsub.f32 0.0, %v1454
    %v1456 = vmul.f32 %v1449, %v1447
    %v1457 = vsel %vm92, %v1456, 0.0
    %1458 = vadd.xlane.f32.xlu0 %v1457
    %v1459 = vpop.xlane.xlu0 %1458
    %v1460 = vrcp.pop %v1452
    %v1461 = vmul.f32 %v1459, %v1460
    %v1462 = vsub.f32 %v1454, %v1461
    %vm1463 = vcmp.eq.f32.partialorder %v1443, %v1446
    %v1464 = vsel %vm1463, %v138, 16
    %v1465 = vsel %vm92, %v1464, 2147483647
    %v1466 = vand.u32 %v1465, 65535
    %v1467 = vshra.s32 %v1465, 16
    %v1468 = vcvt.s32.f32 %v1466
    %v1469 = vcvt.s32.f32 %v1467
    %1470 = vmin.xlane.f32.xlu0 %v1469
    %v1471 = vpop.xlane.xlu0 %1470
    %vm1472 = vcmp.eq.f32.partialorder %v1469, %v1471
    %v1473 = vsel %vm1472, %v1468, inf
    %1474 = vmin.xlane.f32.xlu0 %v1473
    %v1475 = vpop.xlane.xlu0 %1474
    %v1476 = vcvt.f32.s32 %v1475
    %v1477 = vcvt.f32.s32 %v1471
    %v1478 = vshll.u32 %v1477, 16
    %v1479 = vadd.s32 %v1478, %v1476
    %vm1480 = vcmp.eq.s32.totalorder %v138, %v1479
    %v1481 = vsub.f32 1.0, %v1392
    %v1482 = vmul.f32 %v1462, %v1481
    %v1483 = vadd.f32 %v1282, %v1482
    %v1484 = vmul.f32 %v1455, %v1481
    %v1485 = vadd.f32 %v1284, %v1484
    %v1486 = vadd.f32 %v1285, %v1481
    %v1487 = vadd.f32 %v1286, %v1462
    %v1488 = vsel %vm1480, 1, 0
    %v1489 = vcvt.s32.f32 %v1488
    %v1490 = vpack.c.bf16 %v1489, %v1489
    %v1492 = vsel %vm92, %v1490, 0
    %1494 = vmatprep.subr.bf16.mxu0 0
    %1495 = vmatpush1.bf16.msra.mxu0 %v247
    %1496 = vmatprep.subr.bf16.mxu0 0
    %1497 = vmatpush1.bf16.msra.mxu0 0
    %1498 = vmatprep.subr.bf16.mxu0 0
    %1499 = vmatpush1.bf16.msra.mxu0 0
    %1500 = vmatprep.subr.bf16.mxu0 0
    %1501 = vmatpush1.bf16.msra.mxu0 0
    %1502 = vmatprep.subr.bf16.mxu0 0
    %1503 = vmatpush1.bf16.msra.mxu0 0
    %1504 = vmatprep.subr.bf16.mxu0 0
    %1505 = vmatpush1.bf16.msra.mxu0 0
    %1506 = vmatprep.subr.bf16.mxu0 0
    %1507 = vmatpush1.bf16.msra.mxu0 0
    %1508 = vmatprep.subr.bf16.mxu0 0
    %1509 = vmatpush1.bf16.msra.mxu0 0
    %1510 = vmatprep.subr.bf16.mxu0 0
    %1511 = vmatpush1.bf16.msra.mxu0 0
    %1512 = vmatprep.subr.bf16.mxu0 0
    %1513 = vmatpush1.bf16.msra.mxu0 0
    %1514 = vmatprep.subr.bf16.mxu0 0
    %1515 = vmatpush1.bf16.msra.mxu0 0
    %1516 = vmatprep.subr.bf16.mxu0 0
    %1517 = vmatpush1.bf16.msra.mxu0 0
    %1518 = vmatprep.subr.bf16.mxu0 0
    %1519 = vmatpush1.bf16.msra.mxu0 0
    %1520 = vmatprep.subr.bf16.mxu0 0
    %1521 = vmatpush1.bf16.msra.mxu0 0
    %1522 = vmatprep.subr.bf16.mxu0 0
    %1523 = vmatpush1.bf16.msra.mxu0 0
    %1524 = vmatprep.subr.bf16.mxu0 0
    %1525 = vmatpush1.bf16.msra.mxu0 0
    %1526 = vmatprep.mubr.bf16.mxu0 0
    %1527 = vmatmul.mubr.bf16.gmra.mrb[0].mxu0 %v1492
    %v1528 = vpop.f32.mrb[0].mxu0
    %v1529 = vadd.f32 0.0, %v1528
    %v1530 = vpop.f32.mrb[0].mxu0
    %v1531 = vpop.f32.mrb[0].mxu0
    %v1532 = vpop.f32.mrb[0].mxu0
    %1533 = vdwg.mxu0
    %1534 = vst.msk [vmem:[#allocation2] sm:$0xff] %vm292, %v1529
    %1536 = vrot.lane.b32.xlu0 %v1384, 32
    %v1537 = vpop.permute.xlu0 %1536
    %1539 = vst.msk [vmem:[#allocation2] sm:$0xff] %vm294, %v1537
    %v1540 = vld [vmem:[#allocation2] sm:$0xff]
    %v1541 = vpack.c.bf16 %v1540, %v1540
    %v1543 = vsel %vm337, %v1541, 0
    %1545 = vmatprep.subr.bf16.mxu0 0
    %1546 = vmatpush1.bf16.msra.mxu0 %v322
    %1547 = vmatprep.subr.bf16.mxu0 0
    %1548 = vmatpush1.bf16.msra.mxu0 %v323
    %1549 = vmatprep.subr.bf16.mxu0 0
    %1550 = vmatpush1.bf16.msra.mxu0 %v324
    %1551 = vmatprep.subr.bf16.mxu0 0
    %1552 = vmatpush1.bf16.msra.mxu0 %v325
    %1553 = vmatprep.subr.bf16.mxu0 0
    %1554 = vmatpush1.bf16.msra.mxu0 %v326
    %1555 = vmatprep.subr.bf16.mxu0 0
    %1556 = vmatpush1.bf16.msra.mxu0 %v327
    %1557 = vmatprep.subr.bf16.mxu0 0
    %1558 = vmatpush1.bf16.msra.mxu0 0
    %1559 = vmatprep.subr.bf16.mxu0 0
    %1560 = vmatpush1.bf16.msra.mxu0 0
    %1561 = vmatprep.subr.bf16.mxu0 0
    %1562 = vmatpush1.bf16.msra.mxu0 0
    %1563 = vmatprep.subr.bf16.mxu0 0
    %1564 = vmatpush1.bf16.msra.mxu0 0
    %1565 = vmatprep.subr.bf16.mxu0 0
    %1566 = vmatpush1.bf16.msra.mxu0 0
    %1567 = vmatprep.subr.bf16.mxu0 0
    %1568 = vmatpush1.bf16.msra.mxu0 0
    %1569 = vmatprep.subr.bf16.mxu0 0
    %1570 = vmatpush1.bf16.msra.mxu0 0
    %1571 = vmatprep.subr.bf16.mxu0 0
    %1572 = vmatpush1.bf16.msra.mxu0 0
    %1573 = vmatprep.subr.bf16.mxu0 0
    %1574 = vmatpush1.bf16.msra.mxu0 0
    %1575 = vmatprep.subr.bf16.mxu0 0
    %1576 = vmatpush1.bf16.msra.mxu0 0
    %1577 = vmatprep.mubr.bf16.mxu0 0
    %1578 = vmatmul.mubr.bf16.gmra.mrb[0].mxu0 %v1543
    %v1579 = vpop.f32.mrb[0].mxu0
    %v1580 = vadd.f32 %v335, %v1579
    %v1581 = vpop.f32.mrb[0].mxu0
    %v1582 = vpop.f32.mrb[0].mxu0
    %v1583 = vpop.f32.mrb[0].mxu0
    %1584 = vdwg.mxu0
    %v1585 = vtanh.pop %v1580
    %vm1586 = vcmp.eq.s32.totalorder %v1479, 0
    %v1587 = vsel %vm1586, 1, 0
    %v1588 = vcvt.s32.f32 %v1587
    %v1589 = vmul.f32 %v1481, %v1588
    %v1590 = vsub.f32 %v1585, %v1391
    %v1591 = vmul.f32 %v1589, %v1590
    %v1592 = vadd.f32 %v1391, %v1591
    %v1593 = vmax.f32 %v1392, %v1588
    %1595 = vrot.lane.b32.xlu0 %v1438, 112
    %v1596 = vpop.permute.xlu0 %1595
    %v1598 = vadd.f32 %v1580, %v1596
    %v1599 = vtanh.pop %v1598
    %v1600 = vpack.c.bf16 %v1599, %v1599
    %v1602 = vsel %vm152, %v1600, 0
    %1604 = vmatprep.subr.bf16.mxu0 0
    %1605 = vmatpush1.bf16.msra.mxu0 %v148
    %1606 = vmatprep.subr.bf16.mxu0 0
    %1607 = vmatpush1.bf16.msra.mxu0 %v149
    %1608 = vmatprep.subr.bf16.mxu0 0
    %1609 = vmatpush1.bf16.msra.mxu0 0
    %1610 = vmatprep.subr.bf16.mxu0 0
    %1611 = vmatpush1.bf16.msra.mxu0 0
    %1612 = vmatprep.subr.bf16.mxu0 0
    %1613 = vmatpush1.bf16.msra.mxu0 0
    %1614 = vmatprep.subr.bf16.mxu0 0
    %1615 = vmatpush1.bf16.msra.mxu0 0
    %1616 = vmatprep.subr.bf16.mxu0 0
    %1617 = vmatpush1.bf16.msra.mxu0 0
    %1618 = vmatprep.subr.bf16.mxu0 0
    %1619 = vmatpush1.bf16.msra.mxu0 0
    %1620 = vmatprep.subr.bf16.mxu0 0
    %1621 = vmatpush1.bf16.msra.mxu0 0
    %1622 = vmatprep.subr.bf16.mxu0 0
    %1623 = vmatpush1.bf16.msra.mxu0 0
    %1624 = vmatprep.subr.bf16.mxu0 0
    %1625 = vmatpush1.bf16.msra.mxu0 0
    %1626 = vmatprep.subr.bf16.mxu0 0
    %1627 = vmatpush1.bf16.msra.mxu0 0
    %1628 = vmatprep.subr.bf16.mxu0 0
    %1629 = vmatpush1.bf16.msra.mxu0 0
    %1630 = vmatprep.subr.bf16.mxu0 0
    %1631 = vmatpush1.bf16.msra.mxu0 0
    %1632 = vmatprep.subr.bf16.mxu0 0
    %1633 = vmatpush1.bf16.msra.mxu0 0
    %1634 = vmatprep.subr.bf16.mxu0 0
    %1635 = vmatpush1.bf16.msra.mxu0 0
    %1636 = vmatprep.mubr.bf16.mxu0 0
    %1637 = vmatmul.mubr.bf16.gmra.mrb[0].mxu0 %v1602
    %v1638 = vpop.f32.mrb[0].mxu0
    %v1639 = vadd.f32 0.0, %v1638
    %v1640 = vpop.f32.mrb[0].mxu0
    %v1641 = vpop.f32.mrb[0].mxu0
    %v1642 = vpop.f32.mrb[0].mxu0
    %1643 = vdwg.mxu0
    %v1644 = vadd.f32 %v1639, %v198
    %v1645 = vsel %vm92, %v1644, -inf
    %1646 = vmax.xlane.f32.xlu0 %v1645
    %v1647 = vpop.xlane.xlu0 %1646
    %v1648 = vsub.f32 %v1644, %v1647
    %v1649 = vmul.f32 %v1648, 1.442695
    %v1650 = vpow.pop %v1649
    %v1651 = vsel %vm92, %v1650, 0.0
    %1652 = vadd.xlane.f32.xlu0 %v1651
    %v1653 = vpop.xlane.xlu0 %1652
    %v1654 = vlog2.pop %v1653
    %v1655 = vmul.f32 %v1654, 0.6931472
    %v1656 = vsub.f32 0.0, %v1655
    %v1657 = vmul.f32 %v1650, %v1648
    %v1658 = vsel %vm92, %v1657, 0.0
    %1659 = vadd.xlane.f32.xlu0 %v1658
    %v1660 = vpop.xlane.xlu0 %1659
    %v1661 = vrcp.pop %v1653
    %v1662 = vmul.f32 %v1660, %v1661
    %v1663 = vsub.f32 %v1655, %v1662
    %vm1664 = vcmp.eq.f32.partialorder %v1644, %v1647
    %v1665 = vsel %vm1664, %v138, 16
    %v1666 = vsel %vm92, %v1665, 2147483647
    %v1667 = vand.u32 %v1666, 65535
    %v1668 = vshra.s32 %v1666, 16
    %v1669 = vcvt.s32.f32 %v1667
    %v1670 = vcvt.s32.f32 %v1668
    %1671 = vmin.xlane.f32.xlu0 %v1670
    %v1672 = vpop.xlane.xlu0 %1671
    %vm1673 = vcmp.eq.f32.partialorder %v1670, %v1672
    %v1674 = vsel %vm1673, %v1669, inf
    %1675 = vmin.xlane.f32.xlu0 %v1674
    %v1676 = vpop.xlane.xlu0 %1675
    %v1677 = vcvt.f32.s32 %v1676
    %v1678 = vcvt.f32.s32 %v1672
    %v1679 = vshll.u32 %v1678, 16
    %v1680 = vadd.s32 %v1679, %v1677
    %vm1681 = vcmp.eq.s32.totalorder %v138, %v1680
    %v1682 = vsub.f32 1.0, %v1593
    %v1683 = vmul.f32 %v1663, %v1682
    %v1684 = vadd.f32 %v1483, %v1683
    %v1685 = vmul.f32 %v1656, %v1682
    %v1686 = vadd.f32 %v1485, %v1685
    %v1687 = vadd.f32 %v1486, %v1682
    %v1688 = vadd.f32 %v1487, %v1663
    %v1689 = vsel %vm1681, 1, 0
    %v1690 = vcvt.s32.f32 %v1689
    %v1691 = vpack.c.bf16 %v1690, %v1690
    %v1693 = vsel %vm92, %v1691, 0
    %1695 = vmatprep.subr.bf16.mxu0 0
    %1696 = vmatpush1.bf16.msra.mxu0 %v247
    %1697 = vmatprep.subr.bf16.mxu0 0
    %1698 = vmatpush1.bf16.msra.mxu0 0
    %1699 = vmatprep.subr.bf16.mxu0 0
    %1700 = vmatpush1.bf16.msra.mxu0 0
    %1701 = vmatprep.subr.bf16.mxu0 0
    %1702 = vmatpush1.bf16.msra.mxu0 0
    %1703 = vmatprep.subr.bf16.mxu0 0
    %1704 = vmatpush1.bf16.msra.mxu0 0
    %1705 = vmatprep.subr.bf16.mxu0 0
    %1706 = vmatpush1.bf16.msra.mxu0 0
    %1707 = vmatprep.subr.bf16.mxu0 0
    %1708 = vmatpush1.bf16.msra.mxu0 0
    %1709 = vmatprep.subr.bf16.mxu0 0
    %1710 = vmatpush1.bf16.msra.mxu0 0
    %1711 = vmatprep.subr.bf16.mxu0 0
    %1712 = vmatpush1.bf16.msra.mxu0 0
    %1713 = vmatprep.subr.bf16.mxu0 0
    %1714 = vmatpush1.bf16.msra.mxu0 0
    %1715 = vmatprep.subr.bf16.mxu0 0
    %1716 = vmatpush1.bf16.msra.mxu0 0
    %1717 = vmatprep.subr.bf16.mxu0 0
    %1718 = vmatpush1.bf16.msra.mxu0 0
    %1719 = vmatprep.subr.bf16.mxu0 0
    %1720 = vmatpush1.bf16.msra.mxu0 0
    %1721 = vmatprep.subr.bf16.mxu0 0
    %1722 = vmatpush1.bf16.msra.mxu0 0
    %1723 = vmatprep.subr.bf16.mxu0 0
    %1724 = vmatpush1.bf16.msra.mxu0 0
    %1725 = vmatprep.subr.bf16.mxu0 0
    %1726 = vmatpush1.bf16.msra.mxu0 0
    %1727 = vmatprep.mubr.bf16.mxu0 0
    %1728 = vmatmul.mubr.bf16.gmra.mrb[0].mxu0 %v1693
    %v1729 = vpop.f32.mrb[0].mxu0
    %v1730 = vadd.f32 0.0, %v1729
    %v1731 = vpop.f32.mrb[0].mxu0
    %v1732 = vpop.f32.mrb[0].mxu0
    %v1733 = vpop.f32.mrb[0].mxu0
    %1734 = vdwg.mxu0
    %1735 = vst.msk [vmem:[#allocation2] sm:$0xff] %vm292, %v1730
    %1737 = vrot.lane.b32.xlu0 %v1585, 32
    %v1738 = vpop.permute.xlu0 %1737
    %1740 = vst.msk [vmem:[#allocation2] sm:$0xff] %vm294, %v1738
    %v1741 = vld [vmem:[#allocation2] sm:$0xff]
    %v1742 = vpack.c.bf16 %v1741, %v1741
    %v1744 = vsel %vm337, %v1742, 0
    %1746 = vmatprep.subr.bf16.mxu0 0
    %1747 = vmatpush1.bf16.msra.mxu0 %v322
    %1748 = vmatprep.subr.bf16.mxu0 0
    %1749 = vmatpush1.bf16.msra.mxu0 %v323
    %1750 = vmatprep.subr.bf16.mxu0 0
    %1751 = vmatpush1.bf16.msra.mxu0 %v324
    %1752 = vmatprep.subr.bf16.mxu0 0
    %1753 = vmatpush1.bf16.msra.mxu0 %v325
    %1754 = vmatprep.subr.bf16.mxu0 0
    %1755 = vmatpush1.bf16.msra.mxu0 %v326
    %1756 = vmatprep.subr.bf16.mxu0 0
    %1757 = vmatpush1.bf16.msra.mxu0 %v327
    %1758 = vmatprep.subr.bf16.mxu0 0
    %1759 = vmatpush1.bf16.msra.mxu0 0
    %1760 = vmatprep.subr.bf16.mxu0 0
    %1761 = vmatpush1.bf16.msra.mxu0 0
    %1762 = vmatprep.subr.bf16.mxu0 0
    %1763 = vmatpush1.bf16.msra.mxu0 0
    %1764 = vmatprep.subr.bf16.mxu0 0
    %1765 = vmatpush1.bf16.msra.mxu0 0
    %1766 = vmatprep.subr.bf16.mxu0 0
    %1767 = vmatpush1.bf16.msra.mxu0 0
    %1768 = vmatprep.subr.bf16.mxu0 0
    %1769 = vmatpush1.bf16.msra.mxu0 0
    %1770 = vmatprep.subr.bf16.mxu0 0
    %1771 = vmatpush1.bf16.msra.mxu0 0
    %1772 = vmatprep.subr.bf16.mxu0 0
    %1773 = vmatpush1.bf16.msra.mxu0 0
    %1774 = vmatprep.subr.bf16.mxu0 0
    %1775 = vmatpush1.bf16.msra.mxu0 0
    %1776 = vmatprep.subr.bf16.mxu0 0
    %1777 = vmatpush1.bf16.msra.mxu0 0
    %1778 = vmatprep.mubr.bf16.mxu0 0
    %1779 = vmatmul.mubr.bf16.gmra.mrb[0].mxu0 %v1744
    %v1780 = vpop.f32.mrb[0].mxu0
    %v1781 = vadd.f32 %v335, %v1780
    %v1782 = vpop.f32.mrb[0].mxu0
    %v1783 = vpop.f32.mrb[0].mxu0
    %v1784 = vpop.f32.mrb[0].mxu0
    %1785 = vdwg.mxu0
    %v1786 = vtanh.pop %v1781
    %v1787 = vsub.f32 %v1786, %v1592
    %v1788 = vmul.f32 %v1682, %v1787
    %v1789 = vadd.f32 %v1592, %v1788
    %v1790 = vrcp.pop %v1687
    %v1791 = vmul.f32 %v1684, %v1790
    %v1792 = vpack.c.bf16 %v1789, %v1789
    %1794 = vrot.lane.b32.xlu0 %v1792, 96
    %v1795 = vpop.permute.xlu0 %1794
    %v1800 = vunpack.c.l.b16 %v75
    %v1801 = vunpack.c.l.b16 %v76
    %v1802 = vunpack.c.l.b16 %v77
    %v1803 = vunpack.c.l.b16 %v78
    %v1804 = vpack.c.b16 %v1801, %v1800
    %v1805 = vpack.c.b16 %v1803, %v1802
    %1808 = vrot.lane.b32.xlu0 %v85, 16
    %v1809 = vpop.permute.xlu0 %1808
    %v1812 = vsel %vm152, %v1795, 0
    %1814 = vmatprep.subr.bf16.mxu0 0
    %1815 = vmatpush1.bf16.msra.mxu0 %v1804
    %1816 = vmatprep.subr.bf16.mxu0 0
    %1817 = vmatpush1.bf16.msra.mxu0 %v1805
    %1818 = vmatprep.subr.bf16.mxu0 0
    %1819 = vmatpush1.bf16.msra.mxu0 0
    %1820 = vmatprep.subr.bf16.mxu0 0
    %1821 = vmatpush1.bf16.msra.mxu0 0
    %1822 = vmatprep.subr.bf16.mxu0 0
    %1823 = vmatpush1.bf16.msra.mxu0 0
    %1824 = vmatprep.subr.bf16.mxu0 0
    %1825 = vmatpush1.bf16.msra.mxu0 0
    %1826 = vmatprep.subr.bf16.mxu0 0
    %1827 = vmatpush1.bf16.msra.mxu0 0
    %1828 = vmatprep.subr.bf16.mxu0 0
    %1829 = vmatpush1.bf16.msra.mxu0 0
    %1830 = vmatprep.subr.bf16.mxu0 0
    %1831 = vmatpush1.bf16.msra.mxu0 0
    %1832 = vmatprep.subr.bf16.mxu0 0
    %1833 = vmatpush1.bf16.msra.mxu0 0
    %1834 = vmatprep.subr.bf16.mxu0 0
    %1835 = vmatpush1.bf16.msra.mxu0 0
    %1836 = vmatprep.subr.bf16.mxu0 0
    %1837 = vmatpush1.bf16.msra.mxu0 0
    %1838 = vmatprep.subr.bf16.mxu0 0
    %1839 = vmatpush1.bf16.msra.mxu0 0
    %1840 = vmatprep.subr.bf16.mxu0 0
    %1841 = vmatpush1.bf16.msra.mxu0 0
    %1842 = vmatprep.subr.bf16.mxu0 0
    %1843 = vmatpush1.bf16.msra.mxu0 0
    %1844 = vmatprep.subr.bf16.mxu0 0
    %1845 = vmatpush1.bf16.msra.mxu0 0
    %1846 = vmatprep.mubr.bf16.mxu0 0
    %1847 = vmatmul.mubr.bf16.gmra.mrb[0].mxu0 %v1812
    %v1848 = vpop.f32.mrb[0].mxu0
    %v1849 = vadd.f32 %v1809, %v1848
    %v1850 = vpop.f32.mrb[0].mxu0
    %v1851 = vpop.f32.mrb[0].mxu0
    %v1852 = vpop.f32.mrb[0].mxu0
    %1853 = vdwg.mxu0
    %v1854 = vsub.f32 %v1849, %v54
    %v1855 = vmul.f32 %v1854, %v1854
    %v1856 = vsel %vm92, %v1855, 0.0
    %1857 = vadd.xlane.f32.xlu0 %v1856
    %v1858 = vpop.xlane.xlu0 %1857
    %v1859 = vmul.f32 %v1858, 0.0625
    %v1860 = vsub.f32 %v1687, 4.0
    %v1861 = vmax.f32 %v1860, 0.0
    %v1862 = vmul.f32 %v1861, 0.1
    %v1863 = vmul.f32 %v1859, %v1686
    %v1864 = vmul.f32 %v1862, %v1686
    %v1865 = vmul.f32 %v1791, 0.1
    %v1866 = vadd.f32 %v1859, %v1863
    %v1867 = vadd.f32 %v1866, %v1864
    %v1868 = vsub.f32 %v1867, %v1865
    %v1869 = vmul.f32 %v1688, 0.125
    %v1870 = vrot.slane %v1868, 4
    %v1871 = vadd.f32 %v1868, %v1870
    %v1872 = vrot.slane %v1871, 2
    %v1873 = vadd.f32 %v1871, %v1872
    %v1874 = vrot.slane %v1873, 1
    %v1875 = vadd.f32 %v1873, %v1874
    %v1876 = vmul.f32 %v1875, 0.125
    %vm1877 = vcmask 0
    %1878 = vst.msk [vmem:[#allocation9] sm:$0x1] %vm1877, %v1876
    %v1879 = vrot.slane %v1859, 4
    %v1880 = vadd.f32 %v1859, %v1879
    %v1881 = vrot.slane %v1880, 2
    %v1882 = vadd.f32 %v1880, %v1881
    %v1883 = vrot.slane %v1882, 1
    %v1884 = vadd.f32 %v1882, %v1883
    %v1885 = vmul.f32 %v1884, 0.125
    %vm1886 = vcmask 8200
    %1887 = vst.msk [vmem:[#allocation9] sm:$0x1] %vm1886, %v1885
    %v1888 = vrot.slane %v1863, 4
    %v1889 = vadd.f32 %v1863, %v1888
    %v1890 = vrot.slane %v1889, 2
    %v1891 = vadd.f32 %v1889, %v1890
    %v1892 = vrot.slane %v1891, 1
    %v1893 = vadd.f32 %v1891, %v1892
    %v1894 = vmul.f32 %v1893, 0.125
    %vm1895 = vcmask 16400
    %1896 = vst.msk [vmem:[#allocation9] sm:$0x1] %vm1895, %v1894
    %v1897 = vrot.slane %v1864, 4
    %v1898 = vadd.f32 %v1864, %v1897
    %v1899 = vrot.slane %v1898, 2
    %v1900 = vadd.f32 %v1898, %v1899
    %v1901 = vrot.slane %v1900, 1
    %v1902 = vadd.f32 %v1900, %v1901
    %v1903 = vmul.f32 %v1902, 0.125
    %vm1904 = vcmask 24600
    %1905 = vst.msk [vmem:[#allocation9] sm:$0x1] %vm1904, %v1903
    %v1906 = vrot.slane %v1865, 4
    %v1907 = vadd.f32 %v1865, %v1906
    %v1908 = vrot.slane %v1907, 2
    %v1909 = vadd.f32 %v1907, %v1908
    %v1910 = vrot.slane %v1909, 1
    %v1911 = vadd.f32 %v1909, %v1910
    %v1912 = vmul.f32 %v1911, 0.125
    %vm1913 = vcmask 32800
    %1914 = vst.msk [vmem:[#allocation9] sm:$0x1] %vm1913, %v1912
    %v1915 = vrot.slane %v1869, 4
    %v1916 = vadd.f32 %v1869, %v1915
    %v1917 = vrot.slane %v1916, 2
    %v1918 = vadd.f32 %v1916, %v1917
    %v1919 = vrot.slane %v1918, 1
    %v1920 = vadd.f32 %v1918, %v1919
    %v1921 = vmul.f32 %v1920, 0.125
    %vm1922 = vcmask 41000
    %1923 = vst.msk [vmem:[#allocation9] sm:$0x1] %vm1922, %v1921
    %v1924 = vmul.f32 0.0, 0.125
    %vm1925 = vcmask 49200
    %1926 = vst.msk [vmem:[#allocation9] sm:$0x1] %vm1925, %v1924
    %v1927 = vrot.slane %v1687, 4
    %v1928 = vadd.f32 %v1687, %v1927
    %v1929 = vrot.slane %v1928, 2
    %v1930 = vadd.f32 %v1928, %v1929
    %v1931 = vrot.slane %v1930, 1
    %v1932 = vadd.f32 %v1930, %v1931
    %v1933 = vmul.f32 %v1932, 0.125
    %vm1934 = vcmask 57400
    %1935 = vst.msk [vmem:[#allocation9] sm:$0x1] %vm1934, %v1933
    // Predicated region
    $region26: #{tpu_custom_call.1} parent=1 // pred_check
      _
    $region27: #{tpu_custom_call.1} parent=1 // pred_check_branch
      %1937 = sbr.rel (0) target = $region29
    $region28: #{tpu_custom_call.1} parent=1 // pred_region
      %s1939 = ssub.s32 16, 16
      %1940 = vsyncadd [#allocation5], %s1939
      %s1942 = sshll.u32 [#allocation9], 4
      %s1943 = int_to_ptr.vmem [resolvable:$true] %s1942
      %1945 = dma.vmem_to_hbm [thread:$0]  %s1943, 16, %s3, [#allocation5]
    $region29: #{tpu_custom_call.1} parent=1 // pred_fallthru
      _
    // Predicated region
    $region30: #{tpu_custom_call.1} parent=1 // pred_check
      _
    $region31: #{tpu_custom_call.1} parent=1 // pred_check_branch
      %1947 = sbr.rel (0) target = $region33
    $region32: #{tpu_custom_call.1} parent=1 // pred_region
      %1948 = dma.done [#allocation5], 16
    $region33: #{tpu_custom_call.1} parent=1 // pred_fallthru
      _
    %1949 = vsyncpa [#allocation4], 1
    %1950 = vsyncpa [#allocation7], 1
    %1951 = vsyncpa [#allocation5], 1

</llo_original>
